<compile_context>
chip_gen: v6e
topology: v6e:2x2x1
jax: 0.10.0
libtpu: 0.0.40
codegen_flags: <defaults>
</compile_context>

<pallas_src>
import functools

import jax
import jax.numpy as jnp
from jax import lax
from jax.experimental import pallas as pl
from jax.experimental.pallas import tpu as pltpu

SZ = 16                     # image_size = (16, 16)
EMB = 10                    # embedding_size
HID = 100
HID_PAD = 128               # fc hidden padded to a lane-dense 128
C1_IN, C1_OUT, K1 = 5, 10, 5
C1_OUT_PAD = 16             # conv1 output channels padded to 2 sublane groups
C2_OUT, K2 = 1, 3
HW = SZ * SZ

G1 = 8                      # rows per conv1 offset group (5 channels + 1 ones + 2 zero)
G2 = 16                     # rows per conv2 offset group (10 channels + 1 ones + 5 zero)
P1_ROWS = K1 * K1 * G1      # 200
P2_ROWS = K2 * K2 * G2      # 144
CENTER1 = (K1 // 2) * K1 + (K1 // 2)   # offset (0,0) group for conv1 (mask == 1)
CENTER2 = (K2 // 2) * K2 + (K2 // 2)   # offset (0,0) group for conv2 (mask == 1)

OFFS1 = [(u - K1 // 2, v - K1 // 2) for u in range(K1) for v in range(K1)]
OFFS2 = [(u - K2 // 2, v - K2 // 2) for u in range(K2) for v in range(K2)]


def decoder_kernel(x_ref, w1_ref, b1_ref, w2_ref, b2_ref,
                   cw1_ref, cw2_ref, m1_ref, m2_ref,
                   out_ref, p1_ref, p2_ref):
    TB = x_ref.shape[0]
    N = TB * HW

    # ---- fc1 + relu : (TB, EMB) @ (EMB, 128) ----
    h1 = jnp.dot(x_ref[...], w1_ref[...], preferred_element_type=jnp.float32) + b1_ref[...]
    h1 = jnp.maximum(h1, 0.0)

    # ---- fc2 + relu : (TB, 128) @ (128, 5*HW) ----
    h2 = jnp.dot(h1, w2_ref[...], preferred_element_type=jnp.float32) + b2_ref[...]
    h2 = jnp.maximum(h2, 0.0)                              # (TB, 5*HW)

    # ---- relayout to channel-major (8, TB*HW) in registers (no scratch round-trip).
    # Rows 0..4 = channels (lane index = b*HW + i*SZ + j), row 5 = 1.0 (conv1 bias
    # feeder), rows 6..7 = 0.  All slice/concat boundaries are multiples of 128 lanes.
    ones_row = jnp.ones((1, HW), jnp.float32)
    zeros_rows = jnp.zeros((G1 - C1_IN - 1, HW), jnp.float32)
    blocks = []
    for b in range(TB):
        row_b = h2[b:b + 1, :]                             # (1, 5*HW)
        chans = [row_b[:, c * HW:(c + 1) * HW] for c in range(C1_IN)]
        blocks.append(jnp.concatenate(chans + [ones_row, zeros_rows], axis=0))  # (8, HW)
    img8 = jnp.concatenate(blocks, axis=1)                 # (8, N)

    # ---- conv1: 5x5 'same', 5 -> 10 ch, one im2col matmul (bias folded in weight) ----
    for o, (du, dv) in enumerate(OFFS1):
        s = (-(du * SZ + dv)) % N
        shifted = img8 if s == 0 else pltpu.roll(img8, s, axis=1)
        # full, unmasked, 8-row aligned store
        p1_ref[o * G1:(o + 1) * G1, :] = shifted * m1_ref[o:o + 1, :]

    acc = jnp.dot(cw1_ref[...], p1_ref[...], preferred_element_type=jnp.float32)  # (16, N)
    acc = jnp.maximum(acc, 0.0)
    # rows 0..9 = relu(conv1 + cb1); row 10 = 1.0 (conv2 bias feeder); rows 11..15 = 0

    # ---- conv2: 3x3 'same', 10 -> 1 ch, one im2col matmul (bias folded in weight) ----
    for o, (du, dv) in enumerate(OFFS2):
        s = (-(du * SZ + dv)) % N
        shifted = acc if s == 0 else pltpu.roll(acc, s, axis=1)
        # full, unmasked, 16-row aligned store
        p2_ref[o * G2:(o + 1) * G2, :] = shifted * m2_ref[o:o + 1, :]

    logits = jnp.dot(cw2_ref[...], p2_ref[...], preferred_element_type=jnp.float32)  # (1, N)

    # ---- split back to (TB, HW) and do ONE batched log_softmax ----
    z = jnp.concatenate([logits[0:1, b * HW:(b + 1) * HW] for b in range(TB)], axis=0)
    m = jnp.max(z, axis=1, keepdims=True)
    zc = z - m
    lse = jnp.log(jnp.sum(jnp.exp(zc), axis=1, keepdims=True))
    out_ref[...] = zc - lse                                # dense (TB, 256) store


def _build_masks(k, pad, tb):
    """(k*k, tb*HW) f32 validity masks, tiled per image every HW lanes."""
    kk = jnp.arange(HW)
    ii = kk // SZ
    jj = kk % SZ
    rows = []
    for u in range(k):
        for v in range(k):
            du, dv = u - pad, v - pad
            rows.append((ii + du >= 0) & (ii + du < SZ) & (jj + dv >= 0) & (jj + dv < SZ))
    m = jnp.stack(rows).astype(jnp.float32)                # (k*k, HW)
    return jnp.tile(m, (1, tb))                            # (k*k, tb*HW)


def init_params(key):
    ks = jax.random.split(key, 8)
    s = 0.1
    return dict(
        w1=s * jax.random.normal(ks[0], (HID, EMB), jnp.float32),                # torch Linear: (out, in)
        b1=s * jax.random.normal(ks[1], (HID,), jnp.float32),
        w2=s * jax.random.normal(ks[2], (C1_IN * HW, HID), jnp.float32),
        b2=s * jax.random.normal(ks[3], (C1_IN * HW,), jnp.float32),
        cw1=s * jax.random.normal(ks[4], (C1_OUT, C1_IN, K1, K1), jnp.float32),  # OIHW
        cb1=s * jax.random.normal(ks[5], (C1_OUT,), jnp.float32),
        cw2=s * jax.random.normal(ks[6], (C2_OUT, C1_OUT, K2, K2), jnp.float32),
        cb2=s * jax.random.normal(ks[7], (C2_OUT,), jnp.float32),
    )


def _pick_tile(batch):
    """TB <= 8; for batch >= 16 give >= 2 grid steps so both v7x cores get work."""
    if batch <= 8:
        return batch
    if batch % 8 == 0:
        return 8
    return batch  # keep block == full dims for odd batch sizes


@functools.partial(jax.jit, static_argnames=("tile_b",))
def image_decoder_forward(x, params, tile_b=None):
    B = x.shape[0]
    TB = tile_b if tile_b is not None else _pick_tile(B)
    assert B % TB == 0, "batch must be divisible by the batch tile"
    N = TB * HW

    # ---- parameter / constant re-layout (glue, plain JAX; constant-folded) ----
    w1t = jnp.pad(params['w1'].T, ((0, 0), (0, HID_PAD - HID)))          # (EMB, 128)
    b1r = jnp.pad(params['b1'], (0, HID_PAD - HID)).reshape(1, HID_PAD)  # (1, 128)
    w2t = jnp.pad(params['w2'].T, ((0, HID_PAD - HID), (0, 0)))          # (128, 5*HW)
    b2r = params['b2'].reshape(1, C1_IN * HW)

    # conv1 weight -> sublane-aligned im2col layout (16, 200); bias folded in.
    w1c = jnp.transpose(params['cw1'], (0, 2, 3, 1)).reshape(C1_OUT, K1 * K1, C1_IN)
    w1c = jnp.pad(w1c, ((0, 0), (0, 0), (0, G1 - C1_IN))).reshape(C1_OUT, P1_ROWS)
    cw1p = jnp.pad(w1c, ((0, C1_OUT_PAD - C1_OUT), (0, 0)))              # (16, 200)
    bias_col1 = CENTER1 * G1 + C1_IN                                     # hits the 'ones' row
    cw1p = cw1p.at[:C1_OUT, bias_col1].set(params['cb1'])                # conv1 bias
    cw1p = cw1p.at[C1_OUT, bias_col1].set(1.0)                           # regenerate ones row

    # conv2 weight -> sublane-aligned im2col layout (1, 144); bias folded in.
    w2c = jnp.transpose(params['cw2'], (0, 2, 3, 1)).reshape(C2_OUT, K2 * K2, C1_OUT)
    w2c = jnp.pad(w2c, ((0, 0), (0, 0), (0, G2 - C1_OUT))).reshape(C2_OUT, P2_ROWS)
    bias_col2 = CENTER2 * G2 + C1_OUT
    cw2p = w2c.at[:, bias_col2].set(params['cb2'])                       # (1, 144)

    mask1 = _build_masks(K1, K1 // 2, TB)                                # (25, N)
    mask2 = _build_masks(K2, K2 // 2, TB)                                # (9, N)

    batched = lambda i: (i, 0)
    full = lambda i: (0, 0)

    out_flat = pl.pallas_call(
        decoder_kernel,
        out_shape=jax.ShapeDtypeStruct((B, HW), jnp.float32),
        grid=(B // TB,),
        in_specs=[
            pl.BlockSpec((TB, EMB), batched),              # x
            pl.BlockSpec((EMB, HID_PAD), full),            # fc1 weight (padded)
            pl.BlockSpec((1, HID_PAD), full),              # fc1 bias
            pl.BlockSpec((HID_PAD, C1_IN * HW), full),     # fc2 weight (padded)
            pl.BlockSpec((1, C1_IN * HW), full),           # fc2 bias
            pl.BlockSpec((C1_OUT_PAD, P1_ROWS), full),     # conv1 weight (im2col, bias folded)
            pl.BlockSpec((C2_OUT, P2_ROWS), full),         # conv2 weight (im2col, bias folded)
            pl.BlockSpec((K1 * K1, N), full),              # conv1 masks
            pl.BlockSpec((K2 * K2, N), full),              # conv2 masks
        ],
        out_specs=pl.BlockSpec((TB, HW), batched),
        scratch_shapes=[
            pltpu.VMEM((P1_ROWS, N), jnp.float32),         # conv1 im2col patches
            pltpu.VMEM((P2_ROWS, N), jnp.float32),         # conv2 im2col patches
        ],
        compiler_params=pltpu.CompilerParams(
            dimension_semantics=("parallel",)),
    )(x, w1t, b1r, w2t, b2r, cw1p, cw2p, mask1, mask2)

    # final reshape to NCHW (B, 1, sz, sz) is pure glue
    return out_flat.reshape(B, 1, SZ, SZ)


def reference_forward(x, p):
    """Pure-JAX reference with PyTorch semantics (NCHW)."""
    hp = lax.Precision.HIGHEST
    h1 = jax.nn.relu(jnp.dot(x, p['w1'].T, precision=hp) + p['b1'])
    h2 = jax.nn.relu(jnp.dot(h1, p['w2'].T, precision=hp) + p['b2'])
    img = h2.reshape(x.shape[0], C1_IN, SZ, SZ)
    c1 = lax.conv_general_dilated(img, p['cw1'], (1, 1), [(2, 2), (2, 2)],
                                  dimension_numbers=('NCHW', 'OIHW', 'NCHW'), precision=hp)
    c1 = jax.nn.relu(c1 + p['cb1'].reshape(1, C1_OUT, 1, 1))
    c2 = lax.conv_general_dilated(c1, p['cw2'], (1, 1), [(1, 1), (1, 1)],
                                  dimension_numbers=('NCHW', 'OIHW', 'NCHW'), precision=hp)
    c2 = c2 + p['cb2'].reshape(1, C2_OUT, 1, 1)
    flat = c2.reshape(x.shape[0], SZ * SZ)
    return jax.nn.log_softmax(flat, axis=1).reshape(x.shape[0], 1, SZ, SZ)


if __name__ == "__main__":
    key = jax.random.PRNGKey(0)
    pkey, xkey = jax.random.split(key)
    params = init_params(pkey)
    x = jax.random.normal(xkey, (2, EMB), jnp.float32)

    out = image_decoder_forward(x, params)
    out = jax.block_until_ready(out)
    assert out.shape == (2, 1, SZ, SZ), out.shape

    ref = reference_forward(x, params)
    max_err = float(jnp.max(jnp.abs(out - ref)))
    assert max_err < 2e-2, f"kernel mismatch vs reference, max abs err = {max_err}"

    print("KERNEL_OK")
</pallas_src>

<mosaic_0001>
module attributes {stable_mosaic.version = 11 : i64} {
  func.func @decoder_kernel(%arg0: i32, %arg1: memref<2x10xf32, #tpu.memory_space<vmem>>, %arg2: memref<10x128xf32, #tpu.memory_space<vmem>>, %arg3: memref<1x128xf32, #tpu.memory_space<vmem>>, %arg4: memref<128x1280xf32, #tpu.memory_space<vmem>>, %arg5: memref<1x1280xf32, #tpu.memory_space<vmem>>, %arg6: memref<16x200xf32, #tpu.memory_space<vmem>>, %arg7: memref<1x144xf32, #tpu.memory_space<vmem>>, %arg8: memref<25x512xf32, #tpu.memory_space<vmem>>, %arg9: memref<9x512xf32, #tpu.memory_space<vmem>>, %arg10: memref<2x256xf32, #tpu.memory_space<vmem>>, %arg11: memref<200x512xf32, #tpu.memory_space<vmem>>, %arg12: memref<144x512xf32, #tpu.memory_space<vmem>>) attributes {dimension_semantics = [#tpu.dimension_semantics<parallel>], iteration_bounds = array<i64: 1>, scalar_prefetch = 0 : i64, scratch_operands = 2 : i64, tpu.core_type = #tpu.core_type<tc>, window_params = [{transform_indices = @transform_0, window_bounds = array<i64: 2, 10>}, {pipeline_mode = #tpu.pipeline_mode<synchronous>, transform_indices = @transform_1, window_bounds = array<i64: 10, 128>}, {pipeline_mode = #tpu.pipeline_mode<synchronous>, transform_indices = @transform_2, window_bounds = array<i64: 1, 128>}, {pipeline_mode = #tpu.pipeline_mode<synchronous>, transform_indices = @transform_3, window_bounds = array<i64: 128, 1280>}, {pipeline_mode = #tpu.pipeline_mode<synchronous>, transform_indices = @transform_4, window_bounds = array<i64: 1, 1280>}, {pipeline_mode = #tpu.pipeline_mode<synchronous>, transform_indices = @transform_5, window_bounds = array<i64: 16, 200>}, {pipeline_mode = #tpu.pipeline_mode<synchronous>, transform_indices = @transform_6, window_bounds = array<i64: 1, 144>}, {pipeline_mode = #tpu.pipeline_mode<synchronous>, transform_indices = @transform_7, window_bounds = array<i64: 25, 512>}, {pipeline_mode = #tpu.pipeline_mode<synchronous>, transform_indices = @transform_8, window_bounds = array<i64: 9, 512>}, {transform_indices = @transform_9, window_bounds = array<i64: 2, 256>}]} {
    %c0 = arith.constant 0 : index
    %c0_0 = arith.constant 0 : index
    %0 = vector.load %arg1[%c0, %c0_0] : memref<2x10xf32, #tpu.memory_space<vmem>>, vector<2x10xf32>
    %c0_1 = arith.constant 0 : index
    %c0_2 = arith.constant 0 : index
    %1 = vector.load %arg2[%c0_1, %c0_2] : memref<10x128xf32, #tpu.memory_space<vmem>>, vector<10x128xf32>
    %cst = arith.constant dense<0.000000e+00> : vector<2x128xf32>
    %2 = tpu.matmul %0, %1, %cst {dimension_numbers = #tpu.dot_dimension_numbers<[1], [0], [0], [1], [0, 0, 1, 1], [], []>} : vector<2x10xf32>, vector<10x128xf32>, vector<2x128xf32> -> vector<2x128xf32>
    %c0_3 = arith.constant 0 : index
    %c0_4 = arith.constant 0 : index
    %3 = vector.load %arg3[%c0_3, %c0_4] : memref<1x128xf32, #tpu.memory_space<vmem>>, vector<1x128xf32>
    %4 = vector.broadcast %3 : vector<1x128xf32> to vector<2x128xf32>
    %5 = arith.addf %2, %4 : vector<2x128xf32>
    %cst_5 = arith.constant 0.000000e+00 : f32
    %6 = vector.broadcast %cst_5 : f32 to vector<2x128xf32>
    %7 = arith.maximumf %5, %6 : vector<2x128xf32>
    %c0_6 = arith.constant 0 : index
    %c0_7 = arith.constant 0 : index
    %8 = vector.load %arg4[%c0_6, %c0_7] : memref<128x1280xf32, #tpu.memory_space<vmem>>, vector<128x1280xf32>
    %cst_8 = arith.constant dense<0.000000e+00> : vector<2x1280xf32>
    %9 = tpu.matmul %7, %8, %cst_8 {dimension_numbers = #tpu.dot_dimension_numbers<[1], [0], [0], [1], [0, 0, 1, 1], [], []>} : vector<2x128xf32>, vector<128x1280xf32>, vector<2x1280xf32> -> vector<2x1280xf32>
    %c0_9 = arith.constant 0 : index
    %c0_10 = arith.constant 0 : index
    %10 = vector.load %arg5[%c0_9, %c0_10] : memref<1x1280xf32, #tpu.memory_space<vmem>>, vector<1x1280xf32>
    %11 = vector.broadcast %10 : vector<1x1280xf32> to vector<2x1280xf32>
    %12 = arith.addf %9, %11 : vector<2x1280xf32>
    %cst_11 = arith.constant 0.000000e+00 : f32
    %13 = vector.broadcast %cst_11 : f32 to vector<2x1280xf32>
    %14 = arith.maximumf %12, %13 : vector<2x1280xf32>
    %cst_12 = arith.constant 1.000000e+00 : f32
    %15 = vector.broadcast %cst_12 : f32 to vector<1x256xf32>
    %cst_13 = arith.constant 0.000000e+00 : f32
    %16 = vector.broadcast %cst_13 : f32 to vector<2x256xf32>
    %17 = vector.extract_strided_slice %14 {offsets = [0, 0], sizes = [1, 1280], strides = [1, 1]} : vector<2x1280xf32> to vector<1x1280xf32>
    %18 = vector.extract_strided_slice %17 {offsets = [0, 0], sizes = [1, 256], strides = [1, 1]} : vector<1x1280xf32> to vector<1x256xf32>
    %19 = vector.extract_strided_slice %17 {offsets = [0, 256], sizes = [1, 256], strides = [1, 1]} : vector<1x1280xf32> to vector<1x256xf32>
    %20 = vector.extract_strided_slice %17 {offsets = [0, 512], sizes = [1, 256], strides = [1, 1]} : vector<1x1280xf32> to vector<1x256xf32>
    %21 = vector.extract_strided_slice %17 {offsets = [0, 768], sizes = [1, 256], strides = [1, 1]} : vector<1x1280xf32> to vector<1x256xf32>
    %22 = vector.extract_strided_slice %17 {offsets = [0, 1024], sizes = [1, 256], strides = [1, 1]} : vector<1x1280xf32> to vector<1x256xf32>
    %23 = tpu.concatenate %18, %19, %20, %21, %22, %15, %16 in 0 : vector<1x256xf32>, vector<1x256xf32>, vector<1x256xf32>, vector<1x256xf32>, vector<1x256xf32>, vector<1x256xf32>, vector<2x256xf32> -> vector<8x256xf32>
    %24 = vector.extract_strided_slice %14 {offsets = [1, 0], sizes = [1, 1280], strides = [1, 1]} : vector<2x1280xf32> to vector<1x1280xf32>
    %25 = vector.extract_strided_slice %24 {offsets = [0, 0], sizes = [1, 256], strides = [1, 1]} : vector<1x1280xf32> to vector<1x256xf32>
    %26 = vector.extract_strided_slice %24 {offsets = [0, 256], sizes = [1, 256], strides = [1, 1]} : vector<1x1280xf32> to vector<1x256xf32>
    %27 = vector.extract_strided_slice %24 {offsets = [0, 512], sizes = [1, 256], strides = [1, 1]} : vector<1x1280xf32> to vector<1x256xf32>
    %28 = vector.extract_strided_slice %24 {offsets = [0, 768], sizes = [1, 256], strides = [1, 1]} : vector<1x1280xf32> to vector<1x256xf32>
    %29 = vector.extract_strided_slice %24 {offsets = [0, 1024], sizes = [1, 256], strides = [1, 1]} : vector<1x1280xf32> to vector<1x256xf32>
    %30 = tpu.concatenate %25, %26, %27, %28, %29, %15, %16 in 0 : vector<1x256xf32>, vector<1x256xf32>, vector<1x256xf32>, vector<1x256xf32>, vector<1x256xf32>, vector<1x256xf32>, vector<2x256xf32> -> vector<8x256xf32>
    %31 = tpu.concatenate %23, %30 in 1 : vector<8x256xf32>, vector<8x256xf32> -> vector<8x512xf32>
    %c34_i32 = arith.constant 34 : i32
    %32 = tpu.dynamic_rotate %31 by %c34_i32 dim 1 : vector<8x512xf32>, i32 -> vector<8x512xf32>
    %c0_14 = arith.constant 0 : index
    %c0_15 = arith.constant 0 : index
    %33 = vector.load %arg8[%c0_14, %c0_15] : memref<25x512xf32, #tpu.memory_space<vmem>>, vector<1x512xf32>
    %34 = vector.broadcast %33 : vector<1x512xf32> to vector<8x512xf32>
    %35 = arith.mulf %32, %34 : vector<8x512xf32>
    %c0_16 = arith.constant 0 : index
    %c0_17 = arith.constant 0 : index
    %36 = vector.load %arg11[%c0_16, %c0_17] : memref<200x512xf32, #tpu.memory_space<vmem>>, vector<8x512xf32>
    tpu.vector_store %arg11[%c0_16, %c0_17], %35 {strides = array<i32>} : memref<200x512xf32, #tpu.memory_space<vmem>>, vector<8x512xf32>,
    %c33_i32 = arith.constant 33 : i32
    %37 = tpu.dynamic_rotate %31 by %c33_i32 dim 1 : vector<8x512xf32>, i32 -> vector<8x512xf32>
    %c1 = arith.constant 1 : index
    %c0_18 = arith.constant 0 : index
    %38 = vector.load %arg8[%c1, %c0_18] : memref<25x512xf32, #tpu.memory_space<vmem>>, vector<1x512xf32>
    %39 = vector.broadcast %38 : vector<1x512xf32> to vector<8x512xf32>
    %40 = arith.mulf %37, %39 : vector<8x512xf32>
    %c8 = arith.constant 8 : index
    %c0_19 = arith.constant 0 : index
    %41 = vector.load %arg11[%c8, %c0_19] : memref<200x512xf32, #tpu.memory_space<vmem>>, vector<8x512xf32>
    tpu.vector_store %arg11[%c8, %c0_19], %40 {strides = array<i32>} : memref<200x512xf32, #tpu.memory_space<vmem>>, vector<8x512xf32>,
    %c32_i32 = arith.constant 32 : i32
    %42 = tpu.dynamic_rotate %31 by %c32_i32 dim 1 : vector<8x512xf32>, i32 -> vector<8x512xf32>
    %c2 = arith.constant 2 : index
    %c0_20 = arith.constant 0 : index
    %43 = vector.load %arg8[%c2, %c0_20] : memref<25x512xf32, #tpu.memory_space<vmem>>, vector<1x512xf32>
    %44 = vector.broadcast %43 : vector<1x512xf32> to vector<8x512xf32>
    %45 = arith.mulf %42, %44 : vector<8x512xf32>
    %c16 = arith.constant 16 : index
    %c0_21 = arith.constant 0 : index
    %46 = vector.load %arg11[%c16, %c0_21] : memref<200x512xf32, #tpu.memory_space<vmem>>, vector<8x512xf32>
    tpu.vector_store %arg11[%c16, %c0_21], %45 {strides = array<i32>} : memref<200x512xf32, #tpu.memory_space<vmem>>, vector<8x512xf32>,
    %c31_i32 = arith.constant 31 : i32
    %47 = tpu.dynamic_rotate %31 by %c31_i32 dim 1 : vector<8x512xf32>, i32 -> vector<8x512xf32>
    %c3 = arith.constant 3 : index
    %c0_22 = arith.constant 0 : index
    %48 = vector.load %arg8[%c3, %c0_22] : memref<25x512xf32, #tpu.memory_space<vmem>>, vector<1x512xf32>
    %49 = vector.broadcast %48 : vector<1x512xf32> to vector<8x512xf32>
    %50 = arith.mulf %47, %49 : vector<8x512xf32>
    %c24 = arith.constant 24 : index
    %c0_23 = arith.constant 0 : index
    %51 = vector.load %arg11[%c24, %c0_23] : memref<200x512xf32, #tpu.memory_space<vmem>>, vector<8x512xf32>
    tpu.vector_store %arg11[%c24, %c0_23], %50 {strides = array<i32>} : memref<200x512xf32, #tpu.memory_space<vmem>>, vector<8x512xf32>,
    %c30_i32 = arith.constant 30 : i32
    %52 = tpu.dynamic_rotate %31 by %c30_i32 dim 1 : vector<8x512xf32>, i32 -> vector<8x512xf32>
    %c4 = arith.constant 4 : index
    %c0_24 = arith.constant 0 : index
    %53 = vector.load %arg8[%c4, %c0_24] : memref<25x512xf32, #tpu.memory_space<vmem>>, vector<1x512xf32>
    %54 = vector.broadcast %53 : vector<1x512xf32> to vector<8x512xf32>
    %55 = arith.mulf %52, %54 : vector<8x512xf32>
    %c32 = arith.constant 32 : index
    %c0_25 = arith.constant 0 : index
    %56 = vector.load %arg11[%c32, %c0_25] : memref<200x512xf32, #tpu.memory_space<vmem>>, vector<8x512xf32>
    tpu.vector_store %arg11[%c32, %c0_25], %55 {strides = array<i32>} : memref<200x512xf32, #tpu.memory_space<vmem>>, vector<8x512xf32>,
    %c18_i32 = arith.constant 18 : i32
    %57 = tpu.dynamic_rotate %31 by %c18_i32 dim 1 : vector<8x512xf32>, i32 -> vector<8x512xf32>
    %c5 = arith.constant 5 : index
    %c0_26 = arith.constant 0 : index
    %58 = vector.load %arg8[%c5, %c0_26] : memref<25x512xf32, #tpu.memory_space<vmem>>, vector<1x512xf32>
    %59 = vector.broadcast %58 : vector<1x512xf32> to vector<8x512xf32>
    %60 = arith.mulf %57, %59 : vector<8x512xf32>
    %c40 = arith.constant 40 : index
    %c0_27 = arith.constant 0 : index
    %61 = vector.load %arg11[%c40, %c0_27] : memref<200x512xf32, #tpu.memory_space<vmem>>, vector<8x512xf32>
    tpu.vector_store %arg11[%c40, %c0_27], %60 {strides = array<i32>} : memref<200x512xf32, #tpu.memory_space<vmem>>, vector<8x512xf32>,
    %c17_i32 = arith.constant 17 : i32
    %62 = tpu.dynamic_rotate %31 by %c17_i32 dim 1 : vector<8x512xf32>, i32 -> vector<8x512xf32>
    %c6 = arith.constant 6 : index
    %c0_28 = arith.constant 0 : index
    %63 = vector.load %arg8[%c6, %c0_28] : memref<25x512xf32, #tpu.memory_space<vmem>>, vector<1x512xf32>
    %64 = vector.broadcast %63 : vector<1x512xf32> to vector<8x512xf32>
    %65 = arith.mulf %62, %64 : vector<8x512xf32>
    %c48 = arith.constant 48 : index
    %c0_29 = arith.constant 0 : index
    %66 = vector.load %arg11[%c48, %c0_29] : memref<200x512xf32, #tpu.memory_space<vmem>>, vector<8x512xf32>
    tpu.vector_store %arg11[%c48, %c0_29], %65 {strides = array<i32>} : memref<200x512xf32, #tpu.memory_space<vmem>>, vector<8x512xf32>,
    %c16_i32 = arith.constant 16 : i32
    %67 = tpu.dynamic_rotate %31 by %c16_i32 dim 1 : vector<8x512xf32>, i32 -> vector<8x512xf32>
    %c7 = arith.constant 7 : index
    %c0_30 = arith.constant 0 : index
    %68 = vector.load %arg8[%c7, %c0_30] : memref<25x512xf32, #tpu.memory_space<vmem>>, vector<1x512xf32>
    %69 = vector.broadcast %68 : vector<1x512xf32> to vector<8x512xf32>
    %70 = arith.mulf %67, %69 : vector<8x512xf32>
    %c56 = arith.constant 56 : index
    %c0_31 = arith.constant 0 : index
    %71 = vector.load %arg11[%c56, %c0_31] : memref<200x512xf32, #tpu.memory_space<vmem>>, vector<8x512xf32>
    tpu.vector_store %arg11[%c56, %c0_31], %70 {strides = array<i32>} : memref<200x512xf32, #tpu.memory_space<vmem>>, vector<8x512xf32>,
    %c15_i32 = arith.constant 15 : i32
    %72 = tpu.dynamic_rotate %31 by %c15_i32 dim 1 : vector<8x512xf32>, i32 -> vector<8x512xf32>
    %c8_32 = arith.constant 8 : index
    %c0_33 = arith.constant 0 : index
    %73 = vector.load %arg8[%c8_32, %c0_33] : memref<25x512xf32, #tpu.memory_space<vmem>>, vector<1x512xf32>
    %74 = vector.broadcast %73 : vector<1x512xf32> to vector<8x512xf32>
    %75 = arith.mulf %72, %74 : vector<8x512xf32>
    %c64 = arith.constant 64 : index
    %c0_34 = arith.constant 0 : index
    %76 = vector.load %arg11[%c64, %c0_34] : memref<200x512xf32, #tpu.memory_space<vmem>>, vector<8x512xf32>
    tpu.vector_store %arg11[%c64, %c0_34], %75 {strides = array<i32>} : memref<200x512xf32, #tpu.memory_space<vmem>>, vector<8x512xf32>,
    %c14_i32 = arith.constant 14 : i32
    %77 = tpu.dynamic_rotate %31 by %c14_i32 dim 1 : vector<8x512xf32>, i32 -> vector<8x512xf32>
    %c9 = arith.constant 9 : index
    %c0_35 = arith.constant 0 : index
    %78 = vector.load %arg8[%c9, %c0_35] : memref<25x512xf32, #tpu.memory_space<vmem>>, vector<1x512xf32>
    %79 = vector.broadcast %78 : vector<1x512xf32> to vector<8x512xf32>
    %80 = arith.mulf %77, %79 : vector<8x512xf32>
    %c72 = arith.constant 72 : index
    %c0_36 = arith.constant 0 : index
    %81 = vector.load %arg11[%c72, %c0_36] : memref<200x512xf32, #tpu.memory_space<vmem>>, vector<8x512xf32>
    tpu.vector_store %arg11[%c72, %c0_36], %80 {strides = array<i32>} : memref<200x512xf32, #tpu.memory_space<vmem>>, vector<8x512xf32>,
    %c2_i32 = arith.constant 2 : i32
    %82 = tpu.dynamic_rotate %31 by %c2_i32 dim 1 : vector<8x512xf32>, i32 -> vector<8x512xf32>
    %c10 = arith.constant 10 : index
    %c0_37 = arith.constant 0 : index
    %83 = vector.load %arg8[%c10, %c0_37] : memref<25x512xf32, #tpu.memory_space<vmem>>, vector<1x512xf32>
    %84 = vector.broadcast %83 : vector<1x512xf32> to vector<8x512xf32>
    %85 = arith.mulf %82, %84 : vector<8x512xf32>
    %c80 = arith.constant 80 : index
    %c0_38 = arith.constant 0 : index
    %86 = vector.load %arg11[%c80, %c0_38] : memref<200x512xf32, #tpu.memory_space<vmem>>, vector<8x512xf32>
    tpu.vector_store %arg11[%c80, %c0_38], %85 {strides = array<i32>} : memref<200x512xf32, #tpu.memory_space<vmem>>, vector<8x512xf32>,
    %c1_i32 = arith.constant 1 : i32
    %87 = tpu.dynamic_rotate %31 by %c1_i32 dim 1 : vector<8x512xf32>, i32 -> vector<8x512xf32>
    %c11 = arith.constant 11 : index
    %c0_39 = arith.constant 0 : index
    %88 = vector.load %arg8[%c11, %c0_39] : memref<25x512xf32, #tpu.memory_space<vmem>>, vector<1x512xf32>
    %89 = vector.broadcast %88 : vector<1x512xf32> to vector<8x512xf32>
    %90 = arith.mulf %87, %89 : vector<8x512xf32>
    %c88 = arith.constant 88 : index
    %c0_40 = arith.constant 0 : index
    %91 = vector.load %arg11[%c88, %c0_40] : memref<200x512xf32, #tpu.memory_space<vmem>>, vector<8x512xf32>
    tpu.vector_store %arg11[%c88, %c0_40], %90 {strides = array<i32>} : memref<200x512xf32, #tpu.memory_space<vmem>>, vector<8x512xf32>,
    %c12 = arith.constant 12 : index
    %c0_41 = arith.constant 0 : index
    %92 = vector.load %arg8[%c12, %c0_41] : memref<25x512xf32, #tpu.memory_space<vmem>>, vector<1x512xf32>
    %93 = vector.broadcast %92 : vector<1x512xf32> to vector<8x512xf32>
    %94 = arith.mulf %31, %93 : vector<8x512xf32>
    %c96 = arith.constant 96 : index
    %c0_42 = arith.constant 0 : index
    %95 = vector.load %arg11[%c96, %c0_42] : memref<200x512xf32, #tpu.memory_space<vmem>>, vector<8x512xf32>
    tpu.vector_store %arg11[%c96, %c0_42], %94 {strides = array<i32>} : memref<200x512xf32, #tpu.memory_space<vmem>>, vector<8x512xf32>,
    %c511_i32 = arith.constant 511 : i32
    %96 = tpu.dynamic_rotate %31 by %c511_i32 dim 1 : vector<8x512xf32>, i32 -> vector<8x512xf32>
    %c13 = arith.constant 13 : index
    %c0_43 = arith.constant 0 : index
    %97 = vector.load %arg8[%c13, %c0_43] : memref<25x512xf32, #tpu.memory_space<vmem>>, vector<1x512xf32>
    %98 = vector.broadcast %97 : vector<1x512xf32> to vector<8x512xf32>
    %99 = arith.mulf %96, %98 : vector<8x512xf32>
    %c104 = arith.constant 104 : index
    %c0_44 = arith.constant 0 : index
    %100 = vector.load %arg11[%c104, %c0_44] : memref<200x512xf32, #tpu.memory_space<vmem>>, vector<8x512xf32>
    tpu.vector_store %arg11[%c104, %c0_44], %99 {strides = array<i32>} : memref<200x512xf32, #tpu.memory_space<vmem>>, vector<8x512xf32>,
    %c510_i32 = arith.constant 510 : i32
    %101 = tpu.dynamic_rotate %31 by %c510_i32 dim 1 : vector<8x512xf32>, i32 -> vector<8x512xf32>
    %c14 = arith.constant 14 : index
    %c0_45 = arith.constant 0 : index
    %102 = vector.load %arg8[%c14, %c0_45] : memref<25x512xf32, #tpu.memory_space<vmem>>, vector<1x512xf32>
    %103 = vector.broadcast %102 : vector<1x512xf32> to vector<8x512xf32>
    %104 = arith.mulf %101, %103 : vector<8x512xf32>
    %c112 = arith.constant 112 : index
    %c0_46 = arith.constant 0 : index
    %105 = vector.load %arg11[%c112, %c0_46] : memref<200x512xf32, #tpu.memory_space<vmem>>, vector<8x512xf32>
    tpu.vector_store %arg11[%c112, %c0_46], %104 {strides = array<i32>} : memref<200x512xf32, #tpu.memory_space<vmem>>, vector<8x512xf32>,
    %c498_i32 = arith.constant 498 : i32
    %106 = tpu.dynamic_rotate %31 by %c498_i32 dim 1 : vector<8x512xf32>, i32 -> vector<8x512xf32>
    %c15 = arith.constant 15 : index
    %c0_47 = arith.constant 0 : index
    %107 = vector.load %arg8[%c15, %c0_47] : memref<25x512xf32, #tpu.memory_space<vmem>>, vector<1x512xf32>
    %108 = vector.broadcast %107 : vector<1x512xf32> to vector<8x512xf32>
    %109 = arith.mulf %106, %108 : vector<8x512xf32>
    %c120 = arith.constant 120 : index
    %c0_48 = arith.constant 0 : index
    %110 = vector.load %arg11[%c120, %c0_48] : memref<200x512xf32, #tpu.memory_space<vmem>>, vector<8x512xf32>
    tpu.vector_store %arg11[%c120, %c0_48], %109 {strides = array<i32>} : memref<200x512xf32, #tpu.memory_space<vmem>>, vector<8x512xf32>,
    %c497_i32 = arith.constant 497 : i32
    %111 = tpu.dynamic_rotate %31 by %c497_i32 dim 1 : vector<8x512xf32>, i32 -> vector<8x512xf32>
    %c16_49 = arith.constant 16 : index
    %c0_50 = arith.constant 0 : index
    %112 = vector.load %arg8[%c16_49, %c0_50] : memref<25x512xf32, #tpu.memory_space<vmem>>, vector<1x512xf32>
    %113 = vector.broadcast %112 : vector<1x512xf32> to vector<8x512xf32>
    %114 = arith.mulf %111, %113 : vector<8x512xf32>
    %c128 = arith.constant 128 : index
    %c0_51 = arith.constant 0 : index
    %115 = vector.load %arg11[%c128, %c0_51] : memref<200x512xf32, #tpu.memory_space<vmem>>, vector<8x512xf32>
    tpu.vector_store %arg11[%c128, %c0_51], %114 {strides = array<i32>} : memref<200x512xf32, #tpu.memory_space<vmem>>, vector<8x512xf32>,
    %c496_i32 = arith.constant 496 : i32
    %116 = tpu.dynamic_rotate %31 by %c496_i32 dim 1 : vector<8x512xf32>, i32 -> vector<8x512xf32>
    %c17 = arith.constant 17 : index
    %c0_52 = arith.constant 0 : index
    %117 = vector.load %arg8[%c17, %c0_52] : memref<25x512xf32, #tpu.memory_space<vmem>>, vector<1x512xf32>
    %118 = vector.broadcast %117 : vector<1x512xf32> to vector<8x512xf32>
    %119 = arith.mulf %116, %118 : vector<8x512xf32>
    %c136 = arith.constant 136 : index
    %c0_53 = arith.constant 0 : index
    %120 = vector.load %arg11[%c136, %c0_53] : memref<200x512xf32, #tpu.memory_space<vmem>>, vector<8x512xf32>
    tpu.vector_store %arg11[%c136, %c0_53], %119 {strides = array<i32>} : memref<200x512xf32, #tpu.memory_space<vmem>>, vector<8x512xf32>,
    %c495_i32 = arith.constant 495 : i32
    %121 = tpu.dynamic_rotate %31 by %c495_i32 dim 1 : vector<8x512xf32>, i32 -> vector<8x512xf32>
    %c18 = arith.constant 18 : index
    %c0_54 = arith.constant 0 : index
    %122 = vector.load %arg8[%c18, %c0_54] : memref<25x512xf32, #tpu.memory_space<vmem>>, vector<1x512xf32>
    %123 = vector.broadcast %122 : vector<1x512xf32> to vector<8x512xf32>
    %124 = arith.mulf %121, %123 : vector<8x512xf32>
    %c144 = arith.constant 144 : index
    %c0_55 = arith.constant 0 : index
    %125 = vector.load %arg11[%c144, %c0_55] : memref<200x512xf32, #tpu.memory_space<vmem>>, vector<8x512xf32>
    tpu.vector_store %arg11[%c144, %c0_55], %124 {strides = array<i32>} : memref<200x512xf32, #tpu.memory_space<vmem>>, vector<8x512xf32>,
    %c494_i32 = arith.constant 494 : i32
    %126 = tpu.dynamic_rotate %31 by %c494_i32 dim 1 : vector<8x512xf32>, i32 -> vector<8x512xf32>
    %c19 = arith.constant 19 : index
    %c0_56 = arith.constant 0 : index
    %127 = vector.load %arg8[%c19, %c0_56] : memref<25x512xf32, #tpu.memory_space<vmem>>, vector<1x512xf32>
    %128 = vector.broadcast %127 : vector<1x512xf32> to vector<8x512xf32>
    %129 = arith.mulf %126, %128 : vector<8x512xf32>
    %c152 = arith.constant 152 : index
    %c0_57 = arith.constant 0 : index
    %130 = vector.load %arg11[%c152, %c0_57] : memref<200x512xf32, #tpu.memory_space<vmem>>, vector<8x512xf32>
    tpu.vector_store %arg11[%c152, %c0_57], %129 {strides = array<i32>} : memref<200x512xf32, #tpu.memory_space<vmem>>, vector<8x512xf32>,
    %c482_i32 = arith.constant 482 : i32
    %131 = tpu.dynamic_rotate %31 by %c482_i32 dim 1 : vector<8x512xf32>, i32 -> vector<8x512xf32>
    %c20 = arith.constant 20 : index
    %c0_58 = arith.constant 0 : index
    %132 = vector.load %arg8[%c20, %c0_58] : memref<25x512xf32, #tpu.memory_space<vmem>>, vector<1x512xf32>
    %133 = vector.broadcast %132 : vector<1x512xf32> to vector<8x512xf32>
    %134 = arith.mulf %131, %133 : vector<8x512xf32>
    %c160 = arith.constant 160 : index
    %c0_59 = arith.constant 0 : index
    %135 = vector.load %arg11[%c160, %c0_59] : memref<200x512xf32, #tpu.memory_space<vmem>>, vector<8x512xf32>
    tpu.vector_store %arg11[%c160, %c0_59], %134 {strides = array<i32>} : memref<200x512xf32, #tpu.memory_space<vmem>>, vector<8x512xf32>,
    %c481_i32 = arith.constant 481 : i32
    %136 = tpu.dynamic_rotate %31 by %c481_i32 dim 1 : vector<8x512xf32>, i32 -> vector<8x512xf32>
    %c21 = arith.constant 21 : index
    %c0_60 = arith.constant 0 : index
    %137 = vector.load %arg8[%c21, %c0_60] : memref<25x512xf32, #tpu.memory_space<vmem>>, vector<1x512xf32>
    %138 = vector.broadcast %137 : vector<1x512xf32> to vector<8x512xf32>
    %139 = arith.mulf %136, %138 : vector<8x512xf32>
    %c168 = arith.constant 168 : index
    %c0_61 = arith.constant 0 : index
    %140 = vector.load %arg11[%c168, %c0_61] : memref<200x512xf32, #tpu.memory_space<vmem>>, vector<8x512xf32>
    tpu.vector_store %arg11[%c168, %c0_61], %139 {strides = array<i32>} : memref<200x512xf32, #tpu.memory_space<vmem>>, vector<8x512xf32>,
    %c480_i32 = arith.constant 480 : i32
    %141 = tpu.dynamic_rotate %31 by %c480_i32 dim 1 : vector<8x512xf32>, i32 -> vector<8x512xf32>
    %c22 = arith.constant 22 : index
    %c0_62 = arith.constant 0 : index
    %142 = vector.load %arg8[%c22, %c0_62] : memref<25x512xf32, #tpu.memory_space<vmem>>, vector<1x512xf32>
    %143 = vector.broadcast %142 : vector<1x512xf32> to vector<8x512xf32>
    %144 = arith.mulf %141, %143 : vector<8x512xf32>
    %c176 = arith.constant 176 : index
    %c0_63 = arith.constant 0 : index
    %145 = vector.load %arg11[%c176, %c0_63] : memref<200x512xf32, #tpu.memory_space<vmem>>, vector<8x512xf32>
    tpu.vector_store %arg11[%c176, %c0_63], %144 {strides = array<i32>} : memref<200x512xf32, #tpu.memory_space<vmem>>, vector<8x512xf32>,
    %c479_i32 = arith.constant 479 : i32
    %146 = tpu.dynamic_rotate %31 by %c479_i32 dim 1 : vector<8x512xf32>, i32 -> vector<8x512xf32>
    %c23 = arith.constant 23 : index
    %c0_64 = arith.constant 0 : index
    %147 = vector.load %arg8[%c23, %c0_64] : memref<25x512xf32, #tpu.memory_space<vmem>>, vector<1x512xf32>
    %148 = vector.broadcast %147 : vector<1x512xf32> to vector<8x512xf32>
    %149 = arith.mulf %146, %148 : vector<8x512xf32>
    %c184 = arith.constant 184 : index
    %c0_65 = arith.constant 0 : index
    %150 = vector.load %arg11[%c184, %c0_65] : memref<200x512xf32, #tpu.memory_space<vmem>>, vector<8x512xf32>
    tpu.vector_store %arg11[%c184, %c0_65], %149 {strides = array<i32>} : memref<200x512xf32, #tpu.memory_space<vmem>>, vector<8x512xf32>,
    %c478_i32 = arith.constant 478 : i32
    %151 = tpu.dynamic_rotate %31 by %c478_i32 dim 1 : vector<8x512xf32>, i32 -> vector<8x512xf32>
    %c24_66 = arith.constant 24 : index
    %c0_67 = arith.constant 0 : index
    %152 = vector.load %arg8[%c24_66, %c0_67] : memref<25x512xf32, #tpu.memory_space<vmem>>, vector<1x512xf32>
    %153 = vector.broadcast %152 : vector<1x512xf32> to vector<8x512xf32>
    %154 = arith.mulf %151, %153 : vector<8x512xf32>
    %c192 = arith.constant 192 : index
    %c0_68 = arith.constant 0 : index
    %155 = vector.load %arg11[%c192, %c0_68] : memref<200x512xf32, #tpu.memory_space<vmem>>, vector<8x512xf32>
    tpu.vector_store %arg11[%c192, %c0_68], %154 {strides = array<i32>} : memref<200x512xf32, #tpu.memory_space<vmem>>, vector<8x512xf32>,
    %c0_69 = arith.constant 0 : index
    %c0_70 = arith.constant 0 : index
    %156 = vector.load %arg6[%c0_69, %c0_70] : memref<16x200xf32, #tpu.memory_space<vmem>>, vector<16x200xf32>
    %c0_71 = arith.constant 0 : index
    %c0_72 = arith.constant 0 : index
    %157 = vector.load %arg11[%c0_71, %c0_72] : memref<200x512xf32, #tpu.memory_space<vmem>>, vector<200x512xf32>
    %cst_73 = arith.constant dense<0.000000e+00> : vector<16x512xf32>
    %158 = tpu.matmul %156, %157, %cst_73 {dimension_numbers = #tpu.dot_dimension_numbers<[1], [0], [0], [1], [0, 0, 1, 1], [], []>} : vector<16x200xf32>, vector<200x512xf32>, vector<16x512xf32> -> vector<16x512xf32>
    %cst_74 = arith.constant 0.000000e+00 : f32
    %159 = vector.broadcast %cst_74 : f32 to vector<16x512xf32>
    %160 = arith.maximumf %158, %159 : vector<16x512xf32>
    %c17_i32_75 = arith.constant 17 : i32
    %161 = tpu.dynamic_rotate %160 by %c17_i32_75 dim 1 : vector<16x512xf32>, i32 -> vector<16x512xf32>
    %c0_76 = arith.constant 0 : index
    %c0_77 = arith.constant 0 : index
    %162 = vector.load %arg9[%c0_76, %c0_77] : memref<9x512xf32, #tpu.memory_space<vmem>>, vector<1x512xf32>
    %163 = vector.broadcast %162 : vector<1x512xf32> to vector<16x512xf32>
    %164 = arith.mulf %161, %163 : vector<16x512xf32>
    %c0_78 = arith.constant 0 : index
    %c0_79 = arith.constant 0 : index
    %165 = vector.load %arg12[%c0_78, %c0_79] : memref<144x512xf32, #tpu.memory_space<vmem>>, vector<16x512xf32>
    tpu.vector_store %arg12[%c0_78, %c0_79], %164 {strides = array<i32>} : memref<144x512xf32, #tpu.memory_space<vmem>>, vector<16x512xf32>,
    %c16_i32_80 = arith.constant 16 : i32
    %166 = tpu.dynamic_rotate %160 by %c16_i32_80 dim 1 : vector<16x512xf32>, i32 -> vector<16x512xf32>
    %c1_81 = arith.constant 1 : index
    %c0_82 = arith.constant 0 : index
    %167 = vector.load %arg9[%c1_81, %c0_82] : memref<9x512xf32, #tpu.memory_space<vmem>>, vector<1x512xf32>
    %168 = vector.broadcast %167 : vector<1x512xf32> to vector<16x512xf32>
    %169 = arith.mulf %166, %168 : vector<16x512xf32>
    %c16_83 = arith.constant 16 : index
    %c0_84 = arith.constant 0 : index
    %170 = vector.load %arg12[%c16_83, %c0_84] : memref<144x512xf32, #tpu.memory_space<vmem>>, vector<16x512xf32>
    tpu.vector_store %arg12[%c16_83, %c0_84], %169 {strides = array<i32>} : memref<144x512xf32, #tpu.memory_space<vmem>>, vector<16x512xf32>,
    %c15_i32_85 = arith.constant 15 : i32
    %171 = tpu.dynamic_rotate %160 by %c15_i32_85 dim 1 : vector<16x512xf32>, i32 -> vector<16x512xf32>
    %c2_86 = arith.constant 2 : index
    %c0_87 = arith.constant 0 : index
    %172 = vector.load %arg9[%c2_86, %c0_87] : memref<9x512xf32, #tpu.memory_space<vmem>>, vector<1x512xf32>
    %173 = vector.broadcast %172 : vector<1x512xf32> to vector<16x512xf32>
    %174 = arith.mulf %171, %173 : vector<16x512xf32>
    %c32_88 = arith.constant 32 : index
    %c0_89 = arith.constant 0 : index
    %175 = vector.load %arg12[%c32_88, %c0_89] : memref<144x512xf32, #tpu.memory_space<vmem>>, vector<16x512xf32>
    tpu.vector_store %arg12[%c32_88, %c0_89], %174 {strides = array<i32>} : memref<144x512xf32, #tpu.memory_space<vmem>>, vector<16x512xf32>,
    %c1_i32_90 = arith.constant 1 : i32
    %176 = tpu.dynamic_rotate %160 by %c1_i32_90 dim 1 : vector<16x512xf32>, i32 -> vector<16x512xf32>
    %c3_91 = arith.constant 3 : index
    %c0_92 = arith.constant 0 : index
    %177 = vector.load %arg9[%c3_91, %c0_92] : memref<9x512xf32, #tpu.memory_space<vmem>>, vector<1x512xf32>
    %178 = vector.broadcast %177 : vector<1x512xf32> to vector<16x512xf32>
    %179 = arith.mulf %176, %178 : vector<16x512xf32>
    %c48_93 = arith.constant 48 : index
    %c0_94 = arith.constant 0 : index
    %180 = vector.load %arg12[%c48_93, %c0_94] : memref<144x512xf32, #tpu.memory_space<vmem>>, vector<16x512xf32>
    tpu.vector_store %arg12[%c48_93, %c0_94], %179 {strides = array<i32>} : memref<144x512xf32, #tpu.memory_space<vmem>>, vector<16x512xf32>,
    %c4_95 = arith.constant 4 : index
    %c0_96 = arith.constant 0 : index
    %181 = vector.load %arg9[%c4_95, %c0_96] : memref<9x512xf32, #tpu.memory_space<vmem>>, vector<1x512xf32>
    %182 = vector.broadcast %181 : vector<1x512xf32> to vector<16x512xf32>
    %183 = arith.mulf %160, %182 : vector<16x512xf32>
    %c64_97 = arith.constant 64 : index
    %c0_98 = arith.constant 0 : index
    %184 = vector.load %arg12[%c64_97, %c0_98] : memref<144x512xf32, #tpu.memory_space<vmem>>, vector<16x512xf32>
    tpu.vector_store %arg12[%c64_97, %c0_98], %183 {strides = array<i32>} : memref<144x512xf32, #tpu.memory_space<vmem>>, vector<16x512xf32>,
    %c511_i32_99 = arith.constant 511 : i32
    %185 = tpu.dynamic_rotate %160 by %c511_i32_99 dim 1 : vector<16x512xf32>, i32 -> vector<16x512xf32>
    %c5_100 = arith.constant 5 : index
    %c0_101 = arith.constant 0 : index
    %186 = vector.load %arg9[%c5_100, %c0_101] : memref<9x512xf32, #tpu.memory_space<vmem>>, vector<1x512xf32>
    %187 = vector.broadcast %186 : vector<1x512xf32> to vector<16x512xf32>
    %188 = arith.mulf %185, %187 : vector<16x512xf32>
    %c80_102 = arith.constant 80 : index
    %c0_103 = arith.constant 0 : index
    %189 = vector.load %arg12[%c80_102, %c0_103] : memref<144x512xf32, #tpu.memory_space<vmem>>, vector<16x512xf32>
    tpu.vector_store %arg12[%c80_102, %c0_103], %188 {strides = array<i32>} : memref<144x512xf32, #tpu.memory_space<vmem>>, vector<16x512xf32>,
    %c497_i32_104 = arith.constant 497 : i32
    %190 = tpu.dynamic_rotate %160 by %c497_i32_104 dim 1 : vector<16x512xf32>, i32 -> vector<16x512xf32>
    %c6_105 = arith.constant 6 : index
    %c0_106 = arith.constant 0 : index
    %191 = vector.load %arg9[%c6_105, %c0_106] : memref<9x512xf32, #tpu.memory_space<vmem>>, vector<1x512xf32>
    %192 = vector.broadcast %191 : vector<1x512xf32> to vector<16x512xf32>
    %193 = arith.mulf %190, %192 : vector<16x512xf32>
    %c96_107 = arith.constant 96 : index
    %c0_108 = arith.constant 0 : index
    %194 = vector.load %arg12[%c96_107, %c0_108] : memref<144x512xf32, #tpu.memory_space<vmem>>, vector<16x512xf32>
    tpu.vector_store %arg12[%c96_107, %c0_108], %193 {strides = array<i32>} : memref<144x512xf32, #tpu.memory_space<vmem>>, vector<16x512xf32>,
    %c496_i32_109 = arith.constant 496 : i32
    %195 = tpu.dynamic_rotate %160 by %c496_i32_109 dim 1 : vector<16x512xf32>, i32 -> vector<16x512xf32>
    %c7_110 = arith.constant 7 : index
    %c0_111 = arith.constant 0 : index
    %196 = vector.load %arg9[%c7_110, %c0_111] : memref<9x512xf32, #tpu.memory_space<vmem>>, vector<1x512xf32>
    %197 = vector.broadcast %196 : vector<1x512xf32> to vector<16x512xf32>
    %198 = arith.mulf %195, %197 : vector<16x512xf32>
    %c112_112 = arith.constant 112 : index
    %c0_113 = arith.constant 0 : index
    %199 = vector.load %arg12[%c112_112, %c0_113] : memref<144x512xf32, #tpu.memory_space<vmem>>, vector<16x512xf32>
    tpu.vector_store %arg12[%c112_112, %c0_113], %198 {strides = array<i32>} : memref<144x512xf32, #tpu.memory_space<vmem>>, vector<16x512xf32>,
    %c495_i32_114 = arith.constant 495 : i32
    %200 = tpu.dynamic_rotate %160 by %c495_i32_114 dim 1 : vector<16x512xf32>, i32 -> vector<16x512xf32>
    %c8_115 = arith.constant 8 : index
    %c0_116 = arith.constant 0 : index
    %201 = vector.load %arg9[%c8_115, %c0_116] : memref<9x512xf32, #tpu.memory_space<vmem>>, vector<1x512xf32>
    %202 = vector.broadcast %201 : vector<1x512xf32> to vector<16x512xf32>
    %203 = arith.mulf %200, %202 : vector<16x512xf32>
    %c128_117 = arith.constant 128 : index
    %c0_118 = arith.constant 0 : index
    %204 = vector.load %arg12[%c128_117, %c0_118] : memref<144x512xf32, #tpu.memory_space<vmem>>, vector<16x512xf32>
    tpu.vector_store %arg12[%c128_117, %c0_118], %203 {strides = array<i32>} : memref<144x512xf32, #tpu.memory_space<vmem>>, vector<16x512xf32>,
    %c0_119 = arith.constant 0 : index
    %c0_120 = arith.constant 0 : index
    %205 = vector.load %arg7[%c0_119, %c0_120] : memref<1x144xf32, #tpu.memory_space<vmem>>, vector<1x144xf32>
    %c0_121 = arith.constant 0 : index
    %c0_122 = arith.constant 0 : index
    %206 = vector.load %arg12[%c0_121, %c0_122] : memref<144x512xf32, #tpu.memory_space<vmem>>, vector<144x512xf32>
    %cst_123 = arith.constant dense<0.000000e+00> : vector<1x512xf32>
    %207 = tpu.matmul %205, %206, %cst_123 {dimension_numbers = #tpu.dot_dimension_numbers<[1], [0], [0], [1], [0, 0, 1, 1], [], []>} : vector<1x144xf32>, vector<144x512xf32>, vector<1x512xf32> -> vector<1x512xf32>
    %208 = vector.extract_strided_slice %207 {offsets = [0, 0], sizes = [1, 256], strides = [1, 1]} : vector<1x512xf32> to vector<1x256xf32>
    %209 = vector.extract_strided_slice %207 {offsets = [0, 256], sizes = [1, 256], strides = [1, 1]} : vector<1x512xf32> to vector<1x256xf32>
    %210 = tpu.concatenate %208, %209 in 0 : vector<1x256xf32>, vector<1x256xf32> -> vector<2x256xf32>
    %cst_124 = arith.constant dense<0xFF800000> : vector<2xf32>
    %211 = vector.multi_reduction <maximumf>, %210, %cst_124 [1] : vector<2x256xf32> to vector<2xf32>
    %212 = vector.shape_cast %211 : vector<2xf32> to vector<2x1xf32>
    %213 = vector.broadcast %212 : vector<2x1xf32> to vector<2x256xf32>
    %214 = arith.subf %210, %213 : vector<2x256xf32>
    %215 = math.exp %214 : vector<2x256xf32>
    %cst_125 = arith.constant dense<0.000000e+00> : vector<2xf32>
    %216 = vector.multi_reduction <add>, %215, %cst_125 [1] : vector<2x256xf32> to vector<2xf32>
    %217 = vector.shape_cast %216 : vector<2xf32> to vector<2x1xf32>
    %218 = math.log %217 : vector<2x1xf32>
    %219 = vector.broadcast %218 : vector<2x1xf32> to vector<2x256xf32>
    %220 = arith.subf %214, %219 : vector<2x256xf32>
    %c0_126 = arith.constant 0 : index
    %c0_127 = arith.constant 0 : index
    %221 = vector.load %arg10[%c0_126, %c0_127] : memref<2x256xf32, #tpu.memory_space<vmem>>, vector<2x256xf32>
    tpu.vector_store %arg10[%c0_126, %c0_127], %220 {strides = array<i32>} : memref<2x256xf32, #tpu.memory_space<vmem>>, vector<2x256xf32>,
    return
  }
  func.func @transform_0(%arg0: i32) -> (i32, i32) {
    %c0_i32 = arith.constant 0 : i32
    %c0_i32_0 = arith.constant 0 : i32
    return %arg0, %c0_i32 : i32, i32
  }
  func.func @transform_1(%arg0: i32) -> (i32, i32) {
    %c0_i32 = arith.constant 0 : i32
    %c0_i32_0 = arith.constant 0 : i32
    %c0_i32_1 = arith.constant 0 : i32
    return %c0_i32, %c0_i32_0 : i32, i32
  }
  func.func @transform_2(%arg0: i32) -> (i32, i32) {
    %c0_i32 = arith.constant 0 : i32
    %c0_i32_0 = arith.constant 0 : i32
    %c0_i32_1 = arith.constant 0 : i32
    return %c0_i32, %c0_i32_0 : i32, i32
  }
  func.func @transform_3(%arg0: i32) -> (i32, i32) {
    %c0_i32 = arith.constant 0 : i32
    %c0_i32_0 = arith.constant 0 : i32
    %c0_i32_1 = arith.constant 0 : i32
    return %c0_i32, %c0_i32_0 : i32, i32
  }
  func.func @transform_4(%arg0: i32) -> (i32, i32) {
    %c0_i32 = arith.constant 0 : i32
    %c0_i32_0 = arith.constant 0 : i32
    %c0_i32_1 = arith.constant 0 : i32
    return %c0_i32, %c0_i32_0 : i32, i32
  }
  func.func @transform_5(%arg0: i32) -> (i32, i32) {
    %c0_i32 = arith.constant 0 : i32
    %c0_i32_0 = arith.constant 0 : i32
    %c0_i32_1 = arith.constant 0 : i32
    return %c0_i32, %c0_i32_0 : i32, i32
  }
  func.func @transform_6(%arg0: i32) -> (i32, i32) {
    %c0_i32 = arith.constant 0 : i32
    %c0_i32_0 = arith.constant 0 : i32
    %c0_i32_1 = arith.constant 0 : i32
    return %c0_i32, %c0_i32_0 : i32, i32
  }
  func.func @transform_7(%arg0: i32) -> (i32, i32) {
    %c0_i32 = arith.constant 0 : i32
    %c0_i32_0 = arith.constant 0 : i32
    %c0_i32_1 = arith.constant 0 : i32
    return %c0_i32, %c0_i32_0 : i32, i32
  }
  func.func @transform_8(%arg0: i32) -> (i32, i32) {
    %c0_i32 = arith.constant 0 : i32
    %c0_i32_0 = arith.constant 0 : i32
    %c0_i32_1 = arith.constant 0 : i32
    return %c0_i32, %c0_i32_0 : i32, i32
  }
  func.func @transform_9(%arg0: i32) -> (i32, i32) {
    %c0_i32 = arith.constant 0 : i32
    %c0_i32_0 = arith.constant 0 : i32
    return %arg0, %c0_i32 : i32, i32
  }
}

</mosaic_0001>

<llo_original>
// kernel: image_decoder_forward.1
$region0: #{image_decoder_forward.1}
  #allocation0 [shape = 'u32[]', space=smem, size = 0x4, offset = 0x4, fixed_abs, tag = 'smem constant byte address 0x4 - core index']
  #allocation1 [shape = 'u32[144,128]{1,0:T(1,128)}', space=vmem, size = 0x12000, scoped, tag = 'internal scratch']
  #allocation2 [shape = 'f32[200,512]{1,0:T(8,128)}', space=vmem, size = 0x64000, scoped, tag = 'scratch operand']
  #allocation3 [shape = 'f32[144,512]{1,0:T(8,128)}', space=vmem, size = 0x48000, scoped, tag = 'scratch operand']
  %s0 = inlined_call_operand.vmem [shape: f32[2,10], index: 0, kind: input, shape index: {}]
  %s1 = inlined_call_operand.vmem [shape: f32[10,128], index: 1, kind: input, shape index: {}]
  %s2 = inlined_call_operand.vmem [shape: f32[1,128], index: 2, kind: input, shape index: {}]
  %s3 = inlined_call_operand.vmem [shape: f32[128,1280], index: 3, kind: input, shape index: {}]
  %s4 = inlined_call_operand.vmem [shape: f32[1,1280], index: 4, kind: input, shape index: {}]
  %s5 = inlined_call_operand.vmem [shape: f32[16,200], index: 5, kind: input, shape index: {}]
  %s6 = inlined_call_operand.vmem [shape: f32[1,144], index: 6, kind: input, shape index: {}]
  %s7 = inlined_call_operand.vmem [shape: f32[25,512], index: 7, kind: input, shape index: {}]
  %s8 = inlined_call_operand.vmem [shape: f32[9,512], index: 8, kind: input, shape index: {}]
  %s9 = inlined_call_operand.vmem [shape: f32[2,256], index: 9, kind: output, shape index: {}]
  %s10 = sld [smem:[#allocation0]]
  $region46: #{image_decoder_forward.1} parent=0
    _
  %s12 = ssub.s32 1, %s10
  %s13 = scalar_select 0, %s12, %s10
  // Predicated region
  $region2: #{image_decoder_forward.1} parent=0 // pred_check
    _
  $region3: #{image_decoder_forward.1} parent=0 // pred_check_branch
    %15 = sbr.rel (0) target = $region5
  $region4: #{image_decoder_forward.1} parent=0 // pred_region
    _
  $region5: #{image_decoder_forward.1} parent=0 // pred_fallthru
    _
  // Predicated region
  $region6: #{image_decoder_forward.1} parent=0 // pred_check
    _
  $region7: #{image_decoder_forward.1} parent=0 // pred_check_branch
    %17 = sbr.rel (0) target = $region9
  $region8: #{image_decoder_forward.1} parent=0 // pred_region
    _
  $region9: #{image_decoder_forward.1} parent=0 // pred_fallthru
    _
  // Predicated region
  $region10: #{image_decoder_forward.1} parent=0 // pred_check
    _
  $region11: #{image_decoder_forward.1} parent=0 // pred_check_branch
    %19 = sbr.rel (0) target = $region13
  $region12: #{image_decoder_forward.1} parent=0 // pred_region
    _
  $region13: #{image_decoder_forward.1} parent=0 // pred_fallthru
    _
  // Predicated region
  $region14: #{image_decoder_forward.1} parent=0 // pred_check
    _
  $region15: #{image_decoder_forward.1} parent=0 // pred_check_branch
    %21 = sbr.rel (0) target = $region17
  $region16: #{image_decoder_forward.1} parent=0 // pred_region
    _
  $region17: #{image_decoder_forward.1} parent=0 // pred_fallthru
    _
  // Predicated region
  $region18: #{image_decoder_forward.1} parent=0 // pred_check
    _
  $region19: #{image_decoder_forward.1} parent=0 // pred_check_branch
    %23 = sbr.rel (0) target = $region21
  $region20: #{image_decoder_forward.1} parent=0 // pred_region
    _
  $region21: #{image_decoder_forward.1} parent=0 // pred_fallthru
    _
  // Predicated region
  $region22: #{image_decoder_forward.1} parent=0 // pred_check
    _
  $region23: #{image_decoder_forward.1} parent=0 // pred_check_branch
    %25 = sbr.rel (0) target = $region25
  $region24: #{image_decoder_forward.1} parent=0 // pred_region
    _
  $region25: #{image_decoder_forward.1} parent=0 // pred_fallthru
    _
  // Predicated region
  $region26: #{image_decoder_forward.1} parent=0 // pred_check
    _
  $region27: #{image_decoder_forward.1} parent=0 // pred_check_branch
    %27 = sbr.rel (0) target = $region29
  $region28: #{image_decoder_forward.1} parent=0 // pred_region
    _
  $region29: #{image_decoder_forward.1} parent=0 // pred_fallthru
    _
  // Predicated region
  $region30: #{image_decoder_forward.1} parent=0 // pred_check
    _
  $region31: #{image_decoder_forward.1} parent=0 // pred_check_branch
    %29 = sbr.rel (0) target = $region33
  $region32: #{image_decoder_forward.1} parent=0 // pred_region
    _
  $region33: #{image_decoder_forward.1} parent=0 // pred_fallthru
    _
  // Predicated region
  $region34: #{image_decoder_forward.1} parent=0 // pred_check
    _
  $region35: #{image_decoder_forward.1} parent=0 // pred_check_branch
    %31 = sbr.rel (0) target = $region37
  $region36: #{image_decoder_forward.1} parent=0 // pred_region
    _
  $region37: #{image_decoder_forward.1} parent=0 // pred_fallthru
    _
  %v32 = vld [vmem:[%s0] sm:$0x3]
  %v33 = vld [vmem:[%s1] sm:$0xff]
  %v34 = vld [vmem:[%s1 + $0x8] sm:$0x3]
  %v35 = vld [vmem:[%s2] sm:$0x1]
  %v37 = vlaneseq
  %v38 = vshrl.u32 %v37, 7
  %v39 = vsub.s32 0, %v38
  %v40 = vrot.slane %v35, %v39
  %vm42 = vcmask 80896
  %v44 = vsel %vm42, %v32, 0
  %vm46 = vcmask 1041408
  %v48 = vsel %vm46, %v34, 0
  %50 = vmatprep.subr.mxu0 0.0
  %51 = vmatpush1.msra.mxu0 0.0
  %52 = vmatprep.subr.mxu0 0.0
  %53 = vmatpush1.msra.mxu0 0.0
  %54 = vmatprep.subr.mxu0 0.0
  %55 = vmatpush1.msra.mxu0 0.0
  %56 = vmatprep.subr.mxu0 0.0
  %57 = vmatpush1.msra.mxu0 0.0
  %58 = vmatprep.subr.mxu0 0.0
  %59 = vmatpush1.msra.mxu0 0.0
  %60 = vmatprep.subr.mxu0 0.0
  %61 = vmatpush1.msra.mxu0 0.0
  %62 = vmatprep.subr.mxu0 0.0
  %63 = vmatpush1.msra.mxu0 0.0
  %64 = vmatprep.subr.mxu0 0.0
  %65 = vmatpush1.msra.mxu0 0.0
  %66 = vmatprep.subr.mxu0 0.0
  %67 = vmatpush1.msra.mxu0 0.0
  %68 = vmatprep.subr.mxu0 0.0
  %69 = vmatpush1.msra.mxu0 0.0
  %70 = vmatprep.subr.mxu0 0.0
  %71 = vmatpush1.msra.mxu0 0.0
  %72 = vmatprep.subr.mxu0 0.0
  %73 = vmatpush1.msra.mxu0 0.0
  %74 = vmatprep.subr.mxu0 0.0
  %75 = vmatpush1.msra.mxu0 0.0
  %76 = vmatprep.subr.mxu0 0.0
  %77 = vmatpush1.msra.mxu0 0.0
  %78 = vmatprep.subr.mxu0 0.0
  %79 = vmatpush1.msra.mxu0 %v48
  %80 = vmatprep.subr.mxu0 0.0
  %81 = vmatpush1.msra.mxu0 %v33
  %82 = vmatprep.subr.mxu0 0.0
  %83 = vmatpush2.msra.mxu0 0.0
  %84 = vmatprep.subr.mxu0 0.0
  %85 = vmatpush2.msra.mxu0 0.0
  %86 = vmatprep.subr.mxu0 0.0
  %87 = vmatpush2.msra.mxu0 0.0
  %88 = vmatprep.subr.mxu0 0.0
  %89 = vmatpush2.msra.mxu0 0.0
  %90 = vmatprep.subr.mxu0 0.0
  %91 = vmatpush2.msra.mxu0 0.0
  %92 = vmatprep.subr.mxu0 0.0
  %93 = vmatpush2.msra.mxu0 0.0
  %94 = vmatprep.subr.mxu0 0.0
  %95 = vmatpush2.msra.mxu0 0.0
  %96 = vmatprep.subr.mxu0 0.0
  %97 = vmatpush2.msra.mxu0 0.0
  %98 = vmatprep.subr.mxu0 0.0
  %99 = vmatpush2.msra.mxu0 0.0
  %100 = vmatprep.subr.mxu0 0.0
  %101 = vmatpush2.msra.mxu0 0.0
  %102 = vmatprep.subr.mxu0 0.0
  %103 = vmatpush2.msra.mxu0 0.0
  %104 = vmatprep.subr.mxu0 0.0
  %105 = vmatpush2.msra.mxu0 0.0
  %106 = vmatprep.subr.mxu0 0.0
  %107 = vmatpush2.msra.mxu0 0.0
  %108 = vmatprep.subr.mxu0 0.0
  %109 = vmatpush2.msra.mxu0 0.0
  %110 = vmatprep.subr.mxu0 0.0
  %111 = vmatpush2.msra.mxu0 0.0
  %112 = vmatprep.subr.mxu0 0.0
  %113 = vmatpush2.msra.mxu0 0.0
  %114 = vmatprep.mubr.f32.mxu0 0.0
  %115 = vmatmul.mubr.f32.gmra.mxu0 %v44
  %v116 = vpop.f32.mrf.mxu0
  %v117 = vadd.f32 %v40, %v116
  %v118 = vpop.f32.mrf.mxu0
  %119 = vdwg.mxu0
  %v120 = vmax.f32 %v117, 0.0
  %v121 = vld [vmem:[%s3] sm:$0xff]
  %v122 = vld [vmem:[%s3 + $0x8] sm:$0xff]
  %v123 = vld [vmem:[%s3 + $0x10] sm:$0xff]
  %v124 = vld [vmem:[%s3 + $0x18] sm:$0xff]
  %v125 = vld [vmem:[%s3 + $0x20] sm:$0xff]
  %v126 = vld [vmem:[%s3 + $0x28] sm:$0xff]
  %v127 = vld [vmem:[%s3 + $0x30] sm:$0xff]
  %v128 = vld [vmem:[%s3 + $0x38] sm:$0xff]
  %v129 = vld [vmem:[%s3 + $0x40] sm:$0xff]
  %v130 = vld [vmem:[%s3 + $0x48] sm:$0xff]
  %v131 = vld [vmem:[%s3 + $0x50] sm:$0xff]
  %v132 = vld [vmem:[%s3 + $0x58] sm:$0xff]
  %v133 = vld [vmem:[%s3 + $0x60] sm:$0xff]
  %v134 = vld [vmem:[%s3 + $0x68] sm:$0xff]
  %v135 = vld [vmem:[%s3 + $0x70] sm:$0xff]
  %v136 = vld [vmem:[%s3 + $0x78] sm:$0xff]
  %v137 = vld [vmem:[%s3 + $0x80] sm:$0xff]
  %v138 = vld [vmem:[%s3 + $0x88] sm:$0xff]
  %v139 = vld [vmem:[%s3 + $0x90] sm:$0xff]
  %v140 = vld [vmem:[%s3 + $0x98] sm:$0xff]
  %v141 = vld [vmem:[%s3 + $0xa0] sm:$0xff]
  %v142 = vld [vmem:[%s3 + $0xa8] sm:$0xff]
  %v143 = vld [vmem:[%s3 + $0xb0] sm:$0xff]
  %v144 = vld [vmem:[%s3 + $0xb8] sm:$0xff]
  %v145 = vld [vmem:[%s3 + $0xc0] sm:$0xff]
  %v146 = vld [vmem:[%s3 + $0xc8] sm:$0xff]
  %v147 = vld [vmem:[%s3 + $0xd0] sm:$0xff]
  %v148 = vld [vmem:[%s3 + $0xd8] sm:$0xff]
  %v149 = vld [vmem:[%s3 + $0xe0] sm:$0xff]
  %v150 = vld [vmem:[%s3 + $0xe8] sm:$0xff]
  %v151 = vld [vmem:[%s3 + $0xf0] sm:$0xff]
  %v152 = vld [vmem:[%s3 + $0xf8] sm:$0xff]
  %v153 = vld [vmem:[%s3 + $0x100] sm:$0xff]
  %v154 = vld [vmem:[%s3 + $0x108] sm:$0xff]
  %v155 = vld [vmem:[%s3 + $0x110] sm:$0xff]
  %v156 = vld [vmem:[%s3 + $0x118] sm:$0xff]
  %v157 = vld [vmem:[%s3 + $0x120] sm:$0xff]
  %v158 = vld [vmem:[%s3 + $0x128] sm:$0xff]
  %v159 = vld [vmem:[%s3 + $0x130] sm:$0xff]
  %v160 = vld [vmem:[%s3 + $0x138] sm:$0xff]
  %v161 = vld [vmem:[%s3 + $0x140] sm:$0xff]
  %v162 = vld [vmem:[%s3 + $0x148] sm:$0xff]
  %v163 = vld [vmem:[%s3 + $0x150] sm:$0xff]
  %v164 = vld [vmem:[%s3 + $0x158] sm:$0xff]
  %v165 = vld [vmem:[%s3 + $0x160] sm:$0xff]
  %v166 = vld [vmem:[%s3 + $0x168] sm:$0xff]
  %v167 = vld [vmem:[%s3 + $0x170] sm:$0xff]
  %v168 = vld [vmem:[%s3 + $0x178] sm:$0xff]
  %v169 = vld [vmem:[%s3 + $0x180] sm:$0xff]
  %v170 = vld [vmem:[%s3 + $0x188] sm:$0xff]
  %v171 = vld [vmem:[%s3 + $0x190] sm:$0xff]
  %v172 = vld [vmem:[%s3 + $0x198] sm:$0xff]
  %v173 = vld [vmem:[%s3 + $0x1a0] sm:$0xff]
  %v174 = vld [vmem:[%s3 + $0x1a8] sm:$0xff]
  %v175 = vld [vmem:[%s3 + $0x1b0] sm:$0xff]
  %v176 = vld [vmem:[%s3 + $0x1b8] sm:$0xff]
  %v177 = vld [vmem:[%s3 + $0x1c0] sm:$0xff]
  %v178 = vld [vmem:[%s3 + $0x1c8] sm:$0xff]
  %v179 = vld [vmem:[%s3 + $0x1d0] sm:$0xff]
  %v180 = vld [vmem:[%s3 + $0x1d8] sm:$0xff]
  %v181 = vld [vmem:[%s3 + $0x1e0] sm:$0xff]
  %v182 = vld [vmem:[%s3 + $0x1e8] sm:$0xff]
  %v183 = vld [vmem:[%s3 + $0x1f0] sm:$0xff]
  %v184 = vld [vmem:[%s3 + $0x1f8] sm:$0xff]
  %v185 = vld [vmem:[%s3 + $0x200] sm:$0xff]
  %v186 = vld [vmem:[%s3 + $0x208] sm:$0xff]
  %v187 = vld [vmem:[%s3 + $0x210] sm:$0xff]
  %v188 = vld [vmem:[%s3 + $0x218] sm:$0xff]
  %v189 = vld [vmem:[%s3 + $0x220] sm:$0xff]
  %v190 = vld [vmem:[%s3 + $0x228] sm:$0xff]
  %v191 = vld [vmem:[%s3 + $0x230] sm:$0xff]
  %v192 = vld [vmem:[%s3 + $0x238] sm:$0xff]
  %v193 = vld [vmem:[%s3 + $0x240] sm:$0xff]
  %v194 = vld [vmem:[%s3 + $0x248] sm:$0xff]
  %v195 = vld [vmem:[%s3 + $0x250] sm:$0xff]
  %v196 = vld [vmem:[%s3 + $0x258] sm:$0xff]
  %v197 = vld [vmem:[%s3 + $0x260] sm:$0xff]
  %v198 = vld [vmem:[%s3 + $0x268] sm:$0xff]
  %v199 = vld [vmem:[%s3 + $0x270] sm:$0xff]
  %v200 = vld [vmem:[%s3 + $0x278] sm:$0xff]
  %v201 = vld [vmem:[%s3 + $0x280] sm:$0xff]
  %v202 = vld [vmem:[%s3 + $0x288] sm:$0xff]
  %v203 = vld [vmem:[%s3 + $0x290] sm:$0xff]
  %v204 = vld [vmem:[%s3 + $0x298] sm:$0xff]
  %v205 = vld [vmem:[%s3 + $0x2a0] sm:$0xff]
  %v206 = vld [vmem:[%s3 + $0x2a8] sm:$0xff]
  %v207 = vld [vmem:[%s3 + $0x2b0] sm:$0xff]
  %v208 = vld [vmem:[%s3 + $0x2b8] sm:$0xff]
  %v209 = vld [vmem:[%s3 + $0x2c0] sm:$0xff]
  %v210 = vld [vmem:[%s3 + $0x2c8] sm:$0xff]
  %v211 = vld [vmem:[%s3 + $0x2d0] sm:$0xff]
  %v212 = vld [vmem:[%s3 + $0x2d8] sm:$0xff]
  %v213 = vld [vmem:[%s3 + $0x2e0] sm:$0xff]
  %v214 = vld [vmem:[%s3 + $0x2e8] sm:$0xff]
  %v215 = vld [vmem:[%s3 + $0x2f0] sm:$0xff]
  %v216 = vld [vmem:[%s3 + $0x2f8] sm:$0xff]
  %v217 = vld [vmem:[%s3 + $0x300] sm:$0xff]
  %v218 = vld [vmem:[%s3 + $0x308] sm:$0xff]
  %v219 = vld [vmem:[%s3 + $0x310] sm:$0xff]
  %v220 = vld [vmem:[%s3 + $0x318] sm:$0xff]
  %v221 = vld [vmem:[%s3 + $0x320] sm:$0xff]
  %v222 = vld [vmem:[%s3 + $0x328] sm:$0xff]
  %v223 = vld [vmem:[%s3 + $0x330] sm:$0xff]
  %v224 = vld [vmem:[%s3 + $0x338] sm:$0xff]
  %v225 = vld [vmem:[%s3 + $0x340] sm:$0xff]
  %v226 = vld [vmem:[%s3 + $0x348] sm:$0xff]
  %v227 = vld [vmem:[%s3 + $0x350] sm:$0xff]
  %v228 = vld [vmem:[%s3 + $0x358] sm:$0xff]
  %v229 = vld [vmem:[%s3 + $0x360] sm:$0xff]
  %v230 = vld [vmem:[%s3 + $0x368] sm:$0xff]
  %v231 = vld [vmem:[%s3 + $0x370] sm:$0xff]
  %v232 = vld [vmem:[%s3 + $0x378] sm:$0xff]
  %v233 = vld [vmem:[%s3 + $0x380] sm:$0xff]
  %v234 = vld [vmem:[%s3 + $0x388] sm:$0xff]
  %v235 = vld [vmem:[%s3 + $0x390] sm:$0xff]
  %v236 = vld [vmem:[%s3 + $0x398] sm:$0xff]
  %v237 = vld [vmem:[%s3 + $0x3a0] sm:$0xff]
  %v238 = vld [vmem:[%s3 + $0x3a8] sm:$0xff]
  %v239 = vld [vmem:[%s3 + $0x3b0] sm:$0xff]
  %v240 = vld [vmem:[%s3 + $0x3b8] sm:$0xff]
  %v241 = vld [vmem:[%s3 + $0x3c0] sm:$0xff]
  %v242 = vld [vmem:[%s3 + $0x3c8] sm:$0xff]
  %v243 = vld [vmem:[%s3 + $0x3d0] sm:$0xff]
  %v244 = vld [vmem:[%s3 + $0x3d8] sm:$0xff]
  %v245 = vld [vmem:[%s3 + $0x3e0] sm:$0xff]
  %v246 = vld [vmem:[%s3 + $0x3e8] sm:$0xff]
  %v247 = vld [vmem:[%s3 + $0x3f0] sm:$0xff]
  %v248 = vld [vmem:[%s3 + $0x3f8] sm:$0xff]
  %v249 = vld [vmem:[%s3 + $0x400] sm:$0xff]
  %v250 = vld [vmem:[%s3 + $0x408] sm:$0xff]
  %v251 = vld [vmem:[%s3 + $0x410] sm:$0xff]
  %v252 = vld [vmem:[%s3 + $0x418] sm:$0xff]
  %v253 = vld [vmem:[%s3 + $0x420] sm:$0xff]
  %v254 = vld [vmem:[%s3 + $0x428] sm:$0xff]
  %v255 = vld [vmem:[%s3 + $0x430] sm:$0xff]
  %v256 = vld [vmem:[%s3 + $0x438] sm:$0xff]
  %v257 = vld [vmem:[%s3 + $0x440] sm:$0xff]
  %v258 = vld [vmem:[%s3 + $0x448] sm:$0xff]
  %v259 = vld [vmem:[%s3 + $0x450] sm:$0xff]
  %v260 = vld [vmem:[%s3 + $0x458] sm:$0xff]
  %v261 = vld [vmem:[%s3 + $0x460] sm:$0xff]
  %v262 = vld [vmem:[%s3 + $0x468] sm:$0xff]
  %v263 = vld [vmem:[%s3 + $0x470] sm:$0xff]
  %v264 = vld [vmem:[%s3 + $0x478] sm:$0xff]
  %v265 = vld [vmem:[%s3 + $0x480] sm:$0xff]
  %v266 = vld [vmem:[%s3 + $0x488] sm:$0xff]
  %v267 = vld [vmem:[%s3 + $0x490] sm:$0xff]
  %v268 = vld [vmem:[%s3 + $0x498] sm:$0xff]
  %v269 = vld [vmem:[%s3 + $0x4a0] sm:$0xff]
  %v270 = vld [vmem:[%s3 + $0x4a8] sm:$0xff]
  %v271 = vld [vmem:[%s3 + $0x4b0] sm:$0xff]
  %v272 = vld [vmem:[%s3 + $0x4b8] sm:$0xff]
  %v273 = vld [vmem:[%s3 + $0x4c0] sm:$0xff]
  %v274 = vld [vmem:[%s3 + $0x4c8] sm:$0xff]
  %v275 = vld [vmem:[%s3 + $0x4d0] sm:$0xff]
  %v276 = vld [vmem:[%s3 + $0x4d8] sm:$0xff]
  %v277 = vld [vmem:[%s3 + $0x4e0] sm:$0xff]
  %v278 = vld [vmem:[%s3 + $0x4e8] sm:$0xff]
  %v279 = vld [vmem:[%s3 + $0x4f0] sm:$0xff]
  %v280 = vld [vmem:[%s3 + $0x4f8] sm:$0xff]
  %v281 = vld [vmem:[%s4] sm:$0xff]
  %v282 = vld [vmem:[%s4 + $0x8] sm:$0x3]
  %v285 = vlaneseq
  %v286 = vshrl.u32 %v285, 7
  %v287 = vsub.s32 0, %v286
  %v288 = vrot.slane %v281, %v287
  %v289 = vlaneseq
  %v290 = vshrl.u32 %v289, 7
  %v291 = vsub.s32 1, %v290
  %v292 = vrot.slane %v281, %v291
  %v293 = vlaneseq
  %v294 = vshrl.u32 %v293, 7
  %v295 = vsub.s32 2, %v294
  %v296 = vrot.slane %v281, %v295
  %v297 = vlaneseq
  %v298 = vshrl.u32 %v297, 7
  %v299 = vsub.s32 3, %v298
  %v300 = vrot.slane %v281, %v299
  %v301 = vlaneseq
  %v302 = vshrl.u32 %v301, 7
  %v303 = vsub.s32 4, %v302
  %v304 = vrot.slane %v281, %v303
  %v305 = vlaneseq
  %v306 = vshrl.u32 %v305, 7
  %v307 = vsub.s32 5, %v306
  %v308 = vrot.slane %v281, %v307
  %v309 = vlaneseq
  %v310 = vshrl.u32 %v309, 7
  %v311 = vsub.s32 6, %v310
  %v312 = vrot.slane %v281, %v311
  %v313 = vlaneseq
  %v314 = vshrl.u32 %v313, 7
  %v315 = vsub.s32 7, %v314
  %v316 = vrot.slane %v281, %v315
  %v317 = vlaneseq
  %v318 = vshrl.u32 %v317, 7
  %v319 = vsub.s32 0, %v318
  %v320 = vrot.slane %v282, %v319
  %v321 = vlaneseq
  %v322 = vshrl.u32 %v321, 7
  %v323 = vsub.s32 1, %v322
  %v324 = vrot.slane %v282, %v323
  %335 = vmatprep.subr.mxu0 %v272
  %336 = vmatpush1.msra.mxu0 %v271
  %337 = vmatprep.subr.mxu0 %v262
  %338 = vmatpush1.msra.mxu0 %v261
  %339 = vmatprep.subr.mxu0 %v252
  %340 = vmatpush1.msra.mxu0 %v251
  %341 = vmatprep.subr.mxu0 %v242
  %342 = vmatpush1.msra.mxu0 %v241
  %343 = vmatprep.subr.mxu0 %v232
  %344 = vmatpush1.msra.mxu0 %v231
  %345 = vmatprep.subr.mxu0 %v222
  %346 = vmatpush1.msra.mxu0 %v221
  %347 = vmatprep.subr.mxu0 %v212
  %348 = vmatpush1.msra.mxu0 %v211
  %349 = vmatprep.subr.mxu0 %v202
  %350 = vmatpush1.msra.mxu0 %v201
  %351 = vmatprep.subr.mxu0 %v192
  %352 = vmatpush1.msra.mxu0 %v191
  %353 = vmatprep.subr.mxu0 %v182
  %354 = vmatpush1.msra.mxu0 %v181
  %355 = vmatprep.subr.mxu0 %v172
  %356 = vmatpush1.msra.mxu0 %v171
  %357 = vmatprep.subr.mxu0 %v162
  %358 = vmatpush1.msra.mxu0 %v161
  %359 = vmatprep.subr.mxu0 %v152
  %360 = vmatpush1.msra.mxu0 %v151
  %361 = vmatprep.subr.mxu0 %v142
  %362 = vmatpush1.msra.mxu0 %v141
  %363 = vmatprep.subr.mxu0 %v132
  %364 = vmatpush1.msra.mxu0 %v131
  %365 = vmatprep.subr.mxu0 %v122
  %366 = vmatpush1.msra.mxu0 %v121
  %367 = vmatprep.subr.mxu0 0.0
  %368 = vmatpush2.msra.mxu0 0.0
  %369 = vmatprep.subr.mxu0 0.0
  %370 = vmatpush2.msra.mxu0 0.0
  %371 = vmatprep.subr.mxu0 0.0
  %372 = vmatpush2.msra.mxu0 0.0
  %373 = vmatprep.subr.mxu0 0.0
  %374 = vmatpush2.msra.mxu0 0.0
  %375 = vmatprep.subr.mxu0 0.0
  %376 = vmatpush2.msra.mxu0 0.0
  %377 = vmatprep.subr.mxu0 0.0
  %378 = vmatpush2.msra.mxu0 0.0
  %379 = vmatprep.subr.mxu0 0.0
  %380 = vmatpush2.msra.mxu0 0.0
  %381 = vmatprep.subr.mxu0 0.0
  %382 = vmatpush2.msra.mxu0 0.0
  %383 = vmatprep.subr.mxu0 0.0
  %384 = vmatpush2.msra.mxu0 0.0
  %385 = vmatprep.subr.mxu0 0.0
  %386 = vmatpush2.msra.mxu0 0.0
  %387 = vmatprep.subr.mxu0 0.0
  %388 = vmatpush2.msra.mxu0 0.0
  %389 = vmatprep.subr.mxu0 0.0
  %390 = vmatpush2.msra.mxu0 0.0
  %391 = vmatprep.subr.mxu0 0.0
  %392 = vmatpush2.msra.mxu0 0.0
  %393 = vmatprep.subr.mxu0 0.0
  %394 = vmatpush2.msra.mxu0 0.0
  %395 = vmatprep.subr.mxu0 0.0
  %396 = vmatpush2.msra.mxu0 0.0
  %397 = vmatprep.subr.mxu0 0.0
  %398 = vmatpush2.msra.mxu0 0.0
  %399 = vmatprep.mubr.f32.mxu0 0.0
  %400 = vmatmul.mubr.f32.gmra.mxu0 %v120
  %v401 = vpop.f32.mrf.mxu0
  %v402 = vadd.f32 %v288, %v401
  %v403 = vpop.f32.mrf.mxu0
  %v404 = vadd.f32 %v292, %v403
  %405 = vdwg.mxu0
  %406 = vmatprep.subr.mxu0 %v274
  %407 = vmatpush1.msra.mxu0 %v273
  %408 = vmatprep.subr.mxu0 %v264
  %409 = vmatpush1.msra.mxu0 %v263
  %410 = vmatprep.subr.mxu0 %v254
  %411 = vmatpush1.msra.mxu0 %v253
  %412 = vmatprep.subr.mxu0 %v244
  %413 = vmatpush1.msra.mxu0 %v243
  %414 = vmatprep.subr.mxu0 %v234
  %415 = vmatpush1.msra.mxu0 %v233
  %416 = vmatprep.subr.mxu0 %v224
  %417 = vmatpush1.msra.mxu0 %v223
  %418 = vmatprep.subr.mxu0 %v214
  %419 = vmatpush1.msra.mxu0 %v213
  %420 = vmatprep.subr.mxu0 %v204
  %421 = vmatpush1.msra.mxu0 %v203
  %422 = vmatprep.subr.mxu0 %v194
  %423 = vmatpush1.msra.mxu0 %v193
  %424 = vmatprep.subr.mxu0 %v184
  %425 = vmatpush1.msra.mxu0 %v183
  %426 = vmatprep.subr.mxu0 %v174
  %427 = vmatpush1.msra.mxu0 %v173
  %428 = vmatprep.subr.mxu0 %v164
  %429 = vmatpush1.msra.mxu0 %v163
  %430 = vmatprep.subr.mxu0 %v154
  %431 = vmatpush1.msra.mxu0 %v153
  %432 = vmatprep.subr.mxu0 %v144
  %433 = vmatpush1.msra.mxu0 %v143
  %434 = vmatprep.subr.mxu0 %v134
  %435 = vmatpush1.msra.mxu0 %v133
  %436 = vmatprep.subr.mxu0 %v124
  %437 = vmatpush1.msra.mxu0 %v123
  %438 = vmatprep.subr.mxu0 0.0
  %439 = vmatpush2.msra.mxu0 0.0
  %440 = vmatprep.subr.mxu0 0.0
  %441 = vmatpush2.msra.mxu0 0.0
  %442 = vmatprep.subr.mxu0 0.0
  %443 = vmatpush2.msra.mxu0 0.0
  %444 = vmatprep.subr.mxu0 0.0
  %445 = vmatpush2.msra.mxu0 0.0
  %446 = vmatprep.subr.mxu0 0.0
  %447 = vmatpush2.msra.mxu0 0.0
  %448 = vmatprep.subr.mxu0 0.0
  %449 = vmatpush2.msra.mxu0 0.0
  %450 = vmatprep.subr.mxu0 0.0
  %451 = vmatpush2.msra.mxu0 0.0
  %452 = vmatprep.subr.mxu0 0.0
  %453 = vmatpush2.msra.mxu0 0.0
  %454 = vmatprep.subr.mxu0 0.0
  %455 = vmatpush2.msra.mxu0 0.0
  %456 = vmatprep.subr.mxu0 0.0
  %457 = vmatpush2.msra.mxu0 0.0
  %458 = vmatprep.subr.mxu0 0.0
  %459 = vmatpush2.msra.mxu0 0.0
  %460 = vmatprep.subr.mxu0 0.0
  %461 = vmatpush2.msra.mxu0 0.0
  %462 = vmatprep.subr.mxu0 0.0
  %463 = vmatpush2.msra.mxu0 0.0
  %464 = vmatprep.subr.mxu0 0.0
  %465 = vmatpush2.msra.mxu0 0.0
  %466 = vmatprep.subr.mxu0 0.0
  %467 = vmatpush2.msra.mxu0 0.0
  %468 = vmatprep.subr.mxu0 0.0
  %469 = vmatpush2.msra.mxu0 0.0
  %470 = vmatprep.mubr.f32.mxu0 0.0
  %471 = vmatmul.mubr.f32.gmra.mxu0 %v120
  %v472 = vpop.f32.mrf.mxu0
  %v473 = vadd.f32 %v296, %v472
  %v474 = vpop.f32.mrf.mxu0
  %v475 = vadd.f32 %v300, %v474
  %476 = vdwg.mxu0
  %477 = vmatprep.subr.mxu0 %v276
  %478 = vmatpush1.msra.mxu0 %v275
  %479 = vmatprep.subr.mxu0 %v266
  %480 = vmatpush1.msra.mxu0 %v265
  %481 = vmatprep.subr.mxu0 %v256
  %482 = vmatpush1.msra.mxu0 %v255
  %483 = vmatprep.subr.mxu0 %v246
  %484 = vmatpush1.msra.mxu0 %v245
  %485 = vmatprep.subr.mxu0 %v236
  %486 = vmatpush1.msra.mxu0 %v235
  %487 = vmatprep.subr.mxu0 %v226
  %488 = vmatpush1.msra.mxu0 %v225
  %489 = vmatprep.subr.mxu0 %v216
  %490 = vmatpush1.msra.mxu0 %v215
  %491 = vmatprep.subr.mxu0 %v206
  %492 = vmatpush1.msra.mxu0 %v205
  %493 = vmatprep.subr.mxu0 %v196
  %494 = vmatpush1.msra.mxu0 %v195
  %495 = vmatprep.subr.mxu0 %v186
  %496 = vmatpush1.msra.mxu0 %v185
  %497 = vmatprep.subr.mxu0 %v176
  %498 = vmatpush1.msra.mxu0 %v175
  %499 = vmatprep.subr.mxu0 %v166
  %500 = vmatpush1.msra.mxu0 %v165
  %501 = vmatprep.subr.mxu0 %v156
  %502 = vmatpush1.msra.mxu0 %v155
  %503 = vmatprep.subr.mxu0 %v146
  %504 = vmatpush1.msra.mxu0 %v145
  %505 = vmatprep.subr.mxu0 %v136
  %506 = vmatpush1.msra.mxu0 %v135
  %507 = vmatprep.subr.mxu0 %v126
  %508 = vmatpush1.msra.mxu0 %v125
  %509 = vmatprep.subr.mxu0 0.0
  %510 = vmatpush2.msra.mxu0 0.0
  %511 = vmatprep.subr.mxu0 0.0
  %512 = vmatpush2.msra.mxu0 0.0
  %513 = vmatprep.subr.mxu0 0.0
  %514 = vmatpush2.msra.mxu0 0.0
  %515 = vmatprep.subr.mxu0 0.0
  %516 = vmatpush2.msra.mxu0 0.0
  %517 = vmatprep.subr.mxu0 0.0
  %518 = vmatpush2.msra.mxu0 0.0
  %519 = vmatprep.subr.mxu0 0.0
  %520 = vmatpush2.msra.mxu0 0.0
  %521 = vmatprep.subr.mxu0 0.0
  %522 = vmatpush2.msra.mxu0 0.0
  %523 = vmatprep.subr.mxu0 0.0
  %524 = vmatpush2.msra.mxu0 0.0
  %525 = vmatprep.subr.mxu0 0.0
  %526 = vmatpush2.msra.mxu0 0.0
  %527 = vmatprep.subr.mxu0 0.0
  %528 = vmatpush2.msra.mxu0 0.0
  %529 = vmatprep.subr.mxu0 0.0
  %530 = vmatpush2.msra.mxu0 0.0
  %531 = vmatprep.subr.mxu0 0.0
  %532 = vmatpush2.msra.mxu0 0.0
  %533 = vmatprep.subr.mxu0 0.0
  %534 = vmatpush2.msra.mxu0 0.0
  %535 = vmatprep.subr.mxu0 0.0
  %536 = vmatpush2.msra.mxu0 0.0
  %537 = vmatprep.subr.mxu0 0.0
  %538 = vmatpush2.msra.mxu0 0.0
  %539 = vmatprep.subr.mxu0 0.0
  %540 = vmatpush2.msra.mxu0 0.0
  %541 = vmatprep.mubr.f32.mxu0 0.0
  %542 = vmatmul.mubr.f32.gmra.mxu0 %v120
  %v543 = vpop.f32.mrf.mxu0
  %v544 = vadd.f32 %v304, %v543
  %v545 = vpop.f32.mrf.mxu0
  %v546 = vadd.f32 %v308, %v545
  %547 = vdwg.mxu0
  %548 = vmatprep.subr.mxu0 %v278
  %549 = vmatpush1.msra.mxu0 %v277
  %550 = vmatprep.subr.mxu0 %v268
  %551 = vmatpush1.msra.mxu0 %v267
  %552 = vmatprep.subr.mxu0 %v258
  %553 = vmatpush1.msra.mxu0 %v257
  %554 = vmatprep.subr.mxu0 %v248
  %555 = vmatpush1.msra.mxu0 %v247
  %556 = vmatprep.subr.mxu0 %v238
  %557 = vmatpush1.msra.mxu0 %v237
  %558 = vmatprep.subr.mxu0 %v228
  %559 = vmatpush1.msra.mxu0 %v227
  %560 = vmatprep.subr.mxu0 %v218
  %561 = vmatpush1.msra.mxu0 %v217
  %562 = vmatprep.subr.mxu0 %v208
  %563 = vmatpush1.msra.mxu0 %v207
  %564 = vmatprep.subr.mxu0 %v198
  %565 = vmatpush1.msra.mxu0 %v197
  %566 = vmatprep.subr.mxu0 %v188
  %567 = vmatpush1.msra.mxu0 %v187
  %568 = vmatprep.subr.mxu0 %v178
  %569 = vmatpush1.msra.mxu0 %v177
  %570 = vmatprep.subr.mxu0 %v168
  %571 = vmatpush1.msra.mxu0 %v167
  %572 = vmatprep.subr.mxu0 %v158
  %573 = vmatpush1.msra.mxu0 %v157
  %574 = vmatprep.subr.mxu0 %v148
  %575 = vmatpush1.msra.mxu0 %v147
  %576 = vmatprep.subr.mxu0 %v138
  %577 = vmatpush1.msra.mxu0 %v137
  %578 = vmatprep.subr.mxu0 %v128
  %579 = vmatpush1.msra.mxu0 %v127
  %580 = vmatprep.subr.mxu0 0.0
  %581 = vmatpush2.msra.mxu0 0.0
  %582 = vmatprep.subr.mxu0 0.0
  %583 = vmatpush2.msra.mxu0 0.0
  %584 = vmatprep.subr.mxu0 0.0
  %585 = vmatpush2.msra.mxu0 0.0
  %586 = vmatprep.subr.mxu0 0.0
  %587 = vmatpush2.msra.mxu0 0.0
  %588 = vmatprep.subr.mxu0 0.0
  %589 = vmatpush2.msra.mxu0 0.0
  %590 = vmatprep.subr.mxu0 0.0
  %591 = vmatpush2.msra.mxu0 0.0
  %592 = vmatprep.subr.mxu0 0.0
  %593 = vmatpush2.msra.mxu0 0.0
  %594 = vmatprep.subr.mxu0 0.0
  %595 = vmatpush2.msra.mxu0 0.0
  %596 = vmatprep.subr.mxu0 0.0
  %597 = vmatpush2.msra.mxu0 0.0
  %598 = vmatprep.subr.mxu0 0.0
  %599 = vmatpush2.msra.mxu0 0.0
  %600 = vmatprep.subr.mxu0 0.0
  %601 = vmatpush2.msra.mxu0 0.0
  %602 = vmatprep.subr.mxu0 0.0
  %603 = vmatpush2.msra.mxu0 0.0
  %604 = vmatprep.subr.mxu0 0.0
  %605 = vmatpush2.msra.mxu0 0.0
  %606 = vmatprep.subr.mxu0 0.0
  %607 = vmatpush2.msra.mxu0 0.0
  %608 = vmatprep.subr.mxu0 0.0
  %609 = vmatpush2.msra.mxu0 0.0
  %610 = vmatprep.subr.mxu0 0.0
  %611 = vmatpush2.msra.mxu0 0.0
  %612 = vmatprep.mubr.f32.mxu0 0.0
  %613 = vmatmul.mubr.f32.gmra.mxu0 %v120
  %v614 = vpop.f32.mrf.mxu0
  %v615 = vadd.f32 %v312, %v614
  %v616 = vpop.f32.mrf.mxu0
  %v617 = vadd.f32 %v316, %v616
  %618 = vdwg.mxu0
  %619 = vmatprep.subr.mxu0 %v280
  %620 = vmatpush1.msra.mxu0 %v279
  %621 = vmatprep.subr.mxu0 %v270
  %622 = vmatpush1.msra.mxu0 %v269
  %623 = vmatprep.subr.mxu0 %v260
  %624 = vmatpush1.msra.mxu0 %v259
  %625 = vmatprep.subr.mxu0 %v250
  %626 = vmatpush1.msra.mxu0 %v249
  %627 = vmatprep.subr.mxu0 %v240
  %628 = vmatpush1.msra.mxu0 %v239
  %629 = vmatprep.subr.mxu0 %v230
  %630 = vmatpush1.msra.mxu0 %v229
  %631 = vmatprep.subr.mxu0 %v220
  %632 = vmatpush1.msra.mxu0 %v219
  %633 = vmatprep.subr.mxu0 %v210
  %634 = vmatpush1.msra.mxu0 %v209
  %635 = vmatprep.subr.mxu0 %v200
  %636 = vmatpush1.msra.mxu0 %v199
  %637 = vmatprep.subr.mxu0 %v190
  %638 = vmatpush1.msra.mxu0 %v189
  %639 = vmatprep.subr.mxu0 %v180
  %640 = vmatpush1.msra.mxu0 %v179
  %641 = vmatprep.subr.mxu0 %v170
  %642 = vmatpush1.msra.mxu0 %v169
  %643 = vmatprep.subr.mxu0 %v160
  %644 = vmatpush1.msra.mxu0 %v159
  %645 = vmatprep.subr.mxu0 %v150
  %646 = vmatpush1.msra.mxu0 %v149
  %647 = vmatprep.subr.mxu0 %v140
  %648 = vmatpush1.msra.mxu0 %v139
  %649 = vmatprep.subr.mxu0 %v130
  %650 = vmatpush1.msra.mxu0 %v129
  %651 = vmatprep.subr.mxu0 0.0
  %652 = vmatpush2.msra.mxu0 0.0
  %653 = vmatprep.subr.mxu0 0.0
  %654 = vmatpush2.msra.mxu0 0.0
  %655 = vmatprep.subr.mxu0 0.0
  %656 = vmatpush2.msra.mxu0 0.0
  %657 = vmatprep.subr.mxu0 0.0
  %658 = vmatpush2.msra.mxu0 0.0
  %659 = vmatprep.subr.mxu0 0.0
  %660 = vmatpush2.msra.mxu0 0.0
  %661 = vmatprep.subr.mxu0 0.0
  %662 = vmatpush2.msra.mxu0 0.0
  %663 = vmatprep.subr.mxu0 0.0
  %664 = vmatpush2.msra.mxu0 0.0
  %665 = vmatprep.subr.mxu0 0.0
  %666 = vmatpush2.msra.mxu0 0.0
  %667 = vmatprep.subr.mxu0 0.0
  %668 = vmatpush2.msra.mxu0 0.0
  %669 = vmatprep.subr.mxu0 0.0
  %670 = vmatpush2.msra.mxu0 0.0
  %671 = vmatprep.subr.mxu0 0.0
  %672 = vmatpush2.msra.mxu0 0.0
  %673 = vmatprep.subr.mxu0 0.0
  %674 = vmatpush2.msra.mxu0 0.0
  %675 = vmatprep.subr.mxu0 0.0
  %676 = vmatpush2.msra.mxu0 0.0
  %677 = vmatprep.subr.mxu0 0.0
  %678 = vmatpush2.msra.mxu0 0.0
  %679 = vmatprep.subr.mxu0 0.0
  %680 = vmatpush2.msra.mxu0 0.0
  %681 = vmatprep.subr.mxu0 0.0
  %682 = vmatpush2.msra.mxu0 0.0
  %683 = vmatprep.mubr.f32.mxu0 0.0
  %684 = vmatmul.mubr.f32.gmra.mxu0 %v120
  %v685 = vpop.f32.mrf.mxu0
  %v686 = vadd.f32 %v320, %v685
  %v687 = vpop.f32.mrf.mxu0
  %v688 = vadd.f32 %v324, %v687
  %689 = vdwg.mxu0
  %v690 = vmax.f32 %v402, 0.0
  %v691 = vmax.f32 %v404, 0.0
  %v692 = vmax.f32 %v473, 0.0
  %v693 = vmax.f32 %v475, 0.0
  %v694 = vmax.f32 %v544, 0.0
  %v695 = vmax.f32 %v546, 0.0
  %v696 = vmax.f32 %v615, 0.0
  %v697 = vmax.f32 %v617, 0.0
  %v698 = vmax.f32 %v686, 0.0
  %v699 = vmax.f32 %v688, 0.0
  %v702 = vrot.slane %v692, 7
  %v703 = vrot.slane %v693, 7
  %v708 = vrot.slane %v694, 6
  %v709 = vrot.slane %v695, 6
  %v714 = vrot.slane %v696, 5
  %v715 = vrot.slane %v697, 5
  %v720 = vrot.slane %v698, 4
  %v721 = vrot.slane %v699, 4
  %vm724 = vcmask 1040384
  %v725 = vsel %vm724, %v690, %v702
  %v726 = vsel %vm724, %v691, %v703
  %v727 = vsel %vm46, %v725, %v708
  %v728 = vsel %vm46, %v726, %v709
  %vm729 = vcmask 1042432
  %v730 = vsel %vm729, %v727, %v714
  %v731 = vsel %vm729, %v728, %v715
  %vm732 = vcmask 1043456
  %v733 = vsel %vm732, %v730, %v720
  %v734 = vsel %vm732, %v731, %v721
  %vm735 = vcmask 1044480
  %v736 = vsel %vm735, %v733, 1.0
  %v737 = vsel %vm735, %v734, 1.0
  %vm738 = vcmask 1045504
  %v739 = vsel %vm738, %v736, 0.0
  %v740 = vsel %vm738, %v737, 0.0
  %v743 = vrot.slane %v690, 1
  %v744 = vrot.slane %v691, 1
  %v747 = vrot.slane %v694, 7
  %v748 = vrot.slane %v695, 7
  %v751 = vrot.slane %v696, 6
  %v752 = vrot.slane %v697, 6
  %v755 = vrot.slane %v698, 5
  %v756 = vrot.slane %v699, 5
  %v759 = vsel %vm724, %v743, %v692
  %v760 = vsel %vm724, %v744, %v693
  %v761 = vsel %vm46, %v759, %v747
  %v762 = vsel %vm46, %v760, %v748
  %v763 = vsel %vm729, %v761, %v751
  %v764 = vsel %vm729, %v762, %v752
  %v765 = vsel %vm732, %v763, %v755
  %v766 = vsel %vm732, %v764, %v756
  %v767 = vsel %vm735, %v765, 1.0
  %v768 = vsel %vm735, %v766, 1.0
  %v769 = vsel %vm738, %v767, 0.0
  %v770 = vsel %vm738, %v768, 0.0
  %771 = vrot.lane.b32.xlu0 %v739, 34
  %v772 = vpop.permute.xlu0 %771
  %773 = vrot.lane.b32.xlu0 %v740, 34
  %v774 = vpop.permute.xlu0 %773
  %775 = vrot.lane.b32.xlu0 %v769, 34
  %v776 = vpop.permute.xlu0 %775
  %777 = vrot.lane.b32.xlu0 %v770, 34
  %v778 = vpop.permute.xlu0 %777
  %v779 = vlaneseq
  %v780 = vand.u32 %v779, 127
  %vm781 = vcmp.lt.s32.totalorder %v780, 34
  %v782 = vsel %vm781, %v776, %v778
  %v783 = vsel %vm781, %v774, %v776
  %v784 = vsel %vm781, %v772, %v774
  %v785 = vsel %vm781, %v778, %v772
  %v786 = vld [vmem:[%s7] ss:$8 sm:$0xf]
  %v788 = vlaneseq
  %v789 = vshrl.u32 %v788, 7
  %v790 = vsub.s32 0, %v789
  %v791 = vrot.slane %v786, %v790
  %v792 = vlaneseq
  %v793 = vshrl.u32 %v792, 7
  %v794 = vsub.s32 1, %v793
  %v795 = vrot.slane %v786, %v794
  %v796 = vlaneseq
  %v797 = vshrl.u32 %v796, 7
  %v798 = vsub.s32 2, %v797
  %v799 = vrot.slane %v786, %v798
  %v800 = vlaneseq
  %v801 = vshrl.u32 %v800, 7
  %v802 = vsub.s32 3, %v801
  %v803 = vrot.slane %v786, %v802
  %v808 = vmul.f32 %v785, %v791
  %v809 = vmul.f32 %v784, %v795
  %v810 = vmul.f32 %v783, %v799
  %v811 = vmul.f32 %v782, %v803
  %812 = vst [vmem:[#allocation2] sm:$0xff] %v808
  %813 = vst [vmem:[#allocation2 + $0x8] sm:$0xff] %v809
  %814 = vst [vmem:[#allocation2 + $0x10] sm:$0xff] %v810
  %815 = vst [vmem:[#allocation2 + $0x18] sm:$0xff] %v811
  %816 = vrot.lane.b32.xlu0 %v739, 33
  %v817 = vpop.permute.xlu0 %816
  %818 = vrot.lane.b32.xlu0 %v740, 33
  %v819 = vpop.permute.xlu0 %818
  %820 = vrot.lane.b32.xlu0 %v769, 33
  %v821 = vpop.permute.xlu0 %820
  %822 = vrot.lane.b32.xlu0 %v770, 33
  %v823 = vpop.permute.xlu0 %822
  %vm824 = vcmp.lt.s32.totalorder %v780, 33
  %v825 = vsel %vm824, %v821, %v823
  %v826 = vsel %vm824, %v819, %v821
  %v827 = vsel %vm824, %v817, %v819
  %v828 = vsel %vm824, %v823, %v817
  %s829 = scalar_lea.vmem %s7, 1
  %v830 = vld [vmem:[%s829] ss:$8 sm:$0xf]
  %v832 = vlaneseq
  %v833 = vshrl.u32 %v832, 7
  %v834 = vsub.s32 0, %v833
  %v835 = vrot.slane %v830, %v834
  %v836 = vlaneseq
  %v837 = vshrl.u32 %v836, 7
  %v838 = vsub.s32 1, %v837
  %v839 = vrot.slane %v830, %v838
  %v840 = vlaneseq
  %v841 = vshrl.u32 %v840, 7
  %v842 = vsub.s32 2, %v841
  %v843 = vrot.slane %v830, %v842
  %v844 = vlaneseq
  %v845 = vshrl.u32 %v844, 7
  %v846 = vsub.s32 3, %v845
  %v847 = vrot.slane %v830, %v846
  %v852 = vmul.f32 %v828, %v835
  %v853 = vmul.f32 %v827, %v839
  %v854 = vmul.f32 %v826, %v843
  %v855 = vmul.f32 %v825, %v847
  %856 = vst [vmem:[#allocation2 + $0x20] sm:$0xff] %v852
  %857 = vst [vmem:[#allocation2 + $0x28] sm:$0xff] %v853
  %858 = vst [vmem:[#allocation2 + $0x30] sm:$0xff] %v854
  %859 = vst [vmem:[#allocation2 + $0x38] sm:$0xff] %v855
  %860 = vrot.lane.b32.xlu0 %v739, 32
  %v861 = vpop.permute.xlu0 %860
  %862 = vrot.lane.b32.xlu0 %v740, 32
  %v863 = vpop.permute.xlu0 %862
  %864 = vrot.lane.b32.xlu0 %v769, 32
  %v865 = vpop.permute.xlu0 %864
  %866 = vrot.lane.b32.xlu0 %v770, 32
  %v867 = vpop.permute.xlu0 %866
  %vm868 = vcmp.lt.s32.totalorder %v780, 32
  %v869 = vsel %vm868, %v865, %v867
  %v870 = vsel %vm868, %v863, %v865
  %v871 = vsel %vm868, %v861, %v863
  %v872 = vsel %vm868, %v867, %v861
  %s873 = scalar_lea.vmem %s7, 2
  %v874 = vld [vmem:[%s873] ss:$8 sm:$0xf]
  %v876 = vlaneseq
  %v877 = vshrl.u32 %v876, 7
  %v878 = vsub.s32 0, %v877
  %v879 = vrot.slane %v874, %v878
  %v880 = vlaneseq
  %v881 = vshrl.u32 %v880, 7
  %v882 = vsub.s32 1, %v881
  %v883 = vrot.slane %v874, %v882
  %v884 = vlaneseq
  %v885 = vshrl.u32 %v884, 7
  %v886 = vsub.s32 2, %v885
  %v887 = vrot.slane %v874, %v886
  %v888 = vlaneseq
  %v889 = vshrl.u32 %v888, 7
  %v890 = vsub.s32 3, %v889
  %v891 = vrot.slane %v874, %v890
  %v896 = vmul.f32 %v872, %v879
  %v897 = vmul.f32 %v871, %v883
  %v898 = vmul.f32 %v870, %v887
  %v899 = vmul.f32 %v869, %v891
  %900 = vst [vmem:[#allocation2 + $0x40] sm:$0xff] %v896
  %901 = vst [vmem:[#allocation2 + $0x48] sm:$0xff] %v897
  %902 = vst [vmem:[#allocation2 + $0x50] sm:$0xff] %v898
  %903 = vst [vmem:[#allocation2 + $0x58] sm:$0xff] %v899
  %904 = vrot.lane.b32.xlu0 %v739, 31
  %v905 = vpop.permute.xlu0 %904
  %906 = vrot.lane.b32.xlu0 %v740, 31
  %v907 = vpop.permute.xlu0 %906
  %908 = vrot.lane.b32.xlu0 %v769, 31
  %v909 = vpop.permute.xlu0 %908
  %910 = vrot.lane.b32.xlu0 %v770, 31
  %v911 = vpop.permute.xlu0 %910
  %vm912 = vcmp.lt.s32.totalorder %v780, 31
  %v913 = vsel %vm912, %v909, %v911
  %v914 = vsel %vm912, %v907, %v909
  %v915 = vsel %vm912, %v905, %v907
  %v916 = vsel %vm912, %v911, %v905
  %s917 = scalar_lea.vmem %s7, 3
  %v918 = vld [vmem:[%s917] ss:$8 sm:$0xf]
  %v920 = vlaneseq
  %v921 = vshrl.u32 %v920, 7
  %v922 = vsub.s32 0, %v921
  %v923 = vrot.slane %v918, %v922
  %v924 = vlaneseq
  %v925 = vshrl.u32 %v924, 7
  %v926 = vsub.s32 1, %v925
  %v927 = vrot.slane %v918, %v926
  %v928 = vlaneseq
  %v929 = vshrl.u32 %v928, 7
  %v930 = vsub.s32 2, %v929
  %v931 = vrot.slane %v918, %v930
  %v932 = vlaneseq
  %v933 = vshrl.u32 %v932, 7
  %v934 = vsub.s32 3, %v933
  %v935 = vrot.slane %v918, %v934
  %v940 = vmul.f32 %v916, %v923
  %v941 = vmul.f32 %v915, %v927
  %v942 = vmul.f32 %v914, %v931
  %v943 = vmul.f32 %v913, %v935
  %944 = vst [vmem:[#allocation2 + $0x60] sm:$0xff] %v940
  %945 = vst [vmem:[#allocation2 + $0x68] sm:$0xff] %v941
  %946 = vst [vmem:[#allocation2 + $0x70] sm:$0xff] %v942
  %947 = vst [vmem:[#allocation2 + $0x78] sm:$0xff] %v943
  %948 = vrot.lane.b32.xlu0 %v739, 30
  %v949 = vpop.permute.xlu0 %948
  %950 = vrot.lane.b32.xlu0 %v740, 30
  %v951 = vpop.permute.xlu0 %950
  %952 = vrot.lane.b32.xlu0 %v769, 30
  %v953 = vpop.permute.xlu0 %952
  %954 = vrot.lane.b32.xlu0 %v770, 30
  %v955 = vpop.permute.xlu0 %954
  %vm956 = vcmp.lt.s32.totalorder %v780, 30
  %v957 = vsel %vm956, %v953, %v955
  %v958 = vsel %vm956, %v951, %v953
  %v959 = vsel %vm956, %v949, %v951
  %v960 = vsel %vm956, %v955, %v949
  %s961 = scalar_lea.vmem %s7, 4
  %v962 = vld [vmem:[%s961] ss:$8 sm:$0xf]
  %v964 = vlaneseq
  %v965 = vshrl.u32 %v964, 7
  %v966 = vsub.s32 0, %v965
  %v967 = vrot.slane %v962, %v966
  %v968 = vlaneseq
  %v969 = vshrl.u32 %v968, 7
  %v970 = vsub.s32 1, %v969
  %v971 = vrot.slane %v962, %v970
  %v972 = vlaneseq
  %v973 = vshrl.u32 %v972, 7
  %v974 = vsub.s32 2, %v973
  %v975 = vrot.slane %v962, %v974
  %v976 = vlaneseq
  %v977 = vshrl.u32 %v976, 7
  %v978 = vsub.s32 3, %v977
  %v979 = vrot.slane %v962, %v978
  %v984 = vmul.f32 %v960, %v967
  %v985 = vmul.f32 %v959, %v971
  %v986 = vmul.f32 %v958, %v975
  %v987 = vmul.f32 %v957, %v979
  %988 = vst [vmem:[#allocation2 + $0x80] sm:$0xff] %v984
  %989 = vst [vmem:[#allocation2 + $0x88] sm:$0xff] %v985
  %990 = vst [vmem:[#allocation2 + $0x90] sm:$0xff] %v986
  %991 = vst [vmem:[#allocation2 + $0x98] sm:$0xff] %v987
  %992 = vrot.lane.b32.xlu0 %v739, 18
  %v993 = vpop.permute.xlu0 %992
  %994 = vrot.lane.b32.xlu0 %v740, 18
  %v995 = vpop.permute.xlu0 %994
  %996 = vrot.lane.b32.xlu0 %v769, 18
  %v997 = vpop.permute.xlu0 %996
  %998 = vrot.lane.b32.xlu0 %v770, 18
  %v999 = vpop.permute.xlu0 %998
  %vm1000 = vcmp.lt.s32.totalorder %v780, 18
  %v1001 = vsel %vm1000, %v997, %v999
  %v1002 = vsel %vm1000, %v995, %v997
  %v1003 = vsel %vm1000, %v993, %v995
  %v1004 = vsel %vm1000, %v999, %v993
  %s1005 = scalar_lea.vmem %s7, 5
  %v1006 = vld [vmem:[%s1005] ss:$8 sm:$0xf]
  %v1008 = vlaneseq
  %v1009 = vshrl.u32 %v1008, 7
  %v1010 = vsub.s32 0, %v1009
  %v1011 = vrot.slane %v1006, %v1010
  %v1012 = vlaneseq
  %v1013 = vshrl.u32 %v1012, 7
  %v1014 = vsub.s32 1, %v1013
  %v1015 = vrot.slane %v1006, %v1014
  %v1016 = vlaneseq
  %v1017 = vshrl.u32 %v1016, 7
  %v1018 = vsub.s32 2, %v1017
  %v1019 = vrot.slane %v1006, %v1018
  %v1020 = vlaneseq
  %v1021 = vshrl.u32 %v1020, 7
  %v1022 = vsub.s32 3, %v1021
  %v1023 = vrot.slane %v1006, %v1022
  %v1028 = vmul.f32 %v1004, %v1011
  %v1029 = vmul.f32 %v1003, %v1015
  %v1030 = vmul.f32 %v1002, %v1019
  %v1031 = vmul.f32 %v1001, %v1023
  %1032 = vst [vmem:[#allocation2 + $0xa0] sm:$0xff] %v1028
  %1033 = vst [vmem:[#allocation2 + $0xa8] sm:$0xff] %v1029
  %1034 = vst [vmem:[#allocation2 + $0xb0] sm:$0xff] %v1030
  %1035 = vst [vmem:[#allocation2 + $0xb8] sm:$0xff] %v1031
  %1036 = vrot.lane.b32.xlu0 %v739, 17
  %v1037 = vpop.permute.xlu0 %1036
  %1038 = vrot.lane.b32.xlu0 %v740, 17
  %v1039 = vpop.permute.xlu0 %1038
  %1040 = vrot.lane.b32.xlu0 %v769, 17
  %v1041 = vpop.permute.xlu0 %1040
  %1042 = vrot.lane.b32.xlu0 %v770, 17
  %v1043 = vpop.permute.xlu0 %1042
  %vm1044 = vcmp.lt.s32.totalorder %v780, 17
  %v1045 = vsel %vm1044, %v1041, %v1043
  %v1046 = vsel %vm1044, %v1039, %v1041
  %v1047 = vsel %vm1044, %v1037, %v1039
  %v1048 = vsel %vm1044, %v1043, %v1037
  %s1049 = scalar_lea.vmem %s7, 6
  %v1050 = vld [vmem:[%s1049] ss:$8 sm:$0xf]
  %v1052 = vlaneseq
  %v1053 = vshrl.u32 %v1052, 7
  %v1054 = vsub.s32 0, %v1053
  %v1055 = vrot.slane %v1050, %v1054
  %v1056 = vlaneseq
  %v1057 = vshrl.u32 %v1056, 7
  %v1058 = vsub.s32 1, %v1057
  %v1059 = vrot.slane %v1050, %v1058
  %v1060 = vlaneseq
  %v1061 = vshrl.u32 %v1060, 7
  %v1062 = vsub.s32 2, %v1061
  %v1063 = vrot.slane %v1050, %v1062
  %v1064 = vlaneseq
  %v1065 = vshrl.u32 %v1064, 7
  %v1066 = vsub.s32 3, %v1065
  %v1067 = vrot.slane %v1050, %v1066
  %v1072 = vmul.f32 %v1048, %v1055
  %v1073 = vmul.f32 %v1047, %v1059
  %v1074 = vmul.f32 %v1046, %v1063
  %v1075 = vmul.f32 %v1045, %v1067
  %1076 = vst [vmem:[#allocation2 + $0xc0] sm:$0xff] %v1072
  %1077 = vst [vmem:[#allocation2 + $0xc8] sm:$0xff] %v1073
  %1078 = vst [vmem:[#allocation2 + $0xd0] sm:$0xff] %v1074
  %1079 = vst [vmem:[#allocation2 + $0xd8] sm:$0xff] %v1075
  %1080 = vrot.lane.b32.xlu0 %v739, 16
  %v1081 = vpop.permute.xlu0 %1080
  %1082 = vrot.lane.b32.xlu0 %v740, 16
  %v1083 = vpop.permute.xlu0 %1082
  %1084 = vrot.lane.b32.xlu0 %v769, 16
  %v1085 = vpop.permute.xlu0 %1084
  %1086 = vrot.lane.b32.xlu0 %v770, 16
  %v1087 = vpop.permute.xlu0 %1086
  %vm1088 = vcmp.lt.s32.totalorder %v780, 16
  %v1089 = vsel %vm1088, %v1085, %v1087
  %v1090 = vsel %vm1088, %v1083, %v1085
  %v1091 = vsel %vm1088, %v1081, %v1083
  %v1092 = vsel %vm1088, %v1087, %v1081
  %s1093 = scalar_lea.vmem %s7, 7
  %v1094 = vld [vmem:[%s1093] ss:$8 sm:$0xf]
  %v1096 = vlaneseq
  %v1097 = vshrl.u32 %v1096, 7
  %v1098 = vsub.s32 0, %v1097
  %v1099 = vrot.slane %v1094, %v1098
  %v1100 = vlaneseq
  %v1101 = vshrl.u32 %v1100, 7
  %v1102 = vsub.s32 1, %v1101
  %v1103 = vrot.slane %v1094, %v1102
  %v1104 = vlaneseq
  %v1105 = vshrl.u32 %v1104, 7
  %v1106 = vsub.s32 2, %v1105
  %v1107 = vrot.slane %v1094, %v1106
  %v1108 = vlaneseq
  %v1109 = vshrl.u32 %v1108, 7
  %v1110 = vsub.s32 3, %v1109
  %v1111 = vrot.slane %v1094, %v1110
  %v1116 = vmul.f32 %v1092, %v1099
  %v1117 = vmul.f32 %v1091, %v1103
  %v1118 = vmul.f32 %v1090, %v1107
  %v1119 = vmul.f32 %v1089, %v1111
  %1120 = vst [vmem:[#allocation2 + $0xe0] sm:$0xff] %v1116
  %1121 = vst [vmem:[#allocation2 + $0xe8] sm:$0xff] %v1117
  %1122 = vst [vmem:[#allocation2 + $0xf0] sm:$0xff] %v1118
  %1123 = vst [vmem:[#allocation2 + $0xf8] sm:$0xff] %v1119
  %1124 = vrot.lane.b32.xlu0 %v739, 15
  %v1125 = vpop.permute.xlu0 %1124
  %1126 = vrot.lane.b32.xlu0 %v740, 15
  %v1127 = vpop.permute.xlu0 %1126
  %1128 = vrot.lane.b32.xlu0 %v769, 15
  %v1129 = vpop.permute.xlu0 %1128
  %1130 = vrot.lane.b32.xlu0 %v770, 15
  %v1131 = vpop.permute.xlu0 %1130
  %vm1132 = vcmp.lt.s32.totalorder %v780, 15
  %v1133 = vsel %vm1132, %v1129, %v1131
  %v1134 = vsel %vm1132, %v1127, %v1129
  %v1135 = vsel %vm1132, %v1125, %v1127
  %v1136 = vsel %vm1132, %v1131, %v1125
  %s1137 = scalar_lea.vmem %s7, 32
  %v1138 = vld [vmem:[%s1137] ss:$8 sm:$0xf]
  %v1140 = vlaneseq
  %v1141 = vshrl.u32 %v1140, 7
  %v1142 = vsub.s32 0, %v1141
  %v1143 = vrot.slane %v1138, %v1142
  %v1144 = vlaneseq
  %v1145 = vshrl.u32 %v1144, 7
  %v1146 = vsub.s32 1, %v1145
  %v1147 = vrot.slane %v1138, %v1146
  %v1148 = vlaneseq
  %v1149 = vshrl.u32 %v1148, 7
  %v1150 = vsub.s32 2, %v1149
  %v1151 = vrot.slane %v1138, %v1150
  %v1152 = vlaneseq
  %v1153 = vshrl.u32 %v1152, 7
  %v1154 = vsub.s32 3, %v1153
  %v1155 = vrot.slane %v1138, %v1154
  %v1160 = vmul.f32 %v1136, %v1143
  %v1161 = vmul.f32 %v1135, %v1147
  %v1162 = vmul.f32 %v1134, %v1151
  %v1163 = vmul.f32 %v1133, %v1155
  %1164 = vst [vmem:[#allocation2 + $0x100] sm:$0xff] %v1160
  %1165 = vst [vmem:[#allocation2 + $0x108] sm:$0xff] %v1161
  %1166 = vst [vmem:[#allocation2 + $0x110] sm:$0xff] %v1162
  %1167 = vst [vmem:[#allocation2 + $0x118] sm:$0xff] %v1163
  %1168 = vrot.lane.b32.xlu0 %v739, 14
  %v1169 = vpop.permute.xlu0 %1168
  %1170 = vrot.lane.b32.xlu0 %v740, 14
  %v1171 = vpop.permute.xlu0 %1170
  %1172 = vrot.lane.b32.xlu0 %v769, 14
  %v1173 = vpop.permute.xlu0 %1172
  %1174 = vrot.lane.b32.xlu0 %v770, 14
  %v1175 = vpop.permute.xlu0 %1174
  %vm1176 = vcmp.lt.s32.totalorder %v780, 14
  %v1177 = vsel %vm1176, %v1173, %v1175
  %v1178 = vsel %vm1176, %v1171, %v1173
  %v1179 = vsel %vm1176, %v1169, %v1171
  %v1180 = vsel %vm1176, %v1175, %v1169
  %s1181 = scalar_lea.vmem %s7, 33
  %v1182 = vld [vmem:[%s1181] ss:$8 sm:$0xf]
  %v1184 = vlaneseq
  %v1185 = vshrl.u32 %v1184, 7
  %v1186 = vsub.s32 0, %v1185
  %v1187 = vrot.slane %v1182, %v1186
  %v1188 = vlaneseq
  %v1189 = vshrl.u32 %v1188, 7
  %v1190 = vsub.s32 1, %v1189
  %v1191 = vrot.slane %v1182, %v1190
  %v1192 = vlaneseq
  %v1193 = vshrl.u32 %v1192, 7
  %v1194 = vsub.s32 2, %v1193
  %v1195 = vrot.slane %v1182, %v1194
  %v1196 = vlaneseq
  %v1197 = vshrl.u32 %v1196, 7
  %v1198 = vsub.s32 3, %v1197
  %v1199 = vrot.slane %v1182, %v1198
  %v1204 = vmul.f32 %v1180, %v1187
  %v1205 = vmul.f32 %v1179, %v1191
  %v1206 = vmul.f32 %v1178, %v1195
  %v1207 = vmul.f32 %v1177, %v1199
  %1208 = vst [vmem:[#allocation2 + $0x120] sm:$0xff] %v1204
  %1209 = vst [vmem:[#allocation2 + $0x128] sm:$0xff] %v1205
  %1210 = vst [vmem:[#allocation2 + $0x130] sm:$0xff] %v1206
  %1211 = vst [vmem:[#allocation2 + $0x138] sm:$0xff] %v1207
  %1212 = vrot.lane.b32.xlu0 %v739, 2
  %v1213 = vpop.permute.xlu0 %1212
  %1214 = vrot.lane.b32.xlu0 %v740, 2
  %v1215 = vpop.permute.xlu0 %1214
  %1216 = vrot.lane.b32.xlu0 %v769, 2
  %v1217 = vpop.permute.xlu0 %1216
  %1218 = vrot.lane.b32.xlu0 %v770, 2
  %v1219 = vpop.permute.xlu0 %1218
  %vm1220 = vcmp.lt.s32.totalorder %v780, 2
  %v1221 = vsel %vm1220, %v1217, %v1219
  %v1222 = vsel %vm1220, %v1215, %v1217
  %v1223 = vsel %vm1220, %v1213, %v1215
  %v1224 = vsel %vm1220, %v1219, %v1213
  %s1225 = scalar_lea.vmem %s7, 34
  %v1226 = vld [vmem:[%s1225] ss:$8 sm:$0xf]
  %v1228 = vlaneseq
  %v1229 = vshrl.u32 %v1228, 7
  %v1230 = vsub.s32 0, %v1229
  %v1231 = vrot.slane %v1226, %v1230
  %v1232 = vlaneseq
  %v1233 = vshrl.u32 %v1232, 7
  %v1234 = vsub.s32 1, %v1233
  %v1235 = vrot.slane %v1226, %v1234
  %v1236 = vlaneseq
  %v1237 = vshrl.u32 %v1236, 7
  %v1238 = vsub.s32 2, %v1237
  %v1239 = vrot.slane %v1226, %v1238
  %v1240 = vlaneseq
  %v1241 = vshrl.u32 %v1240, 7
  %v1242 = vsub.s32 3, %v1241
  %v1243 = vrot.slane %v1226, %v1242
  %v1248 = vmul.f32 %v1224, %v1231
  %v1249 = vmul.f32 %v1223, %v1235
  %v1250 = vmul.f32 %v1222, %v1239
  %v1251 = vmul.f32 %v1221, %v1243
  %1252 = vst [vmem:[#allocation2 + $0x140] sm:$0xff] %v1248
  %1253 = vst [vmem:[#allocation2 + $0x148] sm:$0xff] %v1249
  %1254 = vst [vmem:[#allocation2 + $0x150] sm:$0xff] %v1250
  %1255 = vst [vmem:[#allocation2 + $0x158] sm:$0xff] %v1251
  %1256 = vrot.lane.b32.xlu0 %v739, 1
  %v1257 = vpop.permute.xlu0 %1256
  %1258 = vrot.lane.b32.xlu0 %v740, 1
  %v1259 = vpop.permute.xlu0 %1258
  %1260 = vrot.lane.b32.xlu0 %v769, 1
  %v1261 = vpop.permute.xlu0 %1260
  %1262 = vrot.lane.b32.xlu0 %v770, 1
  %v1263 = vpop.permute.xlu0 %1262
  %vm1264 = vcmp.lt.s32.totalorder %v780, 1
  %v1265 = vsel %vm1264, %v1261, %v1263
  %v1266 = vsel %vm1264, %v1259, %v1261
  %v1267 = vsel %vm1264, %v1257, %v1259
  %v1268 = vsel %vm1264, %v1263, %v1257
  %s1269 = scalar_lea.vmem %s7, 35
  %v1270 = vld [vmem:[%s1269] ss:$8 sm:$0xf]
  %v1272 = vlaneseq
  %v1273 = vshrl.u32 %v1272, 7
  %v1274 = vsub.s32 0, %v1273
  %v1275 = vrot.slane %v1270, %v1274
  %v1276 = vlaneseq
  %v1277 = vshrl.u32 %v1276, 7
  %v1278 = vsub.s32 1, %v1277
  %v1279 = vrot.slane %v1270, %v1278
  %v1280 = vlaneseq
  %v1281 = vshrl.u32 %v1280, 7
  %v1282 = vsub.s32 2, %v1281
  %v1283 = vrot.slane %v1270, %v1282
  %v1284 = vlaneseq
  %v1285 = vshrl.u32 %v1284, 7
  %v1286 = vsub.s32 3, %v1285
  %v1287 = vrot.slane %v1270, %v1286
  %v1292 = vmul.f32 %v1268, %v1275
  %v1293 = vmul.f32 %v1267, %v1279
  %v1294 = vmul.f32 %v1266, %v1283
  %v1295 = vmul.f32 %v1265, %v1287
  %1296 = vst [vmem:[#allocation2 + $0x160] sm:$0xff] %v1292
  %1297 = vst [vmem:[#allocation2 + $0x168] sm:$0xff] %v1293
  %1298 = vst [vmem:[#allocation2 + $0x170] sm:$0xff] %v1294
  %1299 = vst [vmem:[#allocation2 + $0x178] sm:$0xff] %v1295
  %s1300 = scalar_lea.vmem %s7, 36
  %v1301 = vld [vmem:[%s1300] ss:$8 sm:$0xf]
  %v1303 = vlaneseq
  %v1304 = vshrl.u32 %v1303, 7
  %v1305 = vsub.s32 0, %v1304
  %v1306 = vrot.slane %v1301, %v1305
  %v1307 = vlaneseq
  %v1308 = vshrl.u32 %v1307, 7
  %v1309 = vsub.s32 1, %v1308
  %v1310 = vrot.slane %v1301, %v1309
  %v1311 = vlaneseq
  %v1312 = vshrl.u32 %v1311, 7
  %v1313 = vsub.s32 2, %v1312
  %v1314 = vrot.slane %v1301, %v1313
  %v1315 = vlaneseq
  %v1316 = vshrl.u32 %v1315, 7
  %v1317 = vsub.s32 3, %v1316
  %v1318 = vrot.slane %v1301, %v1317
  %v1323 = vmul.f32 %v739, %v1306
  %v1324 = vmul.f32 %v740, %v1310
  %v1325 = vmul.f32 %v769, %v1314
  %v1326 = vmul.f32 %v770, %v1318
  %1327 = vst [vmem:[#allocation2 + $0x180] sm:$0xff] %v1323
  %1328 = vst [vmem:[#allocation2 + $0x188] sm:$0xff] %v1324
  %1329 = vst [vmem:[#allocation2 + $0x190] sm:$0xff] %v1325
  %1330 = vst [vmem:[#allocation2 + $0x198] sm:$0xff] %v1326
  %1331 = vrot.lane.b32.xlu0 %v739, 127
  %v1332 = vpop.permute.xlu0 %1331
  %1333 = vrot.lane.b32.xlu0 %v740, 127
  %v1334 = vpop.permute.xlu0 %1333
  %1335 = vrot.lane.b32.xlu0 %v769, 127
  %v1336 = vpop.permute.xlu0 %1335
  %1337 = vrot.lane.b32.xlu0 %v770, 127
  %v1338 = vpop.permute.xlu0 %1337
  %vm1339 = vcmp.lt.s32.totalorder %v780, 127
  %v1340 = vsel %vm1339, %v1336, %v1338
  %v1341 = vsel %vm1339, %v1334, %v1336
  %v1342 = vsel %vm1339, %v1332, %v1334
  %v1343 = vsel %vm1339, %v1338, %v1332
  %s1344 = scalar_lea.vmem %s7, 37
  %v1345 = vld [vmem:[%s1344] ss:$8 sm:$0xf]
  %v1347 = vlaneseq
  %v1348 = vshrl.u32 %v1347, 7
  %v1349 = vsub.s32 0, %v1348
  %v1350 = vrot.slane %v1345, %v1349
  %v1351 = vlaneseq
  %v1352 = vshrl.u32 %v1351, 7
  %v1353 = vsub.s32 1, %v1352
  %v1354 = vrot.slane %v1345, %v1353
  %v1355 = vlaneseq
  %v1356 = vshrl.u32 %v1355, 7
  %v1357 = vsub.s32 2, %v1356
  %v1358 = vrot.slane %v1345, %v1357
  %v1359 = vlaneseq
  %v1360 = vshrl.u32 %v1359, 7
  %v1361 = vsub.s32 3, %v1360
  %v1362 = vrot.slane %v1345, %v1361
  %v1367 = vmul.f32 %v1342, %v1350
  %v1368 = vmul.f32 %v1341, %v1354
  %v1369 = vmul.f32 %v1340, %v1358
  %v1370 = vmul.f32 %v1343, %v1362
  %1371 = vst [vmem:[#allocation2 + $0x1a0] sm:$0xff] %v1367
  %1372 = vst [vmem:[#allocation2 + $0x1a8] sm:$0xff] %v1368
  %1373 = vst [vmem:[#allocation2 + $0x1b0] sm:$0xff] %v1369
  %1374 = vst [vmem:[#allocation2 + $0x1b8] sm:$0xff] %v1370
  %1375 = vrot.lane.b32.xlu0 %v739, 126
  %v1376 = vpop.permute.xlu0 %1375
  %1377 = vrot.lane.b32.xlu0 %v740, 126
  %v1378 = vpop.permute.xlu0 %1377
  %1379 = vrot.lane.b32.xlu0 %v769, 126
  %v1380 = vpop.permute.xlu0 %1379
  %1381 = vrot.lane.b32.xlu0 %v770, 126
  %v1382 = vpop.permute.xlu0 %1381
  %vm1383 = vcmp.lt.s32.totalorder %v780, 126
  %v1384 = vsel %vm1383, %v1380, %v1382
  %v1385 = vsel %vm1383, %v1378, %v1380
  %v1386 = vsel %vm1383, %v1376, %v1378
  %v1387 = vsel %vm1383, %v1382, %v1376
  %s1388 = scalar_lea.vmem %s7, 38
  %v1389 = vld [vmem:[%s1388] ss:$8 sm:$0xf]
  %v1391 = vlaneseq
  %v1392 = vshrl.u32 %v1391, 7
  %v1393 = vsub.s32 0, %v1392
  %v1394 = vrot.slane %v1389, %v1393
  %v1395 = vlaneseq
  %v1396 = vshrl.u32 %v1395, 7
  %v1397 = vsub.s32 1, %v1396
  %v1398 = vrot.slane %v1389, %v1397
  %v1399 = vlaneseq
  %v1400 = vshrl.u32 %v1399, 7
  %v1401 = vsub.s32 2, %v1400
  %v1402 = vrot.slane %v1389, %v1401
  %v1403 = vlaneseq
  %v1404 = vshrl.u32 %v1403, 7
  %v1405 = vsub.s32 3, %v1404
  %v1406 = vrot.slane %v1389, %v1405
  %v1411 = vmul.f32 %v1386, %v1394
  %v1412 = vmul.f32 %v1385, %v1398
  %v1413 = vmul.f32 %v1384, %v1402
  %v1414 = vmul.f32 %v1387, %v1406
  %1415 = vst [vmem:[#allocation2 + $0x1c0] sm:$0xff] %v1411
  %1416 = vst [vmem:[#allocation2 + $0x1c8] sm:$0xff] %v1412
  %1417 = vst [vmem:[#allocation2 + $0x1d0] sm:$0xff] %v1413
  %1418 = vst [vmem:[#allocation2 + $0x1d8] sm:$0xff] %v1414
  %1419 = vrot.lane.b32.xlu0 %v739, 114
  %v1420 = vpop.permute.xlu0 %1419
  %1421 = vrot.lane.b32.xlu0 %v740, 114
  %v1422 = vpop.permute.xlu0 %1421
  %1423 = vrot.lane.b32.xlu0 %v769, 114
  %v1424 = vpop.permute.xlu0 %1423
  %1425 = vrot.lane.b32.xlu0 %v770, 114
  %v1426 = vpop.permute.xlu0 %1425
  %vm1427 = vcmp.lt.s32.totalorder %v780, 114
  %v1428 = vsel %vm1427, %v1424, %v1426
  %v1429 = vsel %vm1427, %v1422, %v1424
  %v1430 = vsel %vm1427, %v1420, %v1422
  %v1431 = vsel %vm1427, %v1426, %v1420
  %s1432 = scalar_lea.vmem %s7, 39
  %v1433 = vld [vmem:[%s1432] ss:$8 sm:$0xf]
  %v1435 = vlaneseq
  %v1436 = vshrl.u32 %v1435, 7
  %v1437 = vsub.s32 0, %v1436
  %v1438 = vrot.slane %v1433, %v1437
  %v1439 = vlaneseq
  %v1440 = vshrl.u32 %v1439, 7
  %v1441 = vsub.s32 1, %v1440
  %v1442 = vrot.slane %v1433, %v1441
  %v1443 = vlaneseq
  %v1444 = vshrl.u32 %v1443, 7
  %v1445 = vsub.s32 2, %v1444
  %v1446 = vrot.slane %v1433, %v1445
  %v1447 = vlaneseq
  %v1448 = vshrl.u32 %v1447, 7
  %v1449 = vsub.s32 3, %v1448
  %v1450 = vrot.slane %v1433, %v1449
  %v1455 = vmul.f32 %v1430, %v1438
  %v1456 = vmul.f32 %v1429, %v1442
  %v1457 = vmul.f32 %v1428, %v1446
  %v1458 = vmul.f32 %v1431, %v1450
  %1459 = vst [vmem:[#allocation2 + $0x1e0] sm:$0xff] %v1455
  %1460 = vst [vmem:[#allocation2 + $0x1e8] sm:$0xff] %v1456
  %1461 = vst [vmem:[#allocation2 + $0x1f0] sm:$0xff] %v1457
  %1462 = vst [vmem:[#allocation2 + $0x1f8] sm:$0xff] %v1458
  %1463 = vrot.lane.b32.xlu0 %v739, 113
  %v1464 = vpop.permute.xlu0 %1463
  %1465 = vrot.lane.b32.xlu0 %v740, 113
  %v1466 = vpop.permute.xlu0 %1465
  %1467 = vrot.lane.b32.xlu0 %v769, 113
  %v1468 = vpop.permute.xlu0 %1467
  %1469 = vrot.lane.b32.xlu0 %v770, 113
  %v1470 = vpop.permute.xlu0 %1469
  %vm1471 = vcmp.lt.s32.totalorder %v780, 113
  %v1472 = vsel %vm1471, %v1468, %v1470
  %v1473 = vsel %vm1471, %v1466, %v1468
  %v1474 = vsel %vm1471, %v1464, %v1466
  %v1475 = vsel %vm1471, %v1470, %v1464
  %s1476 = scalar_lea.vmem %s7, 64
  %v1477 = vld [vmem:[%s1476] ss:$8 sm:$0xf]
  %v1479 = vlaneseq
  %v1480 = vshrl.u32 %v1479, 7
  %v1481 = vsub.s32 0, %v1480
  %v1482 = vrot.slane %v1477, %v1481
  %v1483 = vlaneseq
  %v1484 = vshrl.u32 %v1483, 7
  %v1485 = vsub.s32 1, %v1484
  %v1486 = vrot.slane %v1477, %v1485
  %v1487 = vlaneseq
  %v1488 = vshrl.u32 %v1487, 7
  %v1489 = vsub.s32 2, %v1488
  %v1490 = vrot.slane %v1477, %v1489
  %v1491 = vlaneseq
  %v1492 = vshrl.u32 %v1491, 7
  %v1493 = vsub.s32 3, %v1492
  %v1494 = vrot.slane %v1477, %v1493
  %v1499 = vmul.f32 %v1474, %v1482
  %v1500 = vmul.f32 %v1473, %v1486
  %v1501 = vmul.f32 %v1472, %v1490
  %v1502 = vmul.f32 %v1475, %v1494
  %1503 = vst [vmem:[#allocation2 + $0x200] sm:$0xff] %v1499
  %1504 = vst [vmem:[#allocation2 + $0x208] sm:$0xff] %v1500
  %1505 = vst [vmem:[#allocation2 + $0x210] sm:$0xff] %v1501
  %1506 = vst [vmem:[#allocation2 + $0x218] sm:$0xff] %v1502
  %1507 = vrot.lane.b32.xlu0 %v739, 112
  %v1508 = vpop.permute.xlu0 %1507
  %1509 = vrot.lane.b32.xlu0 %v740, 112
  %v1510 = vpop.permute.xlu0 %1509
  %1511 = vrot.lane.b32.xlu0 %v769, 112
  %v1512 = vpop.permute.xlu0 %1511
  %1513 = vrot.lane.b32.xlu0 %v770, 112
  %v1514 = vpop.permute.xlu0 %1513
  %vm1515 = vcmp.lt.s32.totalorder %v780, 112
  %v1516 = vsel %vm1515, %v1512, %v1514
  %v1517 = vsel %vm1515, %v1510, %v1512
  %v1518 = vsel %vm1515, %v1508, %v1510
  %v1519 = vsel %vm1515, %v1514, %v1508
  %s1520 = scalar_lea.vmem %s7, 65
  %v1521 = vld [vmem:[%s1520] ss:$8 sm:$0xf]
  %v1523 = vlaneseq
  %v1524 = vshrl.u32 %v1523, 7
  %v1525 = vsub.s32 0, %v1524
  %v1526 = vrot.slane %v1521, %v1525
  %v1527 = vlaneseq
  %v1528 = vshrl.u32 %v1527, 7
  %v1529 = vsub.s32 1, %v1528
  %v1530 = vrot.slane %v1521, %v1529
  %v1531 = vlaneseq
  %v1532 = vshrl.u32 %v1531, 7
  %v1533 = vsub.s32 2, %v1532
  %v1534 = vrot.slane %v1521, %v1533
  %v1535 = vlaneseq
  %v1536 = vshrl.u32 %v1535, 7
  %v1537 = vsub.s32 3, %v1536
  %v1538 = vrot.slane %v1521, %v1537
  %v1543 = vmul.f32 %v1518, %v1526
  %v1544 = vmul.f32 %v1517, %v1530
  %v1545 = vmul.f32 %v1516, %v1534
  %v1546 = vmul.f32 %v1519, %v1538
  %1547 = vst [vmem:[#allocation2 + $0x220] sm:$0xff] %v1543
  %1548 = vst [vmem:[#allocation2 + $0x228] sm:$0xff] %v1544
  %1549 = vst [vmem:[#allocation2 + $0x230] sm:$0xff] %v1545
  %1550 = vst [vmem:[#allocation2 + $0x238] sm:$0xff] %v1546
  %1551 = vrot.lane.b32.xlu0 %v739, 111
  %v1552 = vpop.permute.xlu0 %1551
  %1553 = vrot.lane.b32.xlu0 %v740, 111
  %v1554 = vpop.permute.xlu0 %1553
  %1555 = vrot.lane.b32.xlu0 %v769, 111
  %v1556 = vpop.permute.xlu0 %1555
  %1557 = vrot.lane.b32.xlu0 %v770, 111
  %v1558 = vpop.permute.xlu0 %1557
  %vm1559 = vcmp.lt.s32.totalorder %v780, 111
  %v1560 = vsel %vm1559, %v1556, %v1558
  %v1561 = vsel %vm1559, %v1554, %v1556
  %v1562 = vsel %vm1559, %v1552, %v1554
  %v1563 = vsel %vm1559, %v1558, %v1552
  %s1564 = scalar_lea.vmem %s7, 66
  %v1565 = vld [vmem:[%s1564] ss:$8 sm:$0xf]
  %v1567 = vlaneseq
  %v1568 = vshrl.u32 %v1567, 7
  %v1569 = vsub.s32 0, %v1568
  %v1570 = vrot.slane %v1565, %v1569
  %v1571 = vlaneseq
  %v1572 = vshrl.u32 %v1571, 7
  %v1573 = vsub.s32 1, %v1572
  %v1574 = vrot.slane %v1565, %v1573
  %v1575 = vlaneseq
  %v1576 = vshrl.u32 %v1575, 7
  %v1577 = vsub.s32 2, %v1576
  %v1578 = vrot.slane %v1565, %v1577
  %v1579 = vlaneseq
  %v1580 = vshrl.u32 %v1579, 7
  %v1581 = vsub.s32 3, %v1580
  %v1582 = vrot.slane %v1565, %v1581
  %v1587 = vmul.f32 %v1562, %v1570
  %v1588 = vmul.f32 %v1561, %v1574
  %v1589 = vmul.f32 %v1560, %v1578
  %v1590 = vmul.f32 %v1563, %v1582
  %1591 = vst [vmem:[#allocation2 + $0x240] sm:$0xff] %v1587
  %1592 = vst [vmem:[#allocation2 + $0x248] sm:$0xff] %v1588
  %1593 = vst [vmem:[#allocation2 + $0x250] sm:$0xff] %v1589
  %1594 = vst [vmem:[#allocation2 + $0x258] sm:$0xff] %v1590
  %1595 = vrot.lane.b32.xlu0 %v739, 110
  %v1596 = vpop.permute.xlu0 %1595
  %1597 = vrot.lane.b32.xlu0 %v740, 110
  %v1598 = vpop.permute.xlu0 %1597
  %1599 = vrot.lane.b32.xlu0 %v769, 110
  %v1600 = vpop.permute.xlu0 %1599
  %1601 = vrot.lane.b32.xlu0 %v770, 110
  %v1602 = vpop.permute.xlu0 %1601
  %vm1603 = vcmp.lt.s32.totalorder %v780, 110
  %v1604 = vsel %vm1603, %v1600, %v1602
  %v1605 = vsel %vm1603, %v1598, %v1600
  %v1606 = vsel %vm1603, %v1596, %v1598
  %v1607 = vsel %vm1603, %v1602, %v1596
  %s1608 = scalar_lea.vmem %s7, 67
  %v1609 = vld [vmem:[%s1608] ss:$8 sm:$0xf]
  %v1611 = vlaneseq
  %v1612 = vshrl.u32 %v1611, 7
  %v1613 = vsub.s32 0, %v1612
  %v1614 = vrot.slane %v1609, %v1613
  %v1615 = vlaneseq
  %v1616 = vshrl.u32 %v1615, 7
  %v1617 = vsub.s32 1, %v1616
  %v1618 = vrot.slane %v1609, %v1617
  %v1619 = vlaneseq
  %v1620 = vshrl.u32 %v1619, 7
  %v1621 = vsub.s32 2, %v1620
  %v1622 = vrot.slane %v1609, %v1621
  %v1623 = vlaneseq
  %v1624 = vshrl.u32 %v1623, 7
  %v1625 = vsub.s32 3, %v1624
  %v1626 = vrot.slane %v1609, %v1625
  %v1631 = vmul.f32 %v1606, %v1614
  %v1632 = vmul.f32 %v1605, %v1618
  %v1633 = vmul.f32 %v1604, %v1622
  %v1634 = vmul.f32 %v1607, %v1626
  %1635 = vst [vmem:[#allocation2 + $0x260] sm:$0xff] %v1631
  %1636 = vst [vmem:[#allocation2 + $0x268] sm:$0xff] %v1632
  %1637 = vst [vmem:[#allocation2 + $0x270] sm:$0xff] %v1633
  %1638 = vst [vmem:[#allocation2 + $0x278] sm:$0xff] %v1634
  %1639 = vrot.lane.b32.xlu0 %v739, 98
  %v1640 = vpop.permute.xlu0 %1639
  %1641 = vrot.lane.b32.xlu0 %v740, 98
  %v1642 = vpop.permute.xlu0 %1641
  %1643 = vrot.lane.b32.xlu0 %v769, 98
  %v1644 = vpop.permute.xlu0 %1643
  %1645 = vrot.lane.b32.xlu0 %v770, 98
  %v1646 = vpop.permute.xlu0 %1645
  %vm1647 = vcmp.lt.s32.totalorder %v780, 98
  %v1648 = vsel %vm1647, %v1644, %v1646
  %v1649 = vsel %vm1647, %v1642, %v1644
  %v1650 = vsel %vm1647, %v1640, %v1642
  %v1651 = vsel %vm1647, %v1646, %v1640
  %s1652 = scalar_lea.vmem %s7, 68
  %v1653 = vld [vmem:[%s1652] ss:$8 sm:$0xf]
  %v1655 = vlaneseq
  %v1656 = vshrl.u32 %v1655, 7
  %v1657 = vsub.s32 0, %v1656
  %v1658 = vrot.slane %v1653, %v1657
  %v1659 = vlaneseq
  %v1660 = vshrl.u32 %v1659, 7
  %v1661 = vsub.s32 1, %v1660
  %v1662 = vrot.slane %v1653, %v1661
  %v1663 = vlaneseq
  %v1664 = vshrl.u32 %v1663, 7
  %v1665 = vsub.s32 2, %v1664
  %v1666 = vrot.slane %v1653, %v1665
  %v1667 = vlaneseq
  %v1668 = vshrl.u32 %v1667, 7
  %v1669 = vsub.s32 3, %v1668
  %v1670 = vrot.slane %v1653, %v1669
  %v1675 = vmul.f32 %v1650, %v1658
  %v1676 = vmul.f32 %v1649, %v1662
  %v1677 = vmul.f32 %v1648, %v1666
  %v1678 = vmul.f32 %v1651, %v1670
  %1679 = vst [vmem:[#allocation2 + $0x280] sm:$0xff] %v1675
  %1680 = vst [vmem:[#allocation2 + $0x288] sm:$0xff] %v1676
  %1681 = vst [vmem:[#allocation2 + $0x290] sm:$0xff] %v1677
  %1682 = vst [vmem:[#allocation2 + $0x298] sm:$0xff] %v1678
  %1683 = vrot.lane.b32.xlu0 %v739, 97
  %v1684 = vpop.permute.xlu0 %1683
  %1685 = vrot.lane.b32.xlu0 %v740, 97
  %v1686 = vpop.permute.xlu0 %1685
  %1687 = vrot.lane.b32.xlu0 %v769, 97
  %v1688 = vpop.permute.xlu0 %1687
  %1689 = vrot.lane.b32.xlu0 %v770, 97
  %v1690 = vpop.permute.xlu0 %1689
  %vm1691 = vcmp.lt.s32.totalorder %v780, 97
  %v1692 = vsel %vm1691, %v1688, %v1690
  %v1693 = vsel %vm1691, %v1686, %v1688
  %v1694 = vsel %vm1691, %v1684, %v1686
  %v1695 = vsel %vm1691, %v1690, %v1684
  %s1696 = scalar_lea.vmem %s7, 69
  %v1697 = vld [vmem:[%s1696] ss:$8 sm:$0xf]
  %v1699 = vlaneseq
  %v1700 = vshrl.u32 %v1699, 7
  %v1701 = vsub.s32 0, %v1700
  %v1702 = vrot.slane %v1697, %v1701
  %v1703 = vlaneseq
  %v1704 = vshrl.u32 %v1703, 7
  %v1705 = vsub.s32 1, %v1704
  %v1706 = vrot.slane %v1697, %v1705
  %v1707 = vlaneseq
  %v1708 = vshrl.u32 %v1707, 7
  %v1709 = vsub.s32 2, %v1708
  %v1710 = vrot.slane %v1697, %v1709
  %v1711 = vlaneseq
  %v1712 = vshrl.u32 %v1711, 7
  %v1713 = vsub.s32 3, %v1712
  %v1714 = vrot.slane %v1697, %v1713
  %v1719 = vmul.f32 %v1694, %v1702
  %v1720 = vmul.f32 %v1693, %v1706
  %v1721 = vmul.f32 %v1692, %v1710
  %v1722 = vmul.f32 %v1695, %v1714
  %1723 = vst [vmem:[#allocation2 + $0x2a0] sm:$0xff] %v1719
  %1724 = vst [vmem:[#allocation2 + $0x2a8] sm:$0xff] %v1720
  %1725 = vst [vmem:[#allocation2 + $0x2b0] sm:$0xff] %v1721
  %1726 = vst [vmem:[#allocation2 + $0x2b8] sm:$0xff] %v1722
  %1727 = vrot.lane.b32.xlu0 %v739, 96
  %v1728 = vpop.permute.xlu0 %1727
  %1729 = vrot.lane.b32.xlu0 %v740, 96
  %v1730 = vpop.permute.xlu0 %1729
  %1731 = vrot.lane.b32.xlu0 %v769, 96
  %v1732 = vpop.permute.xlu0 %1731
  %1733 = vrot.lane.b32.xlu0 %v770, 96
  %v1734 = vpop.permute.xlu0 %1733
  %vm1735 = vcmp.lt.s32.totalorder %v780, 96
  %v1736 = vsel %vm1735, %v1732, %v1734
  %v1737 = vsel %vm1735, %v1730, %v1732
  %v1738 = vsel %vm1735, %v1728, %v1730
  %v1739 = vsel %vm1735, %v1734, %v1728
  %s1740 = scalar_lea.vmem %s7, 70
  %v1741 = vld [vmem:[%s1740] ss:$8 sm:$0xf]
  %v1743 = vlaneseq
  %v1744 = vshrl.u32 %v1743, 7
  %v1745 = vsub.s32 0, %v1744
  %v1746 = vrot.slane %v1741, %v1745
  %v1747 = vlaneseq
  %v1748 = vshrl.u32 %v1747, 7
  %v1749 = vsub.s32 1, %v1748
  %v1750 = vrot.slane %v1741, %v1749
  %v1751 = vlaneseq
  %v1752 = vshrl.u32 %v1751, 7
  %v1753 = vsub.s32 2, %v1752
  %v1754 = vrot.slane %v1741, %v1753
  %v1755 = vlaneseq
  %v1756 = vshrl.u32 %v1755, 7
  %v1757 = vsub.s32 3, %v1756
  %v1758 = vrot.slane %v1741, %v1757
  %v1763 = vmul.f32 %v1738, %v1746
  %v1764 = vmul.f32 %v1737, %v1750
  %v1765 = vmul.f32 %v1736, %v1754
  %v1766 = vmul.f32 %v1739, %v1758
  %1767 = vst [vmem:[#allocation2 + $0x2c0] sm:$0xff] %v1763
  %1768 = vst [vmem:[#allocation2 + $0x2c8] sm:$0xff] %v1764
  %1769 = vst [vmem:[#allocation2 + $0x2d0] sm:$0xff] %v1765
  %1770 = vst [vmem:[#allocation2 + $0x2d8] sm:$0xff] %v1766
  %1771 = vrot.lane.b32.xlu0 %v739, 95
  %v1772 = vpop.permute.xlu0 %1771
  %1773 = vrot.lane.b32.xlu0 %v740, 95
  %v1774 = vpop.permute.xlu0 %1773
  %1775 = vrot.lane.b32.xlu0 %v769, 95
  %v1776 = vpop.permute.xlu0 %1775
  %1777 = vrot.lane.b32.xlu0 %v770, 95
  %v1778 = vpop.permute.xlu0 %1777
  %vm1779 = vcmp.lt.s32.totalorder %v780, 95
  %v1780 = vsel %vm1779, %v1776, %v1778
  %v1781 = vsel %vm1779, %v1774, %v1776
  %v1782 = vsel %vm1779, %v1772, %v1774
  %v1783 = vsel %vm1779, %v1778, %v1772
  %s1784 = scalar_lea.vmem %s7, 71
  %v1785 = vld [vmem:[%s1784] ss:$8 sm:$0xf]
  %v1787 = vlaneseq
  %v1788 = vshrl.u32 %v1787, 7
  %v1789 = vsub.s32 0, %v1788
  %v1790 = vrot.slane %v1785, %v1789
  %v1791 = vlaneseq
  %v1792 = vshrl.u32 %v1791, 7
  %v1793 = vsub.s32 1, %v1792
  %v1794 = vrot.slane %v1785, %v1793
  %v1795 = vlaneseq
  %v1796 = vshrl.u32 %v1795, 7
  %v1797 = vsub.s32 2, %v1796
  %v1798 = vrot.slane %v1785, %v1797
  %v1799 = vlaneseq
  %v1800 = vshrl.u32 %v1799, 7
  %v1801 = vsub.s32 3, %v1800
  %v1802 = vrot.slane %v1785, %v1801
  %v1807 = vmul.f32 %v1782, %v1790
  %v1808 = vmul.f32 %v1781, %v1794
  %v1809 = vmul.f32 %v1780, %v1798
  %v1810 = vmul.f32 %v1783, %v1802
  %1811 = vst [vmem:[#allocation2 + $0x2e0] sm:$0xff] %v1807
  %1812 = vst [vmem:[#allocation2 + $0x2e8] sm:$0xff] %v1808
  %1813 = vst [vmem:[#allocation2 + $0x2f0] sm:$0xff] %v1809
  %1814 = vst [vmem:[#allocation2 + $0x2f8] sm:$0xff] %v1810
  %1815 = vrot.lane.b32.xlu0 %v739, 94
  %v1816 = vpop.permute.xlu0 %1815
  %1817 = vrot.lane.b32.xlu0 %v740, 94
  %v1818 = vpop.permute.xlu0 %1817
  %1819 = vrot.lane.b32.xlu0 %v769, 94
  %v1820 = vpop.permute.xlu0 %1819
  %1821 = vrot.lane.b32.xlu0 %v770, 94
  %v1822 = vpop.permute.xlu0 %1821
  %vm1823 = vcmp.lt.s32.totalorder %v780, 94
  %v1824 = vsel %vm1823, %v1820, %v1822
  %v1825 = vsel %vm1823, %v1818, %v1820
  %v1826 = vsel %vm1823, %v1816, %v1818
  %v1827 = vsel %vm1823, %v1822, %v1816
  %s1828 = scalar_lea.vmem %s7, 96
  %v1829 = vld [vmem:[%s1828] ss:$8 sm:$0xf]
  %v1831 = vlaneseq
  %v1832 = vshrl.u32 %v1831, 7
  %v1833 = vsub.s32 0, %v1832
  %v1834 = vrot.slane %v1829, %v1833
  %v1835 = vlaneseq
  %v1836 = vshrl.u32 %v1835, 7
  %v1837 = vsub.s32 1, %v1836
  %v1838 = vrot.slane %v1829, %v1837
  %v1839 = vlaneseq
  %v1840 = vshrl.u32 %v1839, 7
  %v1841 = vsub.s32 2, %v1840
  %v1842 = vrot.slane %v1829, %v1841
  %v1843 = vlaneseq
  %v1844 = vshrl.u32 %v1843, 7
  %v1845 = vsub.s32 3, %v1844
  %v1846 = vrot.slane %v1829, %v1845
  %v1851 = vmul.f32 %v1826, %v1834
  %v1852 = vmul.f32 %v1825, %v1838
  %v1853 = vmul.f32 %v1824, %v1842
  %v1854 = vmul.f32 %v1827, %v1846
  %1855 = vst [vmem:[#allocation2 + $0x300] sm:$0xff] %v1851
  %1856 = vst [vmem:[#allocation2 + $0x308] sm:$0xff] %v1852
  %1857 = vst [vmem:[#allocation2 + $0x310] sm:$0xff] %v1853
  %1858 = vst [vmem:[#allocation2 + $0x318] sm:$0xff] %v1854
  %v1859 = vld [vmem:[%s5] sm:$0xff]
  %v1860 = vld [vmem:[%s5 + $0x8] sm:$0xff]
  %v1861 = vld [vmem:[%s5 + $0x10] sm:$0xff]
  %v1862 = vld [vmem:[%s5 + $0x18] sm:$0xff]
  %v1863 = vld [vmem:[#allocation2] sm:$0xff]
  %v1864 = vld [vmem:[#allocation2 + $0x8] sm:$0xff]
  %v1865 = vld [vmem:[#allocation2 + $0x10] sm:$0xff]
  %v1866 = vld [vmem:[#allocation2 + $0x18] sm:$0xff]
  %v1867 = vld [vmem:[#allocation2 + $0x20] sm:$0xff]
  %v1868 = vld [vmem:[#allocation2 + $0x28] sm:$0xff]
  %v1869 = vld [vmem:[#allocation2 + $0x30] sm:$0xff]
  %v1870 = vld [vmem:[#allocation2 + $0x38] sm:$0xff]
  %v1871 = vld [vmem:[#allocation2 + $0x40] sm:$0xff]
  %v1872 = vld [vmem:[#allocation2 + $0x48] sm:$0xff]
  %v1873 = vld [vmem:[#allocation2 + $0x50] sm:$0xff]
  %v1874 = vld [vmem:[#allocation2 + $0x58] sm:$0xff]
  %v1875 = vld [vmem:[#allocation2 + $0x60] sm:$0xff]
  %v1876 = vld [vmem:[#allocation2 + $0x68] sm:$0xff]
  %v1877 = vld [vmem:[#allocation2 + $0x70] sm:$0xff]
  %v1878 = vld [vmem:[#allocation2 + $0x78] sm:$0xff]
  %v1879 = vld [vmem:[#allocation2 + $0x80] sm:$0xff]
  %v1880 = vld [vmem:[#allocation2 + $0x88] sm:$0xff]
  %v1881 = vld [vmem:[#allocation2 + $0x90] sm:$0xff]
  %v1882 = vld [vmem:[#allocation2 + $0x98] sm:$0xff]
  %v1883 = vld [vmem:[#allocation2 + $0xa0] sm:$0xff]
  %v1884 = vld [vmem:[#allocation2 + $0xa8] sm:$0xff]
  %v1885 = vld [vmem:[#allocation2 + $0xb0] sm:$0xff]
  %v1886 = vld [vmem:[#allocation2 + $0xb8] sm:$0xff]
  %v1887 = vld [vmem:[#allocation2 + $0xc0] sm:$0xff]
  %v1888 = vld [vmem:[#allocation2 + $0xc8] sm:$0xff]
  %v1889 = vld [vmem:[#allocation2 + $0xd0] sm:$0xff]
  %v1890 = vld [vmem:[#allocation2 + $0xd8] sm:$0xff]
  %v1891 = vld [vmem:[#allocation2 + $0xe0] sm:$0xff]
  %v1892 = vld [vmem:[#allocation2 + $0xe8] sm:$0xff]
  %v1893 = vld [vmem:[#allocation2 + $0xf0] sm:$0xff]
  %v1894 = vld [vmem:[#allocation2 + $0xf8] sm:$0xff]
  %v1895 = vld [vmem:[#allocation2 + $0x100] sm:$0xff]
  %v1896 = vld [vmem:[#allocation2 + $0x108] sm:$0xff]
  %v1897 = vld [vmem:[#allocation2 + $0x110] sm:$0xff]
  %v1898 = vld [vmem:[#allocation2 + $0x118] sm:$0xff]
  %v1899 = vld [vmem:[#allocation2 + $0x120] sm:$0xff]
  %v1900 = vld [vmem:[#allocation2 + $0x128] sm:$0xff]
  %v1901 = vld [vmem:[#allocation2 + $0x130] sm:$0xff]
  %v1902 = vld [vmem:[#allocation2 + $0x138] sm:$0xff]
  %v1903 = vld [vmem:[#allocation2 + $0x140] sm:$0xff]
  %v1904 = vld [vmem:[#allocation2 + $0x148] sm:$0xff]
  %v1905 = vld [vmem:[#allocation2 + $0x150] sm:$0xff]
  %v1906 = vld [vmem:[#allocation2 + $0x158] sm:$0xff]
  %v1907 = vld [vmem:[#allocation2 + $0x160] sm:$0xff]
  %v1908 = vld [vmem:[#allocation2 + $0x168] sm:$0xff]
  %v1909 = vld [vmem:[#allocation2 + $0x170] sm:$0xff]
  %v1910 = vld [vmem:[#allocation2 + $0x178] sm:$0xff]
  %v1911 = vld [vmem:[#allocation2 + $0x180] sm:$0xff]
  %v1912 = vld [vmem:[#allocation2 + $0x188] sm:$0xff]
  %v1913 = vld [vmem:[#allocation2 + $0x190] sm:$0xff]
  %v1914 = vld [vmem:[#allocation2 + $0x198] sm:$0xff]
  %v1915 = vld [vmem:[#allocation2 + $0x1a0] sm:$0xff]
  %v1916 = vld [vmem:[#allocation2 + $0x1a8] sm:$0xff]
  %v1917 = vld [vmem:[#allocation2 + $0x1b0] sm:$0xff]
  %v1918 = vld [vmem:[#allocation2 + $0x1b8] sm:$0xff]
  %v1919 = vld [vmem:[#allocation2 + $0x1c0] sm:$0xff]
  %v1920 = vld [vmem:[#allocation2 + $0x1c8] sm:$0xff]
  %v1921 = vld [vmem:[#allocation2 + $0x1d0] sm:$0xff]
  %v1922 = vld [vmem:[#allocation2 + $0x1d8] sm:$0xff]
  %v1923 = vld [vmem:[#allocation2 + $0x1e0] sm:$0xff]
  %v1924 = vld [vmem:[#allocation2 + $0x1e8] sm:$0xff]
  %v1925 = vld [vmem:[#allocation2 + $0x1f0] sm:$0xff]
  %v1926 = vld [vmem:[#allocation2 + $0x1f8] sm:$0xff]
  %v1927 = vld [vmem:[#allocation2 + $0x200] sm:$0xff]
  %v1928 = vld [vmem:[#allocation2 + $0x208] sm:$0xff]
  %v1929 = vld [vmem:[#allocation2 + $0x210] sm:$0xff]
  %v1930 = vld [vmem:[#allocation2 + $0x218] sm:$0xff]
  %v1931 = vld [vmem:[#allocation2 + $0x220] sm:$0xff]
  %v1932 = vld [vmem:[#allocation2 + $0x228] sm:$0xff]
  %v1933 = vld [vmem:[#allocation2 + $0x230] sm:$0xff]
  %v1934 = vld [vmem:[#allocation2 + $0x238] sm:$0xff]
  %v1935 = vld [vmem:[#allocation2 + $0x240] sm:$0xff]
  %v1936 = vld [vmem:[#allocation2 + $0x248] sm:$0xff]
  %v1937 = vld [vmem:[#allocation2 + $0x250] sm:$0xff]
  %v1938 = vld [vmem:[#allocation2 + $0x258] sm:$0xff]
  %v1939 = vld [vmem:[#allocation2 + $0x260] sm:$0xff]
  %v1940 = vld [vmem:[#allocation2 + $0x268] sm:$0xff]
  %v1941 = vld [vmem:[#allocation2 + $0x270] sm:$0xff]
  %v1942 = vld [vmem:[#allocation2 + $0x278] sm:$0xff]
  %v1943 = vld [vmem:[#allocation2 + $0x280] sm:$0xff]
  %v1944 = vld [vmem:[#allocation2 + $0x288] sm:$0xff]
  %v1945 = vld [vmem:[#allocation2 + $0x290] sm:$0xff]
  %v1946 = vld [vmem:[#allocation2 + $0x298] sm:$0xff]
  %v1947 = vld [vmem:[#allocation2 + $0x2a0] sm:$0xff]
  %v1948 = vld [vmem:[#allocation2 + $0x2a8] sm:$0xff]
  %v1949 = vld [vmem:[#allocation2 + $0x2b0] sm:$0xff]
  %v1950 = vld [vmem:[#allocation2 + $0x2b8] sm:$0xff]
  %v1951 = vld [vmem:[#allocation2 + $0x2c0] sm:$0xff]
  %v1952 = vld [vmem:[#allocation2 + $0x2c8] sm:$0xff]
  %v1953 = vld [vmem:[#allocation2 + $0x2d0] sm:$0xff]
  %v1954 = vld [vmem:[#allocation2 + $0x2d8] sm:$0xff]
  %v1955 = vld [vmem:[#allocation2 + $0x2e0] sm:$0xff]
  %v1956 = vld [vmem:[#allocation2 + $0x2e8] sm:$0xff]
  %v1957 = vld [vmem:[#allocation2 + $0x2f0] sm:$0xff]
  %v1958 = vld [vmem:[#allocation2 + $0x2f8] sm:$0xff]
  %v1959 = vld [vmem:[#allocation2 + $0x300] sm:$0xff]
  %v1960 = vld [vmem:[#allocation2 + $0x308] sm:$0xff]
  %v1961 = vld [vmem:[#allocation2 + $0x310] sm:$0xff]
  %v1962 = vld [vmem:[#allocation2 + $0x318] sm:$0xff]
  %vm1963 = vcmask 588800
  %v1965 = vsel %vm1963, %v1860, 0
  %v1968 = vsel %vm1963, %v1862, 0
  %1970 = vmatprep.subr.mxu0 %v1924
  %1971 = vmatpush1.msra.mxu0 %v1923
  %1972 = vmatprep.subr.mxu0 %v1920
  %1973 = vmatpush1.msra.mxu0 %v1919
  %1974 = vmatprep.subr.mxu0 %v1916
  %1975 = vmatpush1.msra.mxu0 %v1915
  %1976 = vmatprep.subr.mxu0 %v1912
  %1977 = vmatpush1.msra.mxu0 %v1911
  %1978 = vmatprep.subr.mxu0 %v1908
  %1979 = vmatpush1.msra.mxu0 %v1907
  %1980 = vmatprep.subr.mxu0 %v1904
  %1981 = vmatpush1.msra.mxu0 %v1903
  %1982 = vmatprep.subr.mxu0 %v1900
  %1983 = vmatpush1.msra.mxu0 %v1899
  %1984 = vmatprep.subr.mxu0 %v1896
  %1985 = vmatpush1.msra.mxu0 %v1895
  %1986 = vmatprep.subr.mxu0 %v1892
  %1987 = vmatpush1.msra.mxu0 %v1891
  %1988 = vmatprep.subr.mxu0 %v1888
  %1989 = vmatpush1.msra.mxu0 %v1887
  %1990 = vmatprep.subr.mxu0 %v1884
  %1991 = vmatpush1.msra.mxu0 %v1883
  %1992 = vmatprep.subr.mxu0 %v1880
  %1993 = vmatpush1.msra.mxu0 %v1879
  %1994 = vmatprep.subr.mxu0 %v1876
  %1995 = vmatpush1.msra.mxu0 %v1875
  %1996 = vmatprep.subr.mxu0 %v1872
  %1997 = vmatpush1.msra.mxu0 %v1871
  %1998 = vmatprep.subr.mxu0 %v1868
  %1999 = vmatpush1.msra.mxu0 %v1867
  %2000 = vmatprep.subr.mxu0 %v1864
  %2001 = vmatpush1.msra.mxu0 %v1863
  %2002 = vmatprep.subr.mxu0 0.0
  %2003 = vmatpush2.msra.mxu0 0.0
  %2004 = vmatprep.subr.mxu0 0.0
  %2005 = vmatpush2.msra.mxu0 0.0
  %2006 = vmatprep.subr.mxu0 0.0
  %2007 = vmatpush2.msra.mxu0 0.0
  %2008 = vmatprep.subr.mxu0 0.0
  %2009 = vmatpush2.msra.mxu0 0.0
  %2010 = vmatprep.subr.mxu0 0.0
  %2011 = vmatpush2.msra.mxu0 0.0
  %2012 = vmatprep.subr.mxu0 0.0
  %2013 = vmatpush2.msra.mxu0 0.0
  %2014 = vmatprep.subr.mxu0 0.0
  %2015 = vmatpush2.msra.mxu0 0.0
  %2016 = vmatprep.subr.mxu0 %v1960
  %2017 = vmatpush2.msra.mxu0 %v1959
  %2018 = vmatprep.subr.mxu0 %v1956
  %2019 = vmatpush2.msra.mxu0 %v1955
  %2020 = vmatprep.subr.mxu0 %v1952
  %2021 = vmatpush2.msra.mxu0 %v1951
  %2022 = vmatprep.subr.mxu0 %v1948
  %2023 = vmatpush2.msra.mxu0 %v1947
  %2024 = vmatprep.subr.mxu0 %v1944
  %2025 = vmatpush2.msra.mxu0 %v1943
  %2026 = vmatprep.subr.mxu0 %v1940
  %2027 = vmatpush2.msra.mxu0 %v1939
  %2028 = vmatprep.subr.mxu0 %v1936
  %2029 = vmatpush2.msra.mxu0 %v1935
  %2030 = vmatprep.subr.mxu0 %v1932
  %2031 = vmatpush2.msra.mxu0 %v1931
  %2032 = vmatprep.subr.mxu0 %v1928
  %2033 = vmatpush2.msra.mxu0 %v1927
  %2034 = vmatprep.mubr.f32.mxu0 %v1965
  %2035 = vmatmul.mubr.f32.gmra.mxu0 %v1859
  %v2036 = vpop.f32.mrf.mxu0
  %v2037 = vadd.f32 0.0, %v2036
  %v2038 = vpop.f32.mrf.mxu0
  %v2039 = vadd.f32 0.0, %v2038
  %2040 = vmatprep.mubr.f32.mxu0 %v1968
  %2041 = vmatmul.mubr.f32.gmra.mxu0 %v1861
  %v2042 = vpop.f32.mrf.mxu0
  %v2043 = vadd.f32 0.0, %v2042
  %v2044 = vpop.f32.mrf.mxu0
  %v2045 = vadd.f32 0.0, %v2044
  %2046 = vdwg.mxu0
  %2047 = vmatprep.subr.mxu0 %v1926
  %2048 = vmatpush1.msra.mxu0 %v1925
  %2049 = vmatprep.subr.mxu0 %v1922
  %2050 = vmatpush1.msra.mxu0 %v1921
  %2051 = vmatprep.subr.mxu0 %v1918
  %2052 = vmatpush1.msra.mxu0 %v1917
  %2053 = vmatprep.subr.mxu0 %v1914
  %2054 = vmatpush1.msra.mxu0 %v1913
  %2055 = vmatprep.subr.mxu0 %v1910
  %2056 = vmatpush1.msra.mxu0 %v1909
  %2057 = vmatprep.subr.mxu0 %v1906
  %2058 = vmatpush1.msra.mxu0 %v1905
  %2059 = vmatprep.subr.mxu0 %v1902
  %2060 = vmatpush1.msra.mxu0 %v1901
  %2061 = vmatprep.subr.mxu0 %v1898
  %2062 = vmatpush1.msra.mxu0 %v1897
  %2063 = vmatprep.subr.mxu0 %v1894
  %2064 = vmatpush1.msra.mxu0 %v1893
  %2065 = vmatprep.subr.mxu0 %v1890
  %2066 = vmatpush1.msra.mxu0 %v1889
  %2067 = vmatprep.subr.mxu0 %v1886
  %2068 = vmatpush1.msra.mxu0 %v1885
  %2069 = vmatprep.subr.mxu0 %v1882
  %2070 = vmatpush1.msra.mxu0 %v1881
  %2071 = vmatprep.subr.mxu0 %v1878
  %2072 = vmatpush1.msra.mxu0 %v1877
  %2073 = vmatprep.subr.mxu0 %v1874
  %2074 = vmatpush1.msra.mxu0 %v1873
  %2075 = vmatprep.subr.mxu0 %v1870
  %2076 = vmatpush1.msra.mxu0 %v1869
  %2077 = vmatprep.subr.mxu0 %v1866
  %2078 = vmatpush1.msra.mxu0 %v1865
  %2079 = vmatprep.subr.mxu0 0.0
  %2080 = vmatpush2.msra.mxu0 0.0
  %2081 = vmatprep.subr.mxu0 0.0
  %2082 = vmatpush2.msra.mxu0 0.0
  %2083 = vmatprep.subr.mxu0 0.0
  %2084 = vmatpush2.msra.mxu0 0.0
  %2085 = vmatprep.subr.mxu0 0.0
  %2086 = vmatpush2.msra.mxu0 0.0
  %2087 = vmatprep.subr.mxu0 0.0
  %2088 = vmatpush2.msra.mxu0 0.0
  %2089 = vmatprep.subr.mxu0 0.0
  %2090 = vmatpush2.msra.mxu0 0.0
  %2091 = vmatprep.subr.mxu0 0.0
  %2092 = vmatpush2.msra.mxu0 0.0
  %2093 = vmatprep.subr.mxu0 %v1962
  %2094 = vmatpush2.msra.mxu0 %v1961
  %2095 = vmatprep.subr.mxu0 %v1958
  %2096 = vmatpush2.msra.mxu0 %v1957
  %2097 = vmatprep.subr.mxu0 %v1954
  %2098 = vmatpush2.msra.mxu0 %v1953
  %2099 = vmatprep.subr.mxu0 %v1950
  %2100 = vmatpush2.msra.mxu0 %v1949
  %2101 = vmatprep.subr.mxu0 %v1946
  %2102 = vmatpush2.msra.mxu0 %v1945
  %2103 = vmatprep.subr.mxu0 %v1942
  %2104 = vmatpush2.msra.mxu0 %v1941
  %2105 = vmatprep.subr.mxu0 %v1938
  %2106 = vmatpush2.msra.mxu0 %v1937
  %2107 = vmatprep.subr.mxu0 %v1934
  %2108 = vmatpush2.msra.mxu0 %v1933
  %2109 = vmatprep.subr.mxu0 %v1930
  %2110 = vmatpush2.msra.mxu0 %v1929
  %2111 = vmatprep.mubr.f32.mxu0 %v1965
  %2112 = vmatmul.mubr.f32.gmra.mxu0 %v1859
  %v2113 = vpop.f32.mrf.mxu0
  %v2114 = vadd.f32 0.0, %v2113
  %v2115 = vpop.f32.mrf.mxu0
  %v2116 = vadd.f32 0.0, %v2115
  %2117 = vmatprep.mubr.f32.mxu0 %v1968
  %2118 = vmatmul.mubr.f32.gmra.mxu0 %v1861
  %v2119 = vpop.f32.mrf.mxu0
  %v2120 = vadd.f32 0.0, %v2119
  %v2121 = vpop.f32.mrf.mxu0
  %v2122 = vadd.f32 0.0, %v2121
  %2123 = vdwg.mxu0
  %v2124 = vmax.f32 %v2037, 0.0
  %v2125 = vmax.f32 %v2039, 0.0
  %v2126 = vmax.f32 %v2114, 0.0
  %v2127 = vmax.f32 %v2116, 0.0
  %v2128 = vmax.f32 %v2043, 0.0
  %v2129 = vmax.f32 %v2045, 0.0
  %v2130 = vmax.f32 %v2120, 0.0
  %v2131 = vmax.f32 %v2122, 0.0
  %2132 = vrot.lane.b32.xlu0 %v2124, 17
  %v2133 = vpop.permute.xlu0 %2132
  %2134 = vrot.lane.b32.xlu0 %v2128, 17
  %v2135 = vpop.permute.xlu0 %2134
  %2136 = vrot.lane.b32.xlu0 %v2125, 17
  %v2137 = vpop.permute.xlu0 %2136
  %2138 = vrot.lane.b32.xlu0 %v2129, 17
  %v2139 = vpop.permute.xlu0 %2138
  %2140 = vrot.lane.b32.xlu0 %v2126, 17
  %v2141 = vpop.permute.xlu0 %2140
  %2142 = vrot.lane.b32.xlu0 %v2130, 17
  %v2143 = vpop.permute.xlu0 %2142
  %2144 = vrot.lane.b32.xlu0 %v2127, 17
  %v2145 = vpop.permute.xlu0 %2144
  %2146 = vrot.lane.b32.xlu0 %v2131, 17
  %v2147 = vpop.permute.xlu0 %2146
  %v2148 = vsel %vm1044, %v2141, %v2145
  %v2149 = vsel %vm1044, %v2143, %v2147
  %v2150 = vsel %vm1044, %v2137, %v2141
  %v2151 = vsel %vm1044, %v2139, %v2143
  %v2152 = vsel %vm1044, %v2133, %v2137
  %v2153 = vsel %vm1044, %v2135, %v2139
  %v2154 = vsel %vm1044, %v2145, %v2133
  %v2155 = vsel %vm1044, %v2147, %v2135
  %v2156 = vld [vmem:[%s8] ss:$8 sm:$0xf]
  %v2158 = vlaneseq
  %v2159 = vshrl.u32 %v2158, 7
  %v2160 = vsub.s32 0, %v2159
  %v2161 = vrot.slane %v2156, %v2160
  %v2162 = vlaneseq
  %v2163 = vshrl.u32 %v2162, 7
  %v2164 = vsub.s32 1, %v2163
  %v2165 = vrot.slane %v2156, %v2164
  %v2166 = vlaneseq
  %v2167 = vshrl.u32 %v2166, 7
  %v2168 = vsub.s32 2, %v2167
  %v2169 = vrot.slane %v2156, %v2168
  %v2170 = vlaneseq
  %v2171 = vshrl.u32 %v2170, 7
  %v2172 = vsub.s32 3, %v2171
  %v2173 = vrot.slane %v2156, %v2172
  %v2178 = vmul.f32 %v2154, %v2161
  %v2179 = vmul.f32 %v2152, %v2165
  %v2180 = vmul.f32 %v2150, %v2169
  %v2181 = vmul.f32 %v2148, %v2173
  %v2182 = vmul.f32 %v2155, %v2161
  %v2183 = vmul.f32 %v2153, %v2165
  %v2184 = vmul.f32 %v2151, %v2169
  %v2185 = vmul.f32 %v2149, %v2173
  %2186 = vst [vmem:[#allocation3] sm:$0xff] %v2178
  %2187 = vst [vmem:[#allocation3 + $0x8] sm:$0xff] %v2179
  %2188 = vst [vmem:[#allocation3 + $0x10] sm:$0xff] %v2180
  %2189 = vst [vmem:[#allocation3 + $0x18] sm:$0xff] %v2181
  %2190 = vst [vmem:[#allocation3 + $0x20] sm:$0xff] %v2182
  %2191 = vst [vmem:[#allocation3 + $0x28] sm:$0xff] %v2183
  %2192 = vst [vmem:[#allocation3 + $0x30] sm:$0xff] %v2184
  %2193 = vst [vmem:[#allocation3 + $0x38] sm:$0xff] %v2185
  %2194 = vrot.lane.b32.xlu0 %v2124, 16
  %v2195 = vpop.permute.xlu0 %2194
  %2196 = vrot.lane.b32.xlu0 %v2128, 16
  %v2197 = vpop.permute.xlu0 %2196
  %2198 = vrot.lane.b32.xlu0 %v2125, 16
  %v2199 = vpop.permute.xlu0 %2198
  %2200 = vrot.lane.b32.xlu0 %v2129, 16
  %v2201 = vpop.permute.xlu0 %2200
  %2202 = vrot.lane.b32.xlu0 %v2126, 16
  %v2203 = vpop.permute.xlu0 %2202
  %2204 = vrot.lane.b32.xlu0 %v2130, 16
  %v2205 = vpop.permute.xlu0 %2204
  %2206 = vrot.lane.b32.xlu0 %v2127, 16
  %v2207 = vpop.permute.xlu0 %2206
  %2208 = vrot.lane.b32.xlu0 %v2131, 16
  %v2209 = vpop.permute.xlu0 %2208
  %v2210 = vsel %vm1088, %v2203, %v2207
  %v2211 = vsel %vm1088, %v2205, %v2209
  %v2212 = vsel %vm1088, %v2199, %v2203
  %v2213 = vsel %vm1088, %v2201, %v2205
  %v2214 = vsel %vm1088, %v2195, %v2199
  %v2215 = vsel %vm1088, %v2197, %v2201
  %v2216 = vsel %vm1088, %v2207, %v2195
  %v2217 = vsel %vm1088, %v2209, %v2197
  %s2218 = scalar_lea.vmem %s8, 1
  %v2219 = vld [vmem:[%s2218] ss:$8 sm:$0xf]
  %v2221 = vlaneseq
  %v2222 = vshrl.u32 %v2221, 7
  %v2223 = vsub.s32 0, %v2222
  %v2224 = vrot.slane %v2219, %v2223
  %v2225 = vlaneseq
  %v2226 = vshrl.u32 %v2225, 7
  %v2227 = vsub.s32 1, %v2226
  %v2228 = vrot.slane %v2219, %v2227
  %v2229 = vlaneseq
  %v2230 = vshrl.u32 %v2229, 7
  %v2231 = vsub.s32 2, %v2230
  %v2232 = vrot.slane %v2219, %v2231
  %v2233 = vlaneseq
  %v2234 = vshrl.u32 %v2233, 7
  %v2235 = vsub.s32 3, %v2234
  %v2236 = vrot.slane %v2219, %v2235
  %v2241 = vmul.f32 %v2216, %v2224
  %v2242 = vmul.f32 %v2214, %v2228
  %v2243 = vmul.f32 %v2212, %v2232
  %v2244 = vmul.f32 %v2210, %v2236
  %v2245 = vmul.f32 %v2217, %v2224
  %v2246 = vmul.f32 %v2215, %v2228
  %v2247 = vmul.f32 %v2213, %v2232
  %v2248 = vmul.f32 %v2211, %v2236
  %2249 = vst [vmem:[#allocation3 + $0x40] sm:$0xff] %v2241
  %2250 = vst [vmem:[#allocation3 + $0x48] sm:$0xff] %v2242
  %2251 = vst [vmem:[#allocation3 + $0x50] sm:$0xff] %v2243
  %2252 = vst [vmem:[#allocation3 + $0x58] sm:$0xff] %v2244
  %2253 = vst [vmem:[#allocation3 + $0x60] sm:$0xff] %v2245
  %2254 = vst [vmem:[#allocation3 + $0x68] sm:$0xff] %v2246
  %2255 = vst [vmem:[#allocation3 + $0x70] sm:$0xff] %v2247
  %2256 = vst [vmem:[#allocation3 + $0x78] sm:$0xff] %v2248
  %2257 = vrot.lane.b32.xlu0 %v2124, 15
  %v2258 = vpop.permute.xlu0 %2257
  %2259 = vrot.lane.b32.xlu0 %v2128, 15
  %v2260 = vpop.permute.xlu0 %2259
  %2261 = vrot.lane.b32.xlu0 %v2125, 15
  %v2262 = vpop.permute.xlu0 %2261
  %2263 = vrot.lane.b32.xlu0 %v2129, 15
  %v2264 = vpop.permute.xlu0 %2263
  %2265 = vrot.lane.b32.xlu0 %v2126, 15
  %v2266 = vpop.permute.xlu0 %2265
  %2267 = vrot.lane.b32.xlu0 %v2130, 15
  %v2268 = vpop.permute.xlu0 %2267
  %2269 = vrot.lane.b32.xlu0 %v2127, 15
  %v2270 = vpop.permute.xlu0 %2269
  %2271 = vrot.lane.b32.xlu0 %v2131, 15
  %v2272 = vpop.permute.xlu0 %2271
  %v2273 = vsel %vm1132, %v2266, %v2270
  %v2274 = vsel %vm1132, %v2268, %v2272
  %v2275 = vsel %vm1132, %v2262, %v2266
  %v2276 = vsel %vm1132, %v2264, %v2268
  %v2277 = vsel %vm1132, %v2258, %v2262
  %v2278 = vsel %vm1132, %v2260, %v2264
  %v2279 = vsel %vm1132, %v2270, %v2258
  %v2280 = vsel %vm1132, %v2272, %v2260
  %s2281 = scalar_lea.vmem %s8, 2
  %v2282 = vld [vmem:[%s2281] ss:$8 sm:$0xf]
  %v2284 = vlaneseq
  %v2285 = vshrl.u32 %v2284, 7
  %v2286 = vsub.s32 0, %v2285
  %v2287 = vrot.slane %v2282, %v2286
  %v2288 = vlaneseq
  %v2289 = vshrl.u32 %v2288, 7
  %v2290 = vsub.s32 1, %v2289
  %v2291 = vrot.slane %v2282, %v2290
  %v2292 = vlaneseq
  %v2293 = vshrl.u32 %v2292, 7
  %v2294 = vsub.s32 2, %v2293
  %v2295 = vrot.slane %v2282, %v2294
  %v2296 = vlaneseq
  %v2297 = vshrl.u32 %v2296, 7
  %v2298 = vsub.s32 3, %v2297
  %v2299 = vrot.slane %v2282, %v2298
  %v2304 = vmul.f32 %v2279, %v2287
  %v2305 = vmul.f32 %v2277, %v2291
  %v2306 = vmul.f32 %v2275, %v2295
  %v2307 = vmul.f32 %v2273, %v2299
  %v2308 = vmul.f32 %v2280, %v2287
  %v2309 = vmul.f32 %v2278, %v2291
  %v2310 = vmul.f32 %v2276, %v2295
  %v2311 = vmul.f32 %v2274, %v2299
  %2312 = vst [vmem:[#allocation3 + $0x80] sm:$0xff] %v2304
  %2313 = vst [vmem:[#allocation3 + $0x88] sm:$0xff] %v2305
  %2314 = vst [vmem:[#allocation3 + $0x90] sm:$0xff] %v2306
  %2315 = vst [vmem:[#allocation3 + $0x98] sm:$0xff] %v2307
  %2316 = vst [vmem:[#allocation3 + $0xa0] sm:$0xff] %v2308
  %2317 = vst [vmem:[#allocation3 + $0xa8] sm:$0xff] %v2309
  %2318 = vst [vmem:[#allocation3 + $0xb0] sm:$0xff] %v2310
  %2319 = vst [vmem:[#allocation3 + $0xb8] sm:$0xff] %v2311
  %2320 = vrot.lane.b32.xlu0 %v2124, 1
  %v2321 = vpop.permute.xlu0 %2320
  %2322 = vrot.lane.b32.xlu0 %v2128, 1
  %v2323 = vpop.permute.xlu0 %2322
  %2324 = vrot.lane.b32.xlu0 %v2125, 1
  %v2325 = vpop.permute.xlu0 %2324
  %2326 = vrot.lane.b32.xlu0 %v2129, 1
  %v2327 = vpop.permute.xlu0 %2326
  %2328 = vrot.lane.b32.xlu0 %v2126, 1
  %v2329 = vpop.permute.xlu0 %2328
  %2330 = vrot.lane.b32.xlu0 %v2130, 1
  %v2331 = vpop.permute.xlu0 %2330
  %2332 = vrot.lane.b32.xlu0 %v2127, 1
  %v2333 = vpop.permute.xlu0 %2332
  %2334 = vrot.lane.b32.xlu0 %v2131, 1
  %v2335 = vpop.permute.xlu0 %2334
  %v2336 = vsel %vm1264, %v2329, %v2333
  %v2337 = vsel %vm1264, %v2331, %v2335
  %v2338 = vsel %vm1264, %v2325, %v2329
  %v2339 = vsel %vm1264, %v2327, %v2331
  %v2340 = vsel %vm1264, %v2321, %v2325
  %v2341 = vsel %vm1264, %v2323, %v2327
  %v2342 = vsel %vm1264, %v2333, %v2321
  %v2343 = vsel %vm1264, %v2335, %v2323
  %s2344 = scalar_lea.vmem %s8, 3
  %v2345 = vld [vmem:[%s2344] ss:$8 sm:$0xf]
  %v2347 = vlaneseq
  %v2348 = vshrl.u32 %v2347, 7
  %v2349 = vsub.s32 0, %v2348
  %v2350 = vrot.slane %v2345, %v2349
  %v2351 = vlaneseq
  %v2352 = vshrl.u32 %v2351, 7
  %v2353 = vsub.s32 1, %v2352
  %v2354 = vrot.slane %v2345, %v2353
  %v2355 = vlaneseq
  %v2356 = vshrl.u32 %v2355, 7
  %v2357 = vsub.s32 2, %v2356
  %v2358 = vrot.slane %v2345, %v2357
  %v2359 = vlaneseq
  %v2360 = vshrl.u32 %v2359, 7
  %v2361 = vsub.s32 3, %v2360
  %v2362 = vrot.slane %v2345, %v2361
  %v2367 = vmul.f32 %v2342, %v2350
  %v2368 = vmul.f32 %v2340, %v2354
  %v2369 = vmul.f32 %v2338, %v2358
  %v2370 = vmul.f32 %v2336, %v2362
  %v2371 = vmul.f32 %v2343, %v2350
  %v2372 = vmul.f32 %v2341, %v2354
  %v2373 = vmul.f32 %v2339, %v2358
  %v2374 = vmul.f32 %v2337, %v2362
  %2375 = vst [vmem:[#allocation3 + $0xc0] sm:$0xff] %v2367
  %2376 = vst [vmem:[#allocation3 + $0xc8] sm:$0xff] %v2368
  %2377 = vst [vmem:[#allocation3 + $0xd0] sm:$0xff] %v2369
  %2378 = vst [vmem:[#allocation3 + $0xd8] sm:$0xff] %v2370
  %2379 = vst [vmem:[#allocation3 + $0xe0] sm:$0xff] %v2371
  %2380 = vst [vmem:[#allocation3 + $0xe8] sm:$0xff] %v2372
  %2381 = vst [vmem:[#allocation3 + $0xf0] sm:$0xff] %v2373
  %2382 = vst [vmem:[#allocation3 + $0xf8] sm:$0xff] %v2374
  %s2383 = scalar_lea.vmem %s8, 4
  %v2384 = vld [vmem:[%s2383] ss:$8 sm:$0xf]
  %v2386 = vlaneseq
  %v2387 = vshrl.u32 %v2386, 7
  %v2388 = vsub.s32 0, %v2387
  %v2389 = vrot.slane %v2384, %v2388
  %v2390 = vlaneseq
  %v2391 = vshrl.u32 %v2390, 7
  %v2392 = vsub.s32 1, %v2391
  %v2393 = vrot.slane %v2384, %v2392
  %v2394 = vlaneseq
  %v2395 = vshrl.u32 %v2394, 7
  %v2396 = vsub.s32 2, %v2395
  %v2397 = vrot.slane %v2384, %v2396
  %v2398 = vlaneseq
  %v2399 = vshrl.u32 %v2398, 7
  %v2400 = vsub.s32 3, %v2399
  %v2401 = vrot.slane %v2384, %v2400
  %v2406 = vmul.f32 %v2124, %v2389
  %v2407 = vmul.f32 %v2125, %v2393
  %v2408 = vmul.f32 %v2126, %v2397
  %v2409 = vmul.f32 %v2127, %v2401
  %v2410 = vmul.f32 %v2128, %v2389
  %v2411 = vmul.f32 %v2129, %v2393
  %v2412 = vmul.f32 %v2130, %v2397
  %v2413 = vmul.f32 %v2131, %v2401
  %2414 = vst [vmem:[#allocation3 + $0x100] sm:$0xff] %v2406
  %2415 = vst [vmem:[#allocation3 + $0x108] sm:$0xff] %v2407
  %2416 = vst [vmem:[#allocation3 + $0x110] sm:$0xff] %v2408
  %2417 = vst [vmem:[#allocation3 + $0x118] sm:$0xff] %v2409
  %2418 = vst [vmem:[#allocation3 + $0x120] sm:$0xff] %v2410
  %2419 = vst [vmem:[#allocation3 + $0x128] sm:$0xff] %v2411
  %2420 = vst [vmem:[#allocation3 + $0x130] sm:$0xff] %v2412
  %2421 = vst [vmem:[#allocation3 + $0x138] sm:$0xff] %v2413
  %2422 = vrot.lane.b32.xlu0 %v2124, 127
  %v2423 = vpop.permute.xlu0 %2422
  %2424 = vrot.lane.b32.xlu0 %v2128, 127
  %v2425 = vpop.permute.xlu0 %2424
  %2426 = vrot.lane.b32.xlu0 %v2125, 127
  %v2427 = vpop.permute.xlu0 %2426
  %2428 = vrot.lane.b32.xlu0 %v2129, 127
  %v2429 = vpop.permute.xlu0 %2428
  %2430 = vrot.lane.b32.xlu0 %v2126, 127
  %v2431 = vpop.permute.xlu0 %2430
  %2432 = vrot.lane.b32.xlu0 %v2130, 127
  %v2433 = vpop.permute.xlu0 %2432
  %2434 = vrot.lane.b32.xlu0 %v2127, 127
  %v2435 = vpop.permute.xlu0 %2434
  %2436 = vrot.lane.b32.xlu0 %v2131, 127
  %v2437 = vpop.permute.xlu0 %2436
  %v2438 = vsel %vm1339, %v2431, %v2435
  %v2439 = vsel %vm1339, %v2433, %v2437
  %v2440 = vsel %vm1339, %v2427, %v2431
  %v2441 = vsel %vm1339, %v2429, %v2433
  %v2442 = vsel %vm1339, %v2423, %v2427
  %v2443 = vsel %vm1339, %v2425, %v2429
  %v2444 = vsel %vm1339, %v2435, %v2423
  %v2445 = vsel %vm1339, %v2437, %v2425
  %s2446 = scalar_lea.vmem %s8, 5
  %v2447 = vld [vmem:[%s2446] ss:$8 sm:$0xf]
  %v2449 = vlaneseq
  %v2450 = vshrl.u32 %v2449, 7
  %v2451 = vsub.s32 0, %v2450
  %v2452 = vrot.slane %v2447, %v2451
  %v2453 = vlaneseq
  %v2454 = vshrl.u32 %v2453, 7
  %v2455 = vsub.s32 1, %v2454
  %v2456 = vrot.slane %v2447, %v2455
  %v2457 = vlaneseq
  %v2458 = vshrl.u32 %v2457, 7
  %v2459 = vsub.s32 2, %v2458
  %v2460 = vrot.slane %v2447, %v2459
  %v2461 = vlaneseq
  %v2462 = vshrl.u32 %v2461, 7
  %v2463 = vsub.s32 3, %v2462
  %v2464 = vrot.slane %v2447, %v2463
  %v2469 = vmul.f32 %v2442, %v2452
  %v2470 = vmul.f32 %v2440, %v2456
  %v2471 = vmul.f32 %v2438, %v2460
  %v2472 = vmul.f32 %v2444, %v2464
  %v2473 = vmul.f32 %v2443, %v2452
  %v2474 = vmul.f32 %v2441, %v2456
  %v2475 = vmul.f32 %v2439, %v2460
  %v2476 = vmul.f32 %v2445, %v2464
  %2477 = vst [vmem:[#allocation3 + $0x140] sm:$0xff] %v2469
  %2478 = vst [vmem:[#allocation3 + $0x148] sm:$0xff] %v2470
  %2479 = vst [vmem:[#allocation3 + $0x150] sm:$0xff] %v2471
  %2480 = vst [vmem:[#allocation3 + $0x158] sm:$0xff] %v2472
  %2481 = vst [vmem:[#allocation3 + $0x160] sm:$0xff] %v2473
  %2482 = vst [vmem:[#allocation3 + $0x168] sm:$0xff] %v2474
  %2483 = vst [vmem:[#allocation3 + $0x170] sm:$0xff] %v2475
  %2484 = vst [vmem:[#allocation3 + $0x178] sm:$0xff] %v2476
  %2485 = vrot.lane.b32.xlu0 %v2124, 113
  %v2486 = vpop.permute.xlu0 %2485
  %2487 = vrot.lane.b32.xlu0 %v2128, 113
  %v2488 = vpop.permute.xlu0 %2487
  %2489 = vrot.lane.b32.xlu0 %v2125, 113
  %v2490 = vpop.permute.xlu0 %2489
  %2491 = vrot.lane.b32.xlu0 %v2129, 113
  %v2492 = vpop.permute.xlu0 %2491
  %2493 = vrot.lane.b32.xlu0 %v2126, 113
  %v2494 = vpop.permute.xlu0 %2493
  %2495 = vrot.lane.b32.xlu0 %v2130, 113
  %v2496 = vpop.permute.xlu0 %2495
  %2497 = vrot.lane.b32.xlu0 %v2127, 113
  %v2498 = vpop.permute.xlu0 %2497
  %2499 = vrot.lane.b32.xlu0 %v2131, 113
  %v2500 = vpop.permute.xlu0 %2499
  %v2501 = vsel %vm1471, %v2494, %v2498
  %v2502 = vsel %vm1471, %v2496, %v2500
  %v2503 = vsel %vm1471, %v2490, %v2494
  %v2504 = vsel %vm1471, %v2492, %v2496
  %v2505 = vsel %vm1471, %v2486, %v2490
  %v2506 = vsel %vm1471, %v2488, %v2492
  %v2507 = vsel %vm1471, %v2498, %v2486
  %v2508 = vsel %vm1471, %v2500, %v2488
  %s2509 = scalar_lea.vmem %s8, 6
  %v2510 = vld [vmem:[%s2509] ss:$8 sm:$0xf]
  %v2512 = vlaneseq
  %v2513 = vshrl.u32 %v2512, 7
  %v2514 = vsub.s32 0, %v2513
  %v2515 = vrot.slane %v2510, %v2514
  %v2516 = vlaneseq
  %v2517 = vshrl.u32 %v2516, 7
  %v2518 = vsub.s32 1, %v2517
  %v2519 = vrot.slane %v2510, %v2518
  %v2520 = vlaneseq
  %v2521 = vshrl.u32 %v2520, 7
  %v2522 = vsub.s32 2, %v2521
  %v2523 = vrot.slane %v2510, %v2522
  %v2524 = vlaneseq
  %v2525 = vshrl.u32 %v2524, 7
  %v2526 = vsub.s32 3, %v2525
  %v2527 = vrot.slane %v2510, %v2526
  %v2532 = vmul.f32 %v2505, %v2515
  %v2533 = vmul.f32 %v2503, %v2519
  %v2534 = vmul.f32 %v2501, %v2523
  %v2535 = vmul.f32 %v2507, %v2527
  %v2536 = vmul.f32 %v2506, %v2515
  %v2537 = vmul.f32 %v2504, %v2519
  %v2538 = vmul.f32 %v2502, %v2523
  %v2539 = vmul.f32 %v2508, %v2527
  %2540 = vst [vmem:[#allocation3 + $0x180] sm:$0xff] %v2532
  %2541 = vst [vmem:[#allocation3 + $0x188] sm:$0xff] %v2533
  %2542 = vst [vmem:[#allocation3 + $0x190] sm:$0xff] %v2534
  %2543 = vst [vmem:[#allocation3 + $0x198] sm:$0xff] %v2535
  %2544 = vst [vmem:[#allocation3 + $0x1a0] sm:$0xff] %v2536
  %2545 = vst [vmem:[#allocation3 + $0x1a8] sm:$0xff] %v2537
  %2546 = vst [vmem:[#allocation3 + $0x1b0] sm:$0xff] %v2538
  %2547 = vst [vmem:[#allocation3 + $0x1b8] sm:$0xff] %v2539
  %2548 = vrot.lane.b32.xlu0 %v2124, 112
  %v2549 = vpop.permute.xlu0 %2548
  %2550 = vrot.lane.b32.xlu0 %v2128, 112
  %v2551 = vpop.permute.xlu0 %2550
  %2552 = vrot.lane.b32.xlu0 %v2125, 112
  %v2553 = vpop.permute.xlu0 %2552
  %2554 = vrot.lane.b32.xlu0 %v2129, 112
  %v2555 = vpop.permute.xlu0 %2554
  %2556 = vrot.lane.b32.xlu0 %v2126, 112
  %v2557 = vpop.permute.xlu0 %2556
  %2558 = vrot.lane.b32.xlu0 %v2130, 112
  %v2559 = vpop.permute.xlu0 %2558
  %2560 = vrot.lane.b32.xlu0 %v2127, 112
  %v2561 = vpop.permute.xlu0 %2560
  %2562 = vrot.lane.b32.xlu0 %v2131, 112
  %v2563 = vpop.permute.xlu0 %2562
  %v2564 = vsel %vm1515, %v2557, %v2561
  %v2565 = vsel %vm1515, %v2559, %v2563
  %v2566 = vsel %vm1515, %v2553, %v2557
  %v2567 = vsel %vm1515, %v2555, %v2559
  %v2568 = vsel %vm1515, %v2549, %v2553
  %v2569 = vsel %vm1515, %v2551, %v2555
  %v2570 = vsel %vm1515, %v2561, %v2549
  %v2571 = vsel %vm1515, %v2563, %v2551
  %s2572 = scalar_lea.vmem %s8, 7
  %v2573 = vld [vmem:[%s2572] ss:$8 sm:$0xf]
  %v2575 = vlaneseq
  %v2576 = vshrl.u32 %v2575, 7
  %v2577 = vsub.s32 0, %v2576
  %v2578 = vrot.slane %v2573, %v2577
  %v2579 = vlaneseq
  %v2580 = vshrl.u32 %v2579, 7
  %v2581 = vsub.s32 1, %v2580
  %v2582 = vrot.slane %v2573, %v2581
  %v2583 = vlaneseq
  %v2584 = vshrl.u32 %v2583, 7
  %v2585 = vsub.s32 2, %v2584
  %v2586 = vrot.slane %v2573, %v2585
  %v2587 = vlaneseq
  %v2588 = vshrl.u32 %v2587, 7
  %v2589 = vsub.s32 3, %v2588
  %v2590 = vrot.slane %v2573, %v2589
  %v2595 = vmul.f32 %v2568, %v2578
  %v2596 = vmul.f32 %v2566, %v2582
  %v2597 = vmul.f32 %v2564, %v2586
  %v2598 = vmul.f32 %v2570, %v2590
  %v2599 = vmul.f32 %v2569, %v2578
  %v2600 = vmul.f32 %v2567, %v2582
  %v2601 = vmul.f32 %v2565, %v2586
  %v2602 = vmul.f32 %v2571, %v2590
  %2603 = vst [vmem:[#allocation3 + $0x1c0] sm:$0xff] %v2595
  %2604 = vst [vmem:[#allocation3 + $0x1c8] sm:$0xff] %v2596
  %2605 = vst [vmem:[#allocation3 + $0x1d0] sm:$0xff] %v2597
  %2606 = vst [vmem:[#allocation3 + $0x1d8] sm:$0xff] %v2598
  %2607 = vst [vmem:[#allocation3 + $0x1e0] sm:$0xff] %v2599
  %2608 = vst [vmem:[#allocation3 + $0x1e8] sm:$0xff] %v2600
  %2609 = vst [vmem:[#allocation3 + $0x1f0] sm:$0xff] %v2601
  %2610 = vst [vmem:[#allocation3 + $0x1f8] sm:$0xff] %v2602
  %2611 = vrot.lane.b32.xlu0 %v2124, 111
  %v2612 = vpop.permute.xlu0 %2611
  %2613 = vrot.lane.b32.xlu0 %v2128, 111
  %v2614 = vpop.permute.xlu0 %2613
  %2615 = vrot.lane.b32.xlu0 %v2125, 111
  %v2616 = vpop.permute.xlu0 %2615
  %2617 = vrot.lane.b32.xlu0 %v2129, 111
  %v2618 = vpop.permute.xlu0 %2617
  %2619 = vrot.lane.b32.xlu0 %v2126, 111
  %v2620 = vpop.permute.xlu0 %2619
  %2621 = vrot.lane.b32.xlu0 %v2130, 111
  %v2622 = vpop.permute.xlu0 %2621
  %2623 = vrot.lane.b32.xlu0 %v2127, 111
  %v2624 = vpop.permute.xlu0 %2623
  %2625 = vrot.lane.b32.xlu0 %v2131, 111
  %v2626 = vpop.permute.xlu0 %2625
  %v2627 = vsel %vm1559, %v2620, %v2624
  %v2628 = vsel %vm1559, %v2622, %v2626
  %v2629 = vsel %vm1559, %v2616, %v2620
  %v2630 = vsel %vm1559, %v2618, %v2622
  %v2631 = vsel %vm1559, %v2612, %v2616
  %v2632 = vsel %vm1559, %v2614, %v2618
  %v2633 = vsel %vm1559, %v2624, %v2612
  %v2634 = vsel %vm1559, %v2626, %v2614
  %s2635 = scalar_lea.vmem %s8, 32
  %v2636 = vld [vmem:[%s2635] ss:$8 sm:$0xf]
  %v2638 = vlaneseq
  %v2639 = vshrl.u32 %v2638, 7
  %v2640 = vsub.s32 0, %v2639
  %v2641 = vrot.slane %v2636, %v2640
  %v2642 = vlaneseq
  %v2643 = vshrl.u32 %v2642, 7
  %v2644 = vsub.s32 1, %v2643
  %v2645 = vrot.slane %v2636, %v2644
  %v2646 = vlaneseq
  %v2647 = vshrl.u32 %v2646, 7
  %v2648 = vsub.s32 2, %v2647
  %v2649 = vrot.slane %v2636, %v2648
  %v2650 = vlaneseq
  %v2651 = vshrl.u32 %v2650, 7
  %v2652 = vsub.s32 3, %v2651
  %v2653 = vrot.slane %v2636, %v2652
  %v2658 = vmul.f32 %v2631, %v2641
  %v2659 = vmul.f32 %v2629, %v2645
  %v2660 = vmul.f32 %v2627, %v2649
  %v2661 = vmul.f32 %v2633, %v2653
  %v2662 = vmul.f32 %v2632, %v2641
  %v2663 = vmul.f32 %v2630, %v2645
  %v2664 = vmul.f32 %v2628, %v2649
  %v2665 = vmul.f32 %v2634, %v2653
  %2666 = vst [vmem:[#allocation3 + $0x200] sm:$0xff] %v2658
  %2667 = vst [vmem:[#allocation3 + $0x208] sm:$0xff] %v2659
  %2668 = vst [vmem:[#allocation3 + $0x210] sm:$0xff] %v2660
  %2669 = vst [vmem:[#allocation3 + $0x218] sm:$0xff] %v2661
  %2670 = vst [vmem:[#allocation3 + $0x220] sm:$0xff] %v2662
  %2671 = vst [vmem:[#allocation3 + $0x228] sm:$0xff] %v2663
  %2672 = vst [vmem:[#allocation3 + $0x230] sm:$0xff] %v2664
  %2673 = vst [vmem:[#allocation3 + $0x238] sm:$0xff] %v2665
  %v2674 = vld [vmem:[%s6] sm:$0x3]
  %v2675 = vld [vmem:[#allocation3] sm:$0xff]
  %v2676 = vld [vmem:[#allocation3 + $0x8] sm:$0xff]
  %v2677 = vld [vmem:[#allocation3 + $0x10] sm:$0xff]
  %v2678 = vld [vmem:[#allocation3 + $0x18] sm:$0xff]
  %v2679 = vld [vmem:[#allocation3 + $0x20] sm:$0xff]
  %v2680 = vld [vmem:[#allocation3 + $0x28] sm:$0xff]
  %v2681 = vld [vmem:[#allocation3 + $0x30] sm:$0xff]
  %v2682 = vld [vmem:[#allocation3 + $0x38] sm:$0xff]
  %v2683 = vld [vmem:[#allocation3 + $0x40] sm:$0xff]
  %v2684 = vld [vmem:[#allocation3 + $0x48] sm:$0xff]
  %v2685 = vld [vmem:[#allocation3 + $0x50] sm:$0xff]
  %v2686 = vld [vmem:[#allocation3 + $0x58] sm:$0xff]
  %v2687 = vld [vmem:[#allocation3 + $0x60] sm:$0xff]
  %v2688 = vld [vmem:[#allocation3 + $0x68] sm:$0xff]
  %v2689 = vld [vmem:[#allocation3 + $0x70] sm:$0xff]
  %v2690 = vld [vmem:[#allocation3 + $0x78] sm:$0xff]
  %v2691 = vld [vmem:[#allocation3 + $0x80] sm:$0xff]
  %v2692 = vld [vmem:[#allocation3 + $0x88] sm:$0xff]
  %v2693 = vld [vmem:[#allocation3 + $0x90] sm:$0xff]
  %v2694 = vld [vmem:[#allocation3 + $0x98] sm:$0xff]
  %v2695 = vld [vmem:[#allocation3 + $0xa0] sm:$0xff]
  %v2696 = vld [vmem:[#allocation3 + $0xa8] sm:$0xff]
  %v2697 = vld [vmem:[#allocation3 + $0xb0] sm:$0xff]
  %v2698 = vld [vmem:[#allocation3 + $0xb8] sm:$0xff]
  %v2699 = vld [vmem:[#allocation3 + $0xc0] sm:$0xff]
  %v2700 = vld [vmem:[#allocation3 + $0xc8] sm:$0xff]
  %v2701 = vld [vmem:[#allocation3 + $0xd0] sm:$0xff]
  %v2702 = vld [vmem:[#allocation3 + $0xd8] sm:$0xff]
  %v2703 = vld [vmem:[#allocation3 + $0xe0] sm:$0xff]
  %v2704 = vld [vmem:[#allocation3 + $0xe8] sm:$0xff]
  %v2705 = vld [vmem:[#allocation3 + $0xf0] sm:$0xff]
  %v2706 = vld [vmem:[#allocation3 + $0xf8] sm:$0xff]
  %v2707 = vld [vmem:[#allocation3 + $0x100] sm:$0xff]
  %v2708 = vld [vmem:[#allocation3 + $0x108] sm:$0xff]
  %v2709 = vld [vmem:[#allocation3 + $0x110] sm:$0xff]
  %v2710 = vld [vmem:[#allocation3 + $0x118] sm:$0xff]
  %v2711 = vld [vmem:[#allocation3 + $0x120] sm:$0xff]
  %v2712 = vld [vmem:[#allocation3 + $0x128] sm:$0xff]
  %v2713 = vld [vmem:[#allocation3 + $0x130] sm:$0xff]
  %v2714 = vld [vmem:[#allocation3 + $0x138] sm:$0xff]
  %v2715 = vld [vmem:[#allocation3 + $0x140] sm:$0xff]
  %v2716 = vld [vmem:[#allocation3 + $0x148] sm:$0xff]
  %v2717 = vld [vmem:[#allocation3 + $0x150] sm:$0xff]
  %v2718 = vld [vmem:[#allocation3 + $0x158] sm:$0xff]
  %v2719 = vld [vmem:[#allocation3 + $0x160] sm:$0xff]
  %v2720 = vld [vmem:[#allocation3 + $0x168] sm:$0xff]
  %v2721 = vld [vmem:[#allocation3 + $0x170] sm:$0xff]
  %v2722 = vld [vmem:[#allocation3 + $0x178] sm:$0xff]
  %v2723 = vld [vmem:[#allocation3 + $0x180] sm:$0xff]
  %v2724 = vld [vmem:[#allocation3 + $0x188] sm:$0xff]
  %v2725 = vld [vmem:[#allocation3 + $0x190] sm:$0xff]
  %v2726 = vld [vmem:[#allocation3 + $0x198] sm:$0xff]
  %v2727 = vld [vmem:[#allocation3 + $0x1a0] sm:$0xff]
  %v2728 = vld [vmem:[#allocation3 + $0x1a8] sm:$0xff]
  %v2729 = vld [vmem:[#allocation3 + $0x1b0] sm:$0xff]
  %v2730 = vld [vmem:[#allocation3 + $0x1b8] sm:$0xff]
  %v2731 = vld [vmem:[#allocation3 + $0x1c0] sm:$0xff]
  %v2732 = vld [vmem:[#allocation3 + $0x1c8] sm:$0xff]
  %v2733 = vld [vmem:[#allocation3 + $0x1d0] sm:$0xff]
  %v2734 = vld [vmem:[#allocation3 + $0x1d8] sm:$0xff]
  %v2735 = vld [vmem:[#allocation3 + $0x1e0] sm:$0xff]
  %v2736 = vld [vmem:[#allocation3 + $0x1e8] sm:$0xff]
  %v2737 = vld [vmem:[#allocation3 + $0x1f0] sm:$0xff]
  %v2738 = vld [vmem:[#allocation3 + $0x1f8] sm:$0xff]
  %v2739 = vld [vmem:[#allocation3 + $0x200] sm:$0xff]
  %v2740 = vld [vmem:[#allocation3 + $0x208] sm:$0xff]
  %v2741 = vld [vmem:[#allocation3 + $0x210] sm:$0xff]
  %v2742 = vld [vmem:[#allocation3 + $0x218] sm:$0xff]
  %v2743 = vld [vmem:[#allocation3 + $0x220] sm:$0xff]
  %v2744 = vld [vmem:[#allocation3 + $0x228] sm:$0xff]
  %v2745 = vld [vmem:[#allocation3 + $0x230] sm:$0xff]
  %v2746 = vld [vmem:[#allocation3 + $0x238] sm:$0xff]
  %v2748 = vlaneseq
  %v2749 = vshrl.u32 %v2748, 7
  %v2750 = vsub.s32 0, %v2749
  %v2751 = vrot.slane %v2674, %v2750
  %v2752 = vlaneseq
  %v2753 = vshrl.u32 %v2752, 7
  %v2754 = vsub.s32 1, %v2753
  %v2755 = vrot.slane %v2674, %v2754
  %vm2757 = vcmask 130048
  %v2758 = vsel %vm2757, %v2755, 0
  %2760 = vmatprep.subr.mxu0 %v2736
  %2761 = vmatpush1.msra.mxu0 %v2735
  %2762 = vmatprep.subr.mxu0 %v2732
  %2763 = vmatpush1.msra.mxu0 %v2731
  %2764 = vmatprep.subr.mxu0 %v2728
  %2765 = vmatpush1.msra.mxu0 %v2727
  %2766 = vmatprep.subr.mxu0 %v2724
  %2767 = vmatpush1.msra.mxu0 %v2723
  %2768 = vmatprep.subr.mxu0 %v2720
  %2769 = vmatpush1.msra.mxu0 %v2719
  %2770 = vmatprep.subr.mxu0 %v2716
  %2771 = vmatpush1.msra.mxu0 %v2715
  %2772 = vmatprep.subr.mxu0 %v2712
  %2773 = vmatpush1.msra.mxu0 %v2711
  %2774 = vmatprep.subr.mxu0 %v2708
  %2775 = vmatpush1.msra.mxu0 %v2707
  %2776 = vmatprep.subr.mxu0 %v2704
  %2777 = vmatpush1.msra.mxu0 %v2703
  %2778 = vmatprep.subr.mxu0 %v2700
  %2779 = vmatpush1.msra.mxu0 %v2699
  %2780 = vmatprep.subr.mxu0 %v2696
  %2781 = vmatpush1.msra.mxu0 %v2695
  %2782 = vmatprep.subr.mxu0 %v2692
  %2783 = vmatpush1.msra.mxu0 %v2691
  %2784 = vmatprep.subr.mxu0 %v2688
  %2785 = vmatpush1.msra.mxu0 %v2687
  %2786 = vmatprep.subr.mxu0 %v2684
  %2787 = vmatpush1.msra.mxu0 %v2683
  %2788 = vmatprep.subr.mxu0 %v2680
  %2789 = vmatpush1.msra.mxu0 %v2679
  %2790 = vmatprep.subr.mxu0 %v2676
  %2791 = vmatpush1.msra.mxu0 %v2675
  %2792 = vmatprep.subr.mxu0 0.0
  %2793 = vmatpush2.msra.mxu0 0.0
  %2794 = vmatprep.subr.mxu0 0.0
  %2795 = vmatpush2.msra.mxu0 0.0
  %2796 = vmatprep.subr.mxu0 0.0
  %2797 = vmatpush2.msra.mxu0 0.0
  %2798 = vmatprep.subr.mxu0 0.0
  %2799 = vmatpush2.msra.mxu0 0.0
  %2800 = vmatprep.subr.mxu0 0.0
  %2801 = vmatpush2.msra.mxu0 0.0
  %2802 = vmatprep.subr.mxu0 0.0
  %2803 = vmatpush2.msra.mxu0 0.0
  %2804 = vmatprep.subr.mxu0 0.0
  %2805 = vmatpush2.msra.mxu0 0.0
  %2806 = vmatprep.subr.mxu0 0.0
  %2807 = vmatpush2.msra.mxu0 0.0
  %2808 = vmatprep.subr.mxu0 0.0
  %2809 = vmatpush2.msra.mxu0 0.0
  %2810 = vmatprep.subr.mxu0 0.0
  %2811 = vmatpush2.msra.mxu0 0.0
  %2812 = vmatprep.subr.mxu0 0.0
  %2813 = vmatpush2.msra.mxu0 0.0
  %2814 = vmatprep.subr.mxu0 0.0
  %2815 = vmatpush2.msra.mxu0 0.0
  %2816 = vmatprep.subr.mxu0 0.0
  %2817 = vmatpush2.msra.mxu0 0.0
  %2818 = vmatprep.subr.mxu0 0.0
  %2819 = vmatpush2.msra.mxu0 0.0
  %2820 = vmatprep.subr.mxu0 %v2744
  %2821 = vmatpush2.msra.mxu0 %v2743
  %2822 = vmatprep.subr.mxu0 %v2740
  %2823 = vmatpush2.msra.mxu0 %v2739
  %2824 = vmatprep.mubr.f32.mxu0 %v2758
  %2825 = vmatmul.mubr.f32.gmra.mxu0 %v2751
  %v2826 = vpop.f32.mrf.mxu0
  %v2827 = vadd.f32 0.0, %v2826
  %v2828 = vpop.f32.mrf.mxu0
  %v2829 = vadd.f32 0.0, %v2828
  %2830 = vdwg.mxu0
  %2831 = vmatprep.subr.mxu0 %v2738
  %2832 = vmatpush1.msra.mxu0 %v2737
  %2833 = vmatprep.subr.mxu0 %v2734
  %2834 = vmatpush1.msra.mxu0 %v2733
  %2835 = vmatprep.subr.mxu0 %v2730
  %2836 = vmatpush1.msra.mxu0 %v2729
  %2837 = vmatprep.subr.mxu0 %v2726
  %2838 = vmatpush1.msra.mxu0 %v2725
  %2839 = vmatprep.subr.mxu0 %v2722
  %2840 = vmatpush1.msra.mxu0 %v2721
  %2841 = vmatprep.subr.mxu0 %v2718
  %2842 = vmatpush1.msra.mxu0 %v2717
  %2843 = vmatprep.subr.mxu0 %v2714
  %2844 = vmatpush1.msra.mxu0 %v2713
  %2845 = vmatprep.subr.mxu0 %v2710
  %2846 = vmatpush1.msra.mxu0 %v2709
  %2847 = vmatprep.subr.mxu0 %v2706
  %2848 = vmatpush1.msra.mxu0 %v2705
  %2849 = vmatprep.subr.mxu0 %v2702
  %2850 = vmatpush1.msra.mxu0 %v2701
  %2851 = vmatprep.subr.mxu0 %v2698
  %2852 = vmatpush1.msra.mxu0 %v2697
  %2853 = vmatprep.subr.mxu0 %v2694
  %2854 = vmatpush1.msra.mxu0 %v2693
  %2855 = vmatprep.subr.mxu0 %v2690
  %2856 = vmatpush1.msra.mxu0 %v2689
  %2857 = vmatprep.subr.mxu0 %v2686
  %2858 = vmatpush1.msra.mxu0 %v2685
  %2859 = vmatprep.subr.mxu0 %v2682
  %2860 = vmatpush1.msra.mxu0 %v2681
  %2861 = vmatprep.subr.mxu0 %v2678
  %2862 = vmatpush1.msra.mxu0 %v2677
  %2863 = vmatprep.subr.mxu0 0.0
  %2864 = vmatpush2.msra.mxu0 0.0
  %2865 = vmatprep.subr.mxu0 0.0
  %2866 = vmatpush2.msra.mxu0 0.0
  %2867 = vmatprep.subr.mxu0 0.0
  %2868 = vmatpush2.msra.mxu0 0.0
  %2869 = vmatprep.subr.mxu0 0.0
  %2870 = vmatpush2.msra.mxu0 0.0
  %2871 = vmatprep.subr.mxu0 0.0
  %2872 = vmatpush2.msra.mxu0 0.0
  %2873 = vmatprep.subr.mxu0 0.0
  %2874 = vmatpush2.msra.mxu0 0.0
  %2875 = vmatprep.subr.mxu0 0.0
  %2876 = vmatpush2.msra.mxu0 0.0
  %2877 = vmatprep.subr.mxu0 0.0
  %2878 = vmatpush2.msra.mxu0 0.0
  %2879 = vmatprep.subr.mxu0 0.0
  %2880 = vmatpush2.msra.mxu0 0.0
  %2881 = vmatprep.subr.mxu0 0.0
  %2882 = vmatpush2.msra.mxu0 0.0
  %2883 = vmatprep.subr.mxu0 0.0
  %2884 = vmatpush2.msra.mxu0 0.0
  %2885 = vmatprep.subr.mxu0 0.0
  %2886 = vmatpush2.msra.mxu0 0.0
  %2887 = vmatprep.subr.mxu0 0.0
  %2888 = vmatpush2.msra.mxu0 0.0
  %2889 = vmatprep.subr.mxu0 0.0
  %2890 = vmatpush2.msra.mxu0 0.0
  %2891 = vmatprep.subr.mxu0 %v2746
  %2892 = vmatpush2.msra.mxu0 %v2745
  %2893 = vmatprep.subr.mxu0 %v2742
  %2894 = vmatpush2.msra.mxu0 %v2741
  %2895 = vmatprep.mubr.f32.mxu0 %v2758
  %2896 = vmatmul.mubr.f32.gmra.mxu0 %v2751
  %v2897 = vpop.f32.mrf.mxu0
  %v2898 = vadd.f32 0.0, %v2897
  %v2899 = vpop.f32.mrf.mxu0
  %v2900 = vadd.f32 0.0, %v2899
  %2901 = vdwg.mxu0
  %v2904 = vrot.slane %v2898, 7
  %v2905 = vrot.slane %v2900, 7
  %v2908 = vsel %vm724, %v2827, %v2904
  %v2909 = vsel %vm724, %v2829, %v2905
  %v2910 = vsel %vm46, %v2908, -inf
  %v2911 = vsel %vm46, %v2909, -inf
  %v2912 = vmax.f32 %v2910, %v2911
  %2913 = vmax.xlane.f32.xlu0 %v2912
  %v2914 = vpop.xlane.xlu0 %2913
  %v2915 = vsub.f32 %v2908, %v2914
  %v2916 = vsub.f32 %v2909, %v2914
  %v2917 = vmul.f32 %v2915, 1.442695
  %v2918 = vpow.pop %v2917
  %v2919 = vmul.f32 %v2916, 1.442695
  %v2920 = vpow.pop %v2919
  %v2921 = vsel %vm46, %v2918, 0.0
  %v2922 = vsel %vm46, %v2920, 0.0
  %v2923 = vadd.f32 %v2921, %v2922
  %2924 = vadd.xlane.f32.xlu0 %v2923
  %v2925 = vpop.xlane.xlu0 %2924
  %v2926 = vlog2.pop %v2925
  %v2927 = vmul.f32 %v2926, 0.6931472
  %v2928 = vsub.f32 %v2915, %v2927
  %v2929 = vsub.f32 %v2916, %v2927
  %v2932 = vcombine.low %v2928, %v2929
  %v2934 = vunpack.c.l.s4 1983009808
  %v2935 = vunpack.c.0.s8 %v2934
  %v2936 = vlaneseq
  %v2937 = vshrl.u32 %v2936, 7
  %v2938 = vsub.s32 %v2935, %v2937
  %v2939 = vrot.slane %v2932, %v2938
  %2941 = vst [vmem:[%s9] sm:$0xf] %v2939
  // Predicated region
  $region38: #{image_decoder_forward.1} parent=0 // pred_check
    _
  $region39: #{image_decoder_forward.1} parent=0 // pred_check_branch
    %2943 = sbr.rel (0) target = $region41
  $region40: #{image_decoder_forward.1} parent=0 // pred_region
    _
  $region41: #{image_decoder_forward.1} parent=0 // pred_fallthru
    _
  // Predicated region
  $region42: #{image_decoder_forward.1} parent=0 // pred_check
    _
  $region43: #{image_decoder_forward.1} parent=0 // pred_check_branch
    %2945 = sbr.rel (0) target = $region45
  $region44: #{image_decoder_forward.1} parent=0 // pred_region
    _
  $region45: #{image_decoder_forward.1} parent=0 // pred_fallthru
    _

</llo_original>
